<compile_context>
chip_gen: v7x
topology: tpu7x:2x2x1
jax: 0.10.0
libtpu: 0.0.40
codegen_flags: <defaults>
</compile_context>

<pallas_src>
import jax
import jax.numpy as jnp
from jax.experimental import pallas as pl
from jax.experimental.pallas import tpu as pltpu

CHANNELS = 1
IMG_SIZE = 28
IMG_AREA = CHANNELS * IMG_SIZE * IMG_SIZE  # 784
K_PAD = 896                                # 784 rounded up to a multiple of 128
H1 = 512
H2 = 256
OUT = 1


def _leaky_relu(x, slope=0.2):
    return jnp.where(x > 0, x, slope * x)


def discriminator_kernel(x_ref, w1_ref, b1_ref, w2_ref, b2_ref, w3_ref, b3_ref,
                         o_ref):
    # x_ref: (TB, 896) bf16 block of flattened (zero-padded) images.
    x = x_ref[...]

    # Layer 1: (TB,896) @ (896,512) on the MXU, f32 accumulation.
    h1 = jnp.dot(x, w1_ref[...], preferred_element_type=jnp.float32)
    h1 = _leaky_relu(h1 + b1_ref[...])

    # Layer 2: (TB,512) @ (512,256) on the MXU.
    h2 = jnp.dot(h1.astype(jnp.bfloat16), w2_ref[...],
                 preferred_element_type=jnp.float32)
    h2 = _leaky_relu(h2 + b2_ref[...])

    # Layer 3 (256 -> 1): N=1 would waste 255/256 MXU columns, so do a
    # broadcast-multiply + lane reduction on the VPU/XLU instead.
    h3 = jnp.sum(h2 * w3_ref[...], axis=-1, keepdims=True) + b3_ref[...]
    o_ref[...] = jax.nn.sigmoid(h3)
    # TODO(synk): a lane-dense (1, TB) output layout would remove the masked
    # vst.msk stores on this (TB, 1) column, but requires an in-kernel
    # (TB,1)->(1,TB) relayout; skipped as a secondary win (output is ~2 KB per
    # step) to keep lowering robust across chip generations.


def _choose_batch_tile(batch, requested):
    """Pick a batch tile: multiple of 128, <= batch rounded to 128, and — when
    the batch allows — small enough that the grid has >= 2 steps so the
    "parallel" axis can shard across v7x's two TensorCores."""
    requested = max(128, (requested // 128) * 128)
    b128 = pl.cdiv(batch, 128) * 128
    tile = min(requested, b128)
    if b128 >= 2 * 128 and pl.cdiv(b128, tile) < 2:
        tile = max(128, ((b128 // 2) // 128) * 128)
    return tile


def discriminator_forward(img, params, *, batch_tile=512):
    """img: (B, C, H, W) float32 -> validity: (B, 1) float32.

    batch_tile defaults to 512 (sweep 512-1024 for large batches); it is
    clamped down for small batches and split so v7x sees >= 2 grid steps.
    """
    w1, b1, w2, b2, w3, b3 = params
    assert w1.shape == (IMG_AREA, H1)
    assert w2.shape == (H1, H2)
    assert w3.shape == (H2, OUT), "w3 must be stored (in_features, out_features)"

    B = img.shape[0]
    # Flatten NCHW -> (B, 784) (matches torch .view(B, -1)); cast to bf16 in
    # the same pass so the kernel's dominant HBM stream is half-width.
    x = img.reshape(B, -1).astype(jnp.bfloat16)

    tile = _choose_batch_tile(B, batch_tile)
    num_tiles = pl.cdiv(B, tile)
    b_padded = num_tiles * tile

    # Zero-pad batch to a tile multiple (padded rows discarded below) and the
    # feature dim 784 -> 896 for clean 128-lane K-tiles.
    x = jnp.pad(x, ((0, b_padded - B), (0, K_PAD - IMG_AREA)))

    # bf16 for the large matmul weights; everything elementwise stays f32.
    w1p = jnp.pad(w1.astype(jnp.bfloat16), ((0, K_PAD - IMG_AREA), (0, 0)))
    w2c = w2.astype(jnp.bfloat16)
    b1c = b1.reshape(1, H1).astype(jnp.float32)
    b2c = b2.reshape(1, H2).astype(jnp.float32)
    w3_row = w3.astype(jnp.float32).T            # (256,1) -> (1,256), explicit
    b3c = b3.reshape(1, OUT).astype(jnp.float32)

    cost = pl.CostEstimate(
        flops=2 * b_padded * (K_PAD * H1 + H1 * H2 + H2 * OUT),
        transcendentals=b_padded * OUT,          # sigmoid
        bytes_accessed=(x.size * 2                         # bf16 input
                        + w1p.size * 2 + w2c.size * 2      # bf16 weights
                        + (b1c.size + b2c.size + w3_row.size + b3c.size) * 4
                        + b_padded * OUT * 4),             # f32 output
    )

    out = pl.pallas_call(
        discriminator_kernel,
        out_shape=jax.ShapeDtypeStruct((b_padded, OUT), jnp.float32),
        grid_spec=pltpu.PrefetchScalarGridSpec(
            num_scalar_prefetch=0,
            grid=(num_tiles,),
            in_specs=[
                # batch-tiled flattened input (bf16, K padded to 896)
                pl.BlockSpec((tile, K_PAD), lambda i: (i, 0)),
                # weights / biases: full arrays, constant index_map -> fetched
                # once by the pipeline and kept VMEM-resident.
                pl.BlockSpec((K_PAD, H1), lambda i: (0, 0)),
                pl.BlockSpec((1, H1), lambda i: (0, 0)),
                pl.BlockSpec((H1, H2), lambda i: (0, 0)),
                pl.BlockSpec((1, H2), lambda i: (0, 0)),
                pl.BlockSpec((1, H2), lambda i: (0, 0)),   # w3 as (1,256) row
                pl.BlockSpec((1, OUT), lambda i: (0, 0)),
            ],
            out_specs=pl.BlockSpec((tile, OUT), lambda i: (i, 0)),
        ),
        compiler_params=pltpu.CompilerParams(
            dimension_semantics=("parallel",)),
        cost_estimate=cost,
    )(x, w1p, b1c, w2c, b2c, w3_row, b3c)

    return out[:B]


def init_params(key):
    """Deterministic PyTorch-style init: U(-1/sqrt(fan_in), +1/sqrt(fan_in)).

    Weights are stored transposed, i.e. (in_features, out_features); biases
    are 1-D (out_features,) like torch.
    """
    ks = jax.random.split(key, 6)

    def linear(kw, kb, fan_in, fan_out):
        bound = fan_in ** -0.5
        w = jax.random.uniform(kw, (fan_in, fan_out), jnp.float32, -bound, bound)
        b = jax.random.uniform(kb, (fan_out,), jnp.float32, -bound, bound)
        return w, b

    w1, b1 = linear(ks[0], ks[1], IMG_AREA, H1)
    w2, b2 = linear(ks[2], ks[3], H1, H2)
    w3, b3 = linear(ks[4], ks[5], H2, OUT)
    return (w1, b1, w2, b2, w3, b3)


def _reference_forward(img, params):
    """Pure-JAX reference mirroring the kernel's mixed precision."""
    w1, b1, w2, b2, w3, b3 = params
    x = img.reshape(img.shape[0], -1)
    h = jnp.dot(x.astype(jnp.bfloat16), w1.astype(jnp.bfloat16),
                preferred_element_type=jnp.float32) + b1.reshape(1, -1)
    h = _leaky_relu(h)
    h = jnp.dot(h.astype(jnp.bfloat16), w2.astype(jnp.bfloat16),
                preferred_element_type=jnp.float32) + b2.reshape(1, -1)
    h = _leaky_relu(h)
    h = h @ w3 + b3.reshape(1, -1)   # tiny final layer in f32
    return jax.nn.sigmoid(h)


if __name__ == "__main__":
    key = jax.random.PRNGKey(0)
    k_params, k_img = jax.random.split(key)

    params = init_params(k_params)
    # Small batch consistent with the module: B=8, NCHW 1x28x28 images.
    img = jax.random.normal(k_img, (8, CHANNELS, IMG_SIZE, IMG_SIZE), jnp.float32)

    validity = discriminator_forward(img, params)
    validity = jax.block_until_ready(validity)

    ref = _reference_forward(img, params)
    assert validity.shape == (8, 1)
    assert jnp.allclose(validity, ref, atol=2e-3, rtol=2e-3)

    print("KERNEL_OK")
</pallas_src>

<mosaic_0001>
module attributes {stable_mosaic.version = 11 : i64} {
  func.func @discriminator_kernel(%arg0: i32, %arg1: memref<128x896xbf16, #tpu.memory_space<vmem>>, %arg2: memref<896x512xbf16, #tpu.memory_space<vmem>>, %arg3: memref<1x512xf32, #tpu.memory_space<vmem>>, %arg4: memref<512x256xbf16, #tpu.memory_space<vmem>>, %arg5: memref<1x256xf32, #tpu.memory_space<vmem>>, %arg6: memref<1x256xf32, #tpu.memory_space<vmem>>, %arg7: memref<1x1xf32, #tpu.memory_space<vmem>>, %arg8: memref<128x1xf32, #tpu.memory_space<vmem>>) attributes {dimension_semantics = [#tpu.dimension_semantics<parallel>], iteration_bounds = array<i64: 1>, scalar_prefetch = 0 : i64, scratch_operands = 0 : i64, tpu.core_type = #tpu.core_type<tc>, window_params = [{transform_indices = @transform_0, window_bounds = array<i64: 128, 896>}, {pipeline_mode = #tpu.pipeline_mode<synchronous>, transform_indices = @transform_1, window_bounds = array<i64: 896, 512>}, {pipeline_mode = #tpu.pipeline_mode<synchronous>, transform_indices = @transform_2, window_bounds = array<i64: 1, 512>}, {pipeline_mode = #tpu.pipeline_mode<synchronous>, transform_indices = @transform_3, window_bounds = array<i64: 512, 256>}, {pipeline_mode = #tpu.pipeline_mode<synchronous>, transform_indices = @transform_4, window_bounds = array<i64: 1, 256>}, {pipeline_mode = #tpu.pipeline_mode<synchronous>, transform_indices = @transform_5, window_bounds = array<i64: 1, 256>}, {pipeline_mode = #tpu.pipeline_mode<synchronous>, transform_indices = @transform_6, window_bounds = array<i64: 1, 1>}, {transform_indices = @transform_7, window_bounds = array<i64: 128, 1>}]} {
    %c0 = arith.constant 0 : index
    %c0_0 = arith.constant 0 : index
    %0 = vector.load %arg1[%c0, %c0_0] : memref<128x896xbf16, #tpu.memory_space<vmem>>, vector<128x896xbf16>
    %c0_1 = arith.constant 0 : index
    %c0_2 = arith.constant 0 : index
    %1 = vector.load %arg2[%c0_1, %c0_2] : memref<896x512xbf16, #tpu.memory_space<vmem>>, vector<896x512xbf16>
    %cst = arith.constant dense<0.000000e+00> : vector<128x512xf32>
    %2 = tpu.matmul %0, %1, %cst {dimension_numbers = #tpu.dot_dimension_numbers<[1], [0], [0], [1], [0, 0, 1, 1], [], []>} : vector<128x896xbf16>, vector<896x512xbf16>, vector<128x512xf32> -> vector<128x512xf32>
    %c0_3 = arith.constant 0 : index
    %c0_4 = arith.constant 0 : index
    %3 = vector.load %arg3[%c0_3, %c0_4] : memref<1x512xf32, #tpu.memory_space<vmem>>, vector<1x512xf32>
    %4 = vector.broadcast %3 : vector<1x512xf32> to vector<128x512xf32>
    %5 = arith.addf %2, %4 : vector<128x512xf32>
    %cst_5 = arith.constant 0.000000e+00 : f32
    %6 = vector.broadcast %cst_5 : f32 to vector<128x512xf32>
    %7 = arith.cmpf ogt, %5, %6 : vector<128x512xf32>
    %cst_6 = arith.constant 2.000000e-01 : f32
    %8 = vector.broadcast %cst_6 : f32 to vector<128x512xf32>
    %9 = arith.mulf %8, %5 : vector<128x512xf32>
    %10 = arith.select %7, %5, %9 : vector<128x512xi1>, vector<128x512xf32>
    %11 = arith.truncf %10 : vector<128x512xf32> to vector<128x512xbf16>
    %c0_7 = arith.constant 0 : index
    %c0_8 = arith.constant 0 : index
    %12 = vector.load %arg4[%c0_7, %c0_8] : memref<512x256xbf16, #tpu.memory_space<vmem>>, vector<512x256xbf16>
    %cst_9 = arith.constant dense<0.000000e+00> : vector<128x256xf32>
    %13 = tpu.matmul %11, %12, %cst_9 {dimension_numbers = #tpu.dot_dimension_numbers<[1], [0], [0], [1], [0, 0, 1, 1], [], []>} : vector<128x512xbf16>, vector<512x256xbf16>, vector<128x256xf32> -> vector<128x256xf32>
    %c0_10 = arith.constant 0 : index
    %c0_11 = arith.constant 0 : index
    %14 = vector.load %arg5[%c0_10, %c0_11] : memref<1x256xf32, #tpu.memory_space<vmem>>, vector<1x256xf32>
    %15 = vector.broadcast %14 : vector<1x256xf32> to vector<128x256xf32>
    %16 = arith.addf %13, %15 : vector<128x256xf32>
    %cst_12 = arith.constant 0.000000e+00 : f32
    %17 = vector.broadcast %cst_12 : f32 to vector<128x256xf32>
    %18 = arith.cmpf ogt, %16, %17 : vector<128x256xf32>
    %cst_13 = arith.constant 2.000000e-01 : f32
    %19 = vector.broadcast %cst_13 : f32 to vector<128x256xf32>
    %20 = arith.mulf %19, %16 : vector<128x256xf32>
    %21 = arith.select %18, %16, %20 : vector<128x256xi1>, vector<128x256xf32>
    %c0_14 = arith.constant 0 : index
    %c0_15 = arith.constant 0 : index
    %22 = vector.load %arg6[%c0_14, %c0_15] : memref<1x256xf32, #tpu.memory_space<vmem>>, vector<1x256xf32>
    %23 = vector.broadcast %22 : vector<1x256xf32> to vector<128x256xf32>
    %24 = arith.mulf %21, %23 : vector<128x256xf32>
    %cst_16 = arith.constant dense<0.000000e+00> : vector<128xf32>
    %25 = vector.multi_reduction <add>, %24, %cst_16 [1] : vector<128x256xf32> to vector<128xf32>
    %26 = vector.shape_cast %25 : vector<128xf32> to vector<128x1xf32>
    %c0_17 = arith.constant 0 : index
    %c0_18 = arith.constant 0 : index
    %27 = vector.load %arg7[%c0_17, %c0_18] : memref<1x1xf32, #tpu.memory_space<vmem>>, vector<1x1xf32>
    %28 = vector.broadcast %27 : vector<1x1xf32> to vector<128x1xf32>
    %29 = arith.addf %26, %28 : vector<128x1xf32>
    %30 = arith.negf %29 : vector<128x1xf32>
    %31 = math.exp %30 : vector<128x1xf32>
    %cst_19 = arith.constant 1.000000e+00 : f32
    %32 = vector.broadcast %cst_19 : f32 to vector<128x1xf32>
    %33 = arith.addf %32, %31 : vector<128x1xf32>
    %34 = arith.divf %32, %33 : vector<128x1xf32>
    %c0_20 = arith.constant 0 : index
    %c0_21 = arith.constant 0 : index
    %35 = vector.load %arg8[%c0_20, %c0_21] : memref<128x1xf32, #tpu.memory_space<vmem>>, vector<128x1xf32>
    tpu.vector_store %arg8[%c0_20, %c0_21], %34 {strides = array<i32>} : memref<128x1xf32, #tpu.memory_space<vmem>>, vector<128x1xf32>,
    return
  }
  func.func @transform_0(%arg0: i32) -> (i32, i32) {
    %c0_i32 = arith.constant 0 : i32
    %c0_i32_0 = arith.constant 0 : i32
    return %arg0, %c0_i32 : i32, i32
  }
  func.func @transform_1(%arg0: i32) -> (i32, i32) {
    %c0_i32 = arith.constant 0 : i32
    %c0_i32_0 = arith.constant 0 : i32
    %c0_i32_1 = arith.constant 0 : i32
    return %c0_i32, %c0_i32_0 : i32, i32
  }
  func.func @transform_2(%arg0: i32) -> (i32, i32) {
    %c0_i32 = arith.constant 0 : i32
    %c0_i32_0 = arith.constant 0 : i32
    %c0_i32_1 = arith.constant 0 : i32
    return %c0_i32, %c0_i32_0 : i32, i32
  }
  func.func @transform_3(%arg0: i32) -> (i32, i32) {
    %c0_i32 = arith.constant 0 : i32
    %c0_i32_0 = arith.constant 0 : i32
    %c0_i32_1 = arith.constant 0 : i32
    return %c0_i32, %c0_i32_0 : i32, i32
  }
  func.func @transform_4(%arg0: i32) -> (i32, i32) {
    %c0_i32 = arith.constant 0 : i32
    %c0_i32_0 = arith.constant 0 : i32
    %c0_i32_1 = arith.constant 0 : i32
    return %c0_i32, %c0_i32_0 : i32, i32
  }
  func.func @transform_5(%arg0: i32) -> (i32, i32) {
    %c0_i32 = arith.constant 0 : i32
    %c0_i32_0 = arith.constant 0 : i32
    %c0_i32_1 = arith.constant 0 : i32
    return %c0_i32, %c0_i32_0 : i32, i32
  }
  func.func @transform_6(%arg0: i32) -> (i32, i32) {
    %c0_i32 = arith.constant 0 : i32
    %c0_i32_0 = arith.constant 0 : i32
    %c0_i32_1 = arith.constant 0 : i32
    return %c0_i32, %c0_i32_0 : i32, i32
  }
  func.func @transform_7(%arg0: i32) -> (i32, i32) {
    %c0_i32 = arith.constant 0 : i32
    %c0_i32_0 = arith.constant 0 : i32
    return %arg0, %c0_i32 : i32, i32
  }
}

</mosaic_0001>

<llo_original>
// kernel: tpu_custom_call.1
$region0: #{tpu_custom_call.1}
  #allocation0 [shape = 'u32[]', space=smem, size = 0x4, offset = 0x4, fixed_abs, tag = 'smem constant byte address 0x4 - core index']
  #allocation1 [shape = 'u32[144,128]{1,0:T(1,128)}', space=vmem, size = 0x12000, scoped, tag = 'internal scratch']
  #allocation2 [shape = 'f32[1,1]{1,0:T(1,128)S(1)}', space=vmem, size = 0x200, scoped, tag = 'scoped memory for tpu_custom_call.1']
  %s0 = inlined_call_operand.hbm [shape: bf16[128,896], index: 0, kind: input, shape index: {}]
  %s1 = inlined_call_operand.hbm [shape: bf16[896,512], index: 1, kind: input, shape index: {}]
  %s2 = inlined_call_operand.vmem [shape: f32[1,512], index: 2, kind: input, shape index: {}]
  %s3 = inlined_call_operand.hbm [shape: bf16[512,256], index: 3, kind: input, shape index: {}]
  %s4 = inlined_call_operand.vmem [shape: f32[1,256], index: 4, kind: input, shape index: {}]
  %s5 = inlined_call_operand.vmem [shape: f32[1,256], index: 5, kind: input, shape index: {}]
  %s6 = inlined_call_operand.<no memory space> [shape: f32[1,1], index: 6, kind: input, shape index: {}]
  %s7 = inlined_call_operand.vmem [shape: f32[128,1], index: 7, kind: output, shape index: {}]
  %s8 = sld [smem:[#allocation0]]
  $region50: #{tpu_custom_call.1} parent=0
    _
  %s10 = ssub.s32 1, %s8
  %s11 = scalar_select 0, %s10, %s8
  %v12 = vstv %s6
  %13 = vst [vmem:[#allocation2] sm:$0x1] %v12
  $region1: #{tpu_custom_call.1} parent=0
    #allocation3 [shape = 'u8[229376]{0}', space=vmem, size = 0x38000, scoped, tag = 'input window, operand 0, single buffered']
    #allocation4 [shape = 's32[1]{0}', space=sflag, size = 0x4, scoped, tag = 'scoped memory for tpu_custom_call.1']
    #allocation5 [shape = 'u8[917504]{0}', space=vmem, size = 0xe0000, scoped, tag = 'input window, operand 1, single buffered']
    #allocation6 [shape = 's32[1]{0}', space=sflag, size = 0x4, scoped, tag = 'scoped memory for tpu_custom_call.1']
    #allocation7 [shape = 'u8[262144]{0}', space=vmem, size = 0x40000, scoped, tag = 'input window, operand 3, single buffered']
    %14 = vsyncpa [#allocation4], 0
    %15 = vsyncpa [#allocation6], 0
    // Predicated region
    $region2: #{tpu_custom_call.1} parent=1 // pred_check
      _
    $region3: #{tpu_custom_call.1} parent=1 // pred_check_branch
      %17 = sbr.rel (0) target = $region5
    $region4: #{tpu_custom_call.1} parent=1 // pred_region
      %s19 = ssub.s32 7168, 7168
      %20 = vsyncadd [#allocation4], %s19
      %s21 = sshll.u32 [#allocation3], 4
      %s22 = int_to_ptr.vmem [resolvable:$true] %s21
      %27 = dma.hbm_to_vmem [thread:$0]  %s0, 7168, %s22, [#allocation4], 448, 448, 28
    $region5: #{tpu_custom_call.1} parent=1 // pred_fallthru
      _
    // Predicated region
    $region6: #{tpu_custom_call.1} parent=1 // pred_check
      _
    $region7: #{tpu_custom_call.1} parent=1 // pred_check_branch
      %29 = sbr.rel (0) target = $region9
    $region8: #{tpu_custom_call.1} parent=1 // pred_region
      %s31 = ssub.s32 28672, 28672
      %32 = vsyncadd [#allocation6], %s31
      %s33 = sshll.u32 [#allocation5], 4
      %s34 = int_to_ptr.vmem [resolvable:$true] %s33
      %39 = dma.hbm_to_vmem [thread:$0]  %s1, 28672, %s34, [#allocation6], 256, 256, 16
    $region9: #{tpu_custom_call.1} parent=1 // pred_fallthru
      _
    // Predicated region
    $region10: #{tpu_custom_call.1} parent=1 // pred_check
      _
    $region11: #{tpu_custom_call.1} parent=1 // pred_check_branch
      %41 = sbr.rel (0) target = $region13
    $region12: #{tpu_custom_call.1} parent=1 // pred_region
      _
    $region13: #{tpu_custom_call.1} parent=1 // pred_fallthru
      _
    // Predicated region
    $region14: #{tpu_custom_call.1} parent=1 // pred_check
      _
    $region15: #{tpu_custom_call.1} parent=1 // pred_check_branch
      %43 = sbr.rel (0) target = $region17
    $region16: #{tpu_custom_call.1} parent=1 // pred_region
      %s45 = ssub.s32 8192, 8192
      %46 = vsyncadd [#allocation6], %s45
      %s47 = sshll.u32 [#allocation7], 4
      %s48 = int_to_ptr.vmem [resolvable:$true] %s47
      %53 = dma.hbm_to_vmem [thread:$0]  %s3, 8192, %s48, [#allocation6], 128, 128, 8
    $region17: #{tpu_custom_call.1} parent=1 // pred_fallthru
      _
    // Predicated region
    $region18: #{tpu_custom_call.1} parent=1 // pred_check
      _
    $region19: #{tpu_custom_call.1} parent=1 // pred_check_branch
      %55 = sbr.rel (0) target = $region21
    $region20: #{tpu_custom_call.1} parent=1 // pred_region
      _
    $region21: #{tpu_custom_call.1} parent=1 // pred_fallthru
      _
    // Predicated region
    $region22: #{tpu_custom_call.1} parent=1 // pred_check
      _
    $region23: #{tpu_custom_call.1} parent=1 // pred_check_branch
      %57 = sbr.rel (0) target = $region25
    $region24: #{tpu_custom_call.1} parent=1 // pred_region
      _
    $region25: #{tpu_custom_call.1} parent=1 // pred_fallthru
      _
    // Predicated region
    $region26: #{tpu_custom_call.1} parent=1 // pred_check
      _
    $region27: #{tpu_custom_call.1} parent=1 // pred_check_branch
      %59 = sbr.rel (0) target = $region29
    $region28: #{tpu_custom_call.1} parent=1 // pred_region
      _
    $region29: #{tpu_custom_call.1} parent=1 // pred_fallthru
      _
    // Predicated region
    $region30: #{tpu_custom_call.1} parent=1 // pred_check
      _
    $region31: #{tpu_custom_call.1} parent=1 // pred_check_branch
      %61 = sbr.rel (0) target = $region33
    $region32: #{tpu_custom_call.1} parent=1 // pred_region
      %62 = dma.done [#allocation4], 7168
    $region33: #{tpu_custom_call.1} parent=1 // pred_fallthru
      _
    // Predicated region
    $region34: #{tpu_custom_call.1} parent=1 // pred_check
      _
    $region35: #{tpu_custom_call.1} parent=1 // pred_check_branch
      %64 = sbr.rel (0) target = $region37
    $region36: #{tpu_custom_call.1} parent=1 // pred_region
      %65 = dma.done [#allocation6], 28672
    $region37: #{tpu_custom_call.1} parent=1 // pred_fallthru
      _
    // Predicated region
    $region38: #{tpu_custom_call.1} parent=1 // pred_check
      _
    $region39: #{tpu_custom_call.1} parent=1 // pred_check_branch
      %67 = sbr.rel (0) target = $region41
    $region40: #{tpu_custom_call.1} parent=1 // pred_region
      %68 = dma.done [#allocation6], 8192
    $region41: #{tpu_custom_call.1} parent=1 // pred_fallthru
      _
    %v70 = vld [vmem:[#allocation3] sm:$0xff]
    %v71 = vld [vmem:[#allocation3 + $0x8] sm:$0xff]
    %v72 = vld [vmem:[#allocation3 + $0x10] sm:$0xff]
    %v73 = vld [vmem:[#allocation3 + $0x18] sm:$0xf]
    %v74 = vld [vmem:[#allocation3 + $0x1c] sm:$0xff]
    %v75 = vld [vmem:[#allocation3 + $0x24] sm:$0xff]
    %v76 = vld [vmem:[#allocation3 + $0x2c] sm:$0xff]
    %v77 = vld [vmem:[#allocation3 + $0x34] sm:$0xf]
    %v78 = vld [vmem:[#allocation3 + $0x38] sm:$0xff]
    %v79 = vld [vmem:[#allocation3 + $0x40] sm:$0xff]
    %v80 = vld [vmem:[#allocation3 + $0x48] sm:$0xff]
    %v81 = vld [vmem:[#allocation3 + $0x50] sm:$0xf]
    %v82 = vld [vmem:[#allocation3 + $0x54] sm:$0xff]
    %v83 = vld [vmem:[#allocation3 + $0x5c] sm:$0xff]
    %v84 = vld [vmem:[#allocation3 + $0x64] sm:$0xff]
    %v85 = vld [vmem:[#allocation3 + $0x6c] sm:$0xf]
    %v86 = vld [vmem:[#allocation3 + $0x70] sm:$0xff]
    %v87 = vld [vmem:[#allocation3 + $0x78] sm:$0xff]
    %v88 = vld [vmem:[#allocation3 + $0x80] sm:$0xff]
    %v89 = vld [vmem:[#allocation3 + $0x88] sm:$0xf]
    %v90 = vld [vmem:[#allocation3 + $0x8c] sm:$0xff]
    %v91 = vld [vmem:[#allocation3 + $0x94] sm:$0xff]
    %v92 = vld [vmem:[#allocation3 + $0x9c] sm:$0xff]
    %v93 = vld [vmem:[#allocation3 + $0xa4] sm:$0xf]
    %v94 = vld [vmem:[#allocation3 + $0xa8] sm:$0xff]
    %v95 = vld [vmem:[#allocation3 + $0xb0] sm:$0xff]
    %v96 = vld [vmem:[#allocation3 + $0xb8] sm:$0xff]
    %v97 = vld [vmem:[#allocation3 + $0xc0] sm:$0xf]
    %v98 = vld [vmem:[#allocation3 + $0xc4] sm:$0xff]
    %v99 = vld [vmem:[#allocation3 + $0xcc] sm:$0xff]
    %v100 = vld [vmem:[#allocation3 + $0xd4] sm:$0xff]
    %v101 = vld [vmem:[#allocation3 + $0xdc] sm:$0xf]
    %v102 = vld [vmem:[#allocation3 + $0xe0] sm:$0xff]
    %v103 = vld [vmem:[#allocation3 + $0xe8] sm:$0xff]
    %v104 = vld [vmem:[#allocation3 + $0xf0] sm:$0xff]
    %v105 = vld [vmem:[#allocation3 + $0xf8] sm:$0xf]
    %v106 = vld [vmem:[#allocation3 + $0xfc] sm:$0xff]
    %v107 = vld [vmem:[#allocation3 + $0x104] sm:$0xff]
    %v108 = vld [vmem:[#allocation3 + $0x10c] sm:$0xff]
    %v109 = vld [vmem:[#allocation3 + $0x114] sm:$0xf]
    %v110 = vld [vmem:[#allocation3 + $0x118] sm:$0xff]
    %v111 = vld [vmem:[#allocation3 + $0x120] sm:$0xff]
    %v112 = vld [vmem:[#allocation3 + $0x128] sm:$0xff]
    %v113 = vld [vmem:[#allocation3 + $0x130] sm:$0xf]
    %v114 = vld [vmem:[#allocation3 + $0x134] sm:$0xff]
    %v115 = vld [vmem:[#allocation3 + $0x13c] sm:$0xff]
    %v116 = vld [vmem:[#allocation3 + $0x144] sm:$0xff]
    %v117 = vld [vmem:[#allocation3 + $0x14c] sm:$0xf]
    %v118 = vld [vmem:[#allocation3 + $0x150] sm:$0xff]
    %v119 = vld [vmem:[#allocation3 + $0x158] sm:$0xff]
    %v120 = vld [vmem:[#allocation3 + $0x160] sm:$0xff]
    %v121 = vld [vmem:[#allocation3 + $0x168] sm:$0xf]
    %v122 = vld [vmem:[#allocation3 + $0x16c] sm:$0xff]
    %v123 = vld [vmem:[#allocation3 + $0x174] sm:$0xff]
    %v124 = vld [vmem:[#allocation3 + $0x17c] sm:$0xff]
    %v125 = vld [vmem:[#allocation3 + $0x184] sm:$0xf]
    %v126 = vld [vmem:[#allocation3 + $0x188] sm:$0xff]
    %v127 = vld [vmem:[#allocation3 + $0x190] sm:$0xff]
    %v128 = vld [vmem:[#allocation3 + $0x198] sm:$0xff]
    %v129 = vld [vmem:[#allocation3 + $0x1a0] sm:$0xf]
    %v130 = vld [vmem:[#allocation3 + $0x1a4] sm:$0xff]
    %v131 = vld [vmem:[#allocation3 + $0x1ac] sm:$0xff]
    %v132 = vld [vmem:[#allocation3 + $0x1b4] sm:$0xff]
    %v133 = vld [vmem:[#allocation3 + $0x1bc] sm:$0xf]
    %v134 = vld [vmem:[#allocation5] sm:$0xff]
    %v135 = vld [vmem:[#allocation5 + $0x8] sm:$0xff]
    %v136 = vld [vmem:[#allocation5 + $0x10] sm:$0xff]
    %v137 = vld [vmem:[#allocation5 + $0x18] sm:$0xff]
    %v138 = vld [vmem:[#allocation5 + $0x20] sm:$0xff]
    %v139 = vld [vmem:[#allocation5 + $0x28] sm:$0xff]
    %v140 = vld [vmem:[#allocation5 + $0x30] sm:$0xff]
    %v141 = vld [vmem:[#allocation5 + $0x38] sm:$0xff]
    %v142 = vld [vmem:[#allocation5 + $0x40] sm:$0xff]
    %v143 = vld [vmem:[#allocation5 + $0x48] sm:$0xff]
    %v144 = vld [vmem:[#allocation5 + $0x50] sm:$0xff]
    %v145 = vld [vmem:[#allocation5 + $0x58] sm:$0xff]
    %v146 = vld [vmem:[#allocation5 + $0x60] sm:$0xff]
    %v147 = vld [vmem:[#allocation5 + $0x68] sm:$0xff]
    %v148 = vld [vmem:[#allocation5 + $0x70] sm:$0xff]
    %v149 = vld [vmem:[#allocation5 + $0x78] sm:$0xff]
    %v150 = vld [vmem:[#allocation5 + $0x80] sm:$0xff]
    %v151 = vld [vmem:[#allocation5 + $0x88] sm:$0xff]
    %v152 = vld [vmem:[#allocation5 + $0x90] sm:$0xff]
    %v153 = vld [vmem:[#allocation5 + $0x98] sm:$0xff]
    %v154 = vld [vmem:[#allocation5 + $0xa0] sm:$0xff]
    %v155 = vld [vmem:[#allocation5 + $0xa8] sm:$0xff]
    %v156 = vld [vmem:[#allocation5 + $0xb0] sm:$0xff]
    %v157 = vld [vmem:[#allocation5 + $0xb8] sm:$0xff]
    %v158 = vld [vmem:[#allocation5 + $0xc0] sm:$0xff]
    %v159 = vld [vmem:[#allocation5 + $0xc8] sm:$0xff]
    %v160 = vld [vmem:[#allocation5 + $0xd0] sm:$0xff]
    %v161 = vld [vmem:[#allocation5 + $0xd8] sm:$0xff]
    %v162 = vld [vmem:[#allocation5 + $0xe0] sm:$0xff]
    %v163 = vld [vmem:[#allocation5 + $0xe8] sm:$0xff]
    %v164 = vld [vmem:[#allocation5 + $0xf0] sm:$0xff]
    %v165 = vld [vmem:[#allocation5 + $0xf8] sm:$0xff]
    %v166 = vld [vmem:[#allocation5 + $0x100] sm:$0xff]
    %v167 = vld [vmem:[#allocation5 + $0x108] sm:$0xff]
    %v168 = vld [vmem:[#allocation5 + $0x110] sm:$0xff]
    %v169 = vld [vmem:[#allocation5 + $0x118] sm:$0xff]
    %v170 = vld [vmem:[#allocation5 + $0x120] sm:$0xff]
    %v171 = vld [vmem:[#allocation5 + $0x128] sm:$0xff]
    %v172 = vld [vmem:[#allocation5 + $0x130] sm:$0xff]
    %v173 = vld [vmem:[#allocation5 + $0x138] sm:$0xff]
    %v174 = vld [vmem:[#allocation5 + $0x140] sm:$0xff]
    %v175 = vld [vmem:[#allocation5 + $0x148] sm:$0xff]
    %v176 = vld [vmem:[#allocation5 + $0x150] sm:$0xff]
    %v177 = vld [vmem:[#allocation5 + $0x158] sm:$0xff]
    %v178 = vld [vmem:[#allocation5 + $0x160] sm:$0xff]
    %v179 = vld [vmem:[#allocation5 + $0x168] sm:$0xff]
    %v180 = vld [vmem:[#allocation5 + $0x170] sm:$0xff]
    %v181 = vld [vmem:[#allocation5 + $0x178] sm:$0xff]
    %v182 = vld [vmem:[#allocation5 + $0x180] sm:$0xff]
    %v183 = vld [vmem:[#allocation5 + $0x188] sm:$0xff]
    %v184 = vld [vmem:[#allocation5 + $0x190] sm:$0xff]
    %v185 = vld [vmem:[#allocation5 + $0x198] sm:$0xff]
    %v186 = vld [vmem:[#allocation5 + $0x1a0] sm:$0xff]
    %v187 = vld [vmem:[#allocation5 + $0x1a8] sm:$0xff]
    %v188 = vld [vmem:[#allocation5 + $0x1b0] sm:$0xff]
    %v189 = vld [vmem:[#allocation5 + $0x1b8] sm:$0xff]
    %v190 = vld [vmem:[#allocation5 + $0x1c0] sm:$0xff]
    %v191 = vld [vmem:[#allocation5 + $0x1c8] sm:$0xff]
    %v192 = vld [vmem:[#allocation5 + $0x1d0] sm:$0xff]
    %v193 = vld [vmem:[#allocation5 + $0x1d8] sm:$0xff]
    %v194 = vld [vmem:[#allocation5 + $0x1e0] sm:$0xff]
    %v195 = vld [vmem:[#allocation5 + $0x1e8] sm:$0xff]
    %v196 = vld [vmem:[#allocation5 + $0x1f0] sm:$0xff]
    %v197 = vld [vmem:[#allocation5 + $0x1f8] sm:$0xff]
    %v198 = vld [vmem:[#allocation5 + $0x200] sm:$0xff]
    %v199 = vld [vmem:[#allocation5 + $0x208] sm:$0xff]
    %v200 = vld [vmem:[#allocation5 + $0x210] sm:$0xff]
    %v201 = vld [vmem:[#allocation5 + $0x218] sm:$0xff]
    %v202 = vld [vmem:[#allocation5 + $0x220] sm:$0xff]
    %v203 = vld [vmem:[#allocation5 + $0x228] sm:$0xff]
    %v204 = vld [vmem:[#allocation5 + $0x230] sm:$0xff]
    %v205 = vld [vmem:[#allocation5 + $0x238] sm:$0xff]
    %v206 = vld [vmem:[#allocation5 + $0x240] sm:$0xff]
    %v207 = vld [vmem:[#allocation5 + $0x248] sm:$0xff]
    %v208 = vld [vmem:[#allocation5 + $0x250] sm:$0xff]
    %v209 = vld [vmem:[#allocation5 + $0x258] sm:$0xff]
    %v210 = vld [vmem:[#allocation5 + $0x260] sm:$0xff]
    %v211 = vld [vmem:[#allocation5 + $0x268] sm:$0xff]
    %v212 = vld [vmem:[#allocation5 + $0x270] sm:$0xff]
    %v213 = vld [vmem:[#allocation5 + $0x278] sm:$0xff]
    %v214 = vld [vmem:[#allocation5 + $0x280] sm:$0xff]
    %v215 = vld [vmem:[#allocation5 + $0x288] sm:$0xff]
    %v216 = vld [vmem:[#allocation5 + $0x290] sm:$0xff]
    %v217 = vld [vmem:[#allocation5 + $0x298] sm:$0xff]
    %v218 = vld [vmem:[#allocation5 + $0x2a0] sm:$0xff]
    %v219 = vld [vmem:[#allocation5 + $0x2a8] sm:$0xff]
    %v220 = vld [vmem:[#allocation5 + $0x2b0] sm:$0xff]
    %v221 = vld [vmem:[#allocation5 + $0x2b8] sm:$0xff]
    %v222 = vld [vmem:[#allocation5 + $0x2c0] sm:$0xff]
    %v223 = vld [vmem:[#allocation5 + $0x2c8] sm:$0xff]
    %v224 = vld [vmem:[#allocation5 + $0x2d0] sm:$0xff]
    %v225 = vld [vmem:[#allocation5 + $0x2d8] sm:$0xff]
    %v226 = vld [vmem:[#allocation5 + $0x2e0] sm:$0xff]
    %v227 = vld [vmem:[#allocation5 + $0x2e8] sm:$0xff]
    %v228 = vld [vmem:[#allocation5 + $0x2f0] sm:$0xff]
    %v229 = vld [vmem:[#allocation5 + $0x2f8] sm:$0xff]
    %v230 = vld [vmem:[#allocation5 + $0x300] sm:$0xff]
    %v231 = vld [vmem:[#allocation5 + $0x308] sm:$0xff]
    %v232 = vld [vmem:[#allocation5 + $0x310] sm:$0xff]
    %v233 = vld [vmem:[#allocation5 + $0x318] sm:$0xff]
    %v234 = vld [vmem:[#allocation5 + $0x320] sm:$0xff]
    %v235 = vld [vmem:[#allocation5 + $0x328] sm:$0xff]
    %v236 = vld [vmem:[#allocation5 + $0x330] sm:$0xff]
    %v237 = vld [vmem:[#allocation5 + $0x338] sm:$0xff]
    %v238 = vld [vmem:[#allocation5 + $0x340] sm:$0xff]
    %v239 = vld [vmem:[#allocation5 + $0x348] sm:$0xff]
    %v240 = vld [vmem:[#allocation5 + $0x350] sm:$0xff]
    %v241 = vld [vmem:[#allocation5 + $0x358] sm:$0xff]
    %v242 = vld [vmem:[#allocation5 + $0x360] sm:$0xff]
    %v243 = vld [vmem:[#allocation5 + $0x368] sm:$0xff]
    %v244 = vld [vmem:[#allocation5 + $0x370] sm:$0xff]
    %v245 = vld [vmem:[#allocation5 + $0x378] sm:$0xff]
    %v246 = vld [vmem:[#allocation5 + $0x380] sm:$0xff]
    %v247 = vld [vmem:[#allocation5 + $0x388] sm:$0xff]
    %v248 = vld [vmem:[#allocation5 + $0x390] sm:$0xff]
    %v249 = vld [vmem:[#allocation5 + $0x398] sm:$0xff]
    %v250 = vld [vmem:[#allocation5 + $0x3a0] sm:$0xff]
    %v251 = vld [vmem:[#allocation5 + $0x3a8] sm:$0xff]
    %v252 = vld [vmem:[#allocation5 + $0x3b0] sm:$0xff]
    %v253 = vld [vmem:[#allocation5 + $0x3b8] sm:$0xff]
    %v254 = vld [vmem:[#allocation5 + $0x3c0] sm:$0xff]
    %v255 = vld [vmem:[#allocation5 + $0x3c8] sm:$0xff]
    %v256 = vld [vmem:[#allocation5 + $0x3d0] sm:$0xff]
    %v257 = vld [vmem:[#allocation5 + $0x3d8] sm:$0xff]
    %v258 = vld [vmem:[#allocation5 + $0x3e0] sm:$0xff]
    %v259 = vld [vmem:[#allocation5 + $0x3e8] sm:$0xff]
    %v260 = vld [vmem:[#allocation5 + $0x3f0] sm:$0xff]
    %v261 = vld [vmem:[#allocation5 + $0x3f8] sm:$0xff]
    %v262 = vld [vmem:[#allocation5 + $0x400] sm:$0xff]
    %v263 = vld [vmem:[#allocation5 + $0x408] sm:$0xff]
    %v264 = vld [vmem:[#allocation5 + $0x410] sm:$0xff]
    %v265 = vld [vmem:[#allocation5 + $0x418] sm:$0xff]
    %v266 = vld [vmem:[#allocation5 + $0x420] sm:$0xff]
    %v267 = vld [vmem:[#allocation5 + $0x428] sm:$0xff]
    %v268 = vld [vmem:[#allocation5 + $0x430] sm:$0xff]
    %v269 = vld [vmem:[#allocation5 + $0x438] sm:$0xff]
    %v270 = vld [vmem:[#allocation5 + $0x440] sm:$0xff]
    %v271 = vld [vmem:[#allocation5 + $0x448] sm:$0xff]
    %v272 = vld [vmem:[#allocation5 + $0x450] sm:$0xff]
    %v273 = vld [vmem:[#allocation5 + $0x458] sm:$0xff]
    %v274 = vld [vmem:[#allocation5 + $0x460] sm:$0xff]
    %v275 = vld [vmem:[#allocation5 + $0x468] sm:$0xff]
    %v276 = vld [vmem:[#allocation5 + $0x470] sm:$0xff]
    %v277 = vld [vmem:[#allocation5 + $0x478] sm:$0xff]
    %v278 = vld [vmem:[#allocation5 + $0x480] sm:$0xff]
    %v279 = vld [vmem:[#allocation5 + $0x488] sm:$0xff]
    %v280 = vld [vmem:[#allocation5 + $0x490] sm:$0xff]
    %v281 = vld [vmem:[#allocation5 + $0x498] sm:$0xff]
    %v282 = vld [vmem:[#allocation5 + $0x4a0] sm:$0xff]
    %v283 = vld [vmem:[#allocation5 + $0x4a8] sm:$0xff]
    %v284 = vld [vmem:[#allocation5 + $0x4b0] sm:$0xff]
    %v285 = vld [vmem:[#allocation5 + $0x4b8] sm:$0xff]
    %v286 = vld [vmem:[#allocation5 + $0x4c0] sm:$0xff]
    %v287 = vld [vmem:[#allocation5 + $0x4c8] sm:$0xff]
    %v288 = vld [vmem:[#allocation5 + $0x4d0] sm:$0xff]
    %v289 = vld [vmem:[#allocation5 + $0x4d8] sm:$0xff]
    %v290 = vld [vmem:[#allocation5 + $0x4e0] sm:$0xff]
    %v291 = vld [vmem:[#allocation5 + $0x4e8] sm:$0xff]
    %v292 = vld [vmem:[#allocation5 + $0x4f0] sm:$0xff]
    %v293 = vld [vmem:[#allocation5 + $0x4f8] sm:$0xff]
    %v294 = vld [vmem:[#allocation5 + $0x500] sm:$0xff]
    %v295 = vld [vmem:[#allocation5 + $0x508] sm:$0xff]
    %v296 = vld [vmem:[#allocation5 + $0x510] sm:$0xff]
    %v297 = vld [vmem:[#allocation5 + $0x518] sm:$0xff]
    %v298 = vld [vmem:[#allocation5 + $0x520] sm:$0xff]
    %v299 = vld [vmem:[#allocation5 + $0x528] sm:$0xff]
    %v300 = vld [vmem:[#allocation5 + $0x530] sm:$0xff]
    %v301 = vld [vmem:[#allocation5 + $0x538] sm:$0xff]
    %v302 = vld [vmem:[#allocation5 + $0x540] sm:$0xff]
    %v303 = vld [vmem:[#allocation5 + $0x548] sm:$0xff]
    %v304 = vld [vmem:[#allocation5 + $0x550] sm:$0xff]
    %v305 = vld [vmem:[#allocation5 + $0x558] sm:$0xff]
    %v306 = vld [vmem:[#allocation5 + $0x560] sm:$0xff]
    %v307 = vld [vmem:[#allocation5 + $0x568] sm:$0xff]
    %v308 = vld [vmem:[#allocation5 + $0x570] sm:$0xff]
    %v309 = vld [vmem:[#allocation5 + $0x578] sm:$0xff]
    %v310 = vld [vmem:[#allocation5 + $0x580] sm:$0xff]
    %v311 = vld [vmem:[#allocation5 + $0x588] sm:$0xff]
    %v312 = vld [vmem:[#allocation5 + $0x590] sm:$0xff]
    %v313 = vld [vmem:[#allocation5 + $0x598] sm:$0xff]
    %v314 = vld [vmem:[#allocation5 + $0x5a0] sm:$0xff]
    %v315 = vld [vmem:[#allocation5 + $0x5a8] sm:$0xff]
    %v316 = vld [vmem:[#allocation5 + $0x5b0] sm:$0xff]
    %v317 = vld [vmem:[#allocation5 + $0x5b8] sm:$0xff]
    %v318 = vld [vmem:[#allocation5 + $0x5c0] sm:$0xff]
    %v319 = vld [vmem:[#allocation5 + $0x5c8] sm:$0xff]
    %v320 = vld [vmem:[#allocation5 + $0x5d0] sm:$0xff]
    %v321 = vld [vmem:[#allocation5 + $0x5d8] sm:$0xff]
    %v322 = vld [vmem:[#allocation5 + $0x5e0] sm:$0xff]
    %v323 = vld [vmem:[#allocation5 + $0x5e8] sm:$0xff]
    %v324 = vld [vmem:[#allocation5 + $0x5f0] sm:$0xff]
    %v325 = vld [vmem:[#allocation5 + $0x5f8] sm:$0xff]
    %v326 = vld [vmem:[#allocation5 + $0x600] sm:$0xff]
    %v327 = vld [vmem:[#allocation5 + $0x608] sm:$0xff]
    %v328 = vld [vmem:[#allocation5 + $0x610] sm:$0xff]
    %v329 = vld [vmem:[#allocation5 + $0x618] sm:$0xff]
    %v330 = vld [vmem:[#allocation5 + $0x620] sm:$0xff]
    %v331 = vld [vmem:[#allocation5 + $0x628] sm:$0xff]
    %v332 = vld [vmem:[#allocation5 + $0x630] sm:$0xff]
    %v333 = vld [vmem:[#allocation5 + $0x638] sm:$0xff]
    %v334 = vld [vmem:[#allocation5 + $0x640] sm:$0xff]
    %v335 = vld [vmem:[#allocation5 + $0x648] sm:$0xff]
    %v336 = vld [vmem:[#allocation5 + $0x650] sm:$0xff]
    %v337 = vld [vmem:[#allocation5 + $0x658] sm:$0xff]
    %v338 = vld [vmem:[#allocation5 + $0x660] sm:$0xff]
    %v339 = vld [vmem:[#allocation5 + $0x668] sm:$0xff]
    %v340 = vld [vmem:[#allocation5 + $0x670] sm:$0xff]
    %v341 = vld [vmem:[#allocation5 + $0x678] sm:$0xff]
    %v342 = vld [vmem:[#allocation5 + $0x680] sm:$0xff]
    %v343 = vld [vmem:[#allocation5 + $0x688] sm:$0xff]
    %v344 = vld [vmem:[#allocation5 + $0x690] sm:$0xff]
    %v345 = vld [vmem:[#allocation5 + $0x698] sm:$0xff]
    %v346 = vld [vmem:[#allocation5 + $0x6a0] sm:$0xff]
    %v347 = vld [vmem:[#allocation5 + $0x6a8] sm:$0xff]
    %v348 = vld [vmem:[#allocation5 + $0x6b0] sm:$0xff]
    %v349 = vld [vmem:[#allocation5 + $0x6b8] sm:$0xff]
    %v350 = vld [vmem:[#allocation5 + $0x6c0] sm:$0xff]
    %v351 = vld [vmem:[#allocation5 + $0x6c8] sm:$0xff]
    %v352 = vld [vmem:[#allocation5 + $0x6d0] sm:$0xff]
    %v353 = vld [vmem:[#allocation5 + $0x6d8] sm:$0xff]
    %v354 = vld [vmem:[#allocation5 + $0x6e0] sm:$0xff]
    %v355 = vld [vmem:[#allocation5 + $0x6e8] sm:$0xff]
    %v356 = vld [vmem:[#allocation5 + $0x6f0] sm:$0xff]
    %v357 = vld [vmem:[#allocation5 + $0x6f8] sm:$0xff]
    %v358 = vld [vmem:[%s2] sm:$0xf]
    %v360 = vlaneseq
    %v361 = vshrl.u32 %v360, 7
    %v362 = vsub.s32 0, %v361
    %v363 = vrot.slane %v358, %v362
    %v364 = vlaneseq
    %v365 = vshrl.u32 %v364, 7
    %v366 = vsub.s32 1, %v365
    %v367 = vrot.slane %v358, %v366
    %v368 = vlaneseq
    %v369 = vshrl.u32 %v368, 7
    %v370 = vsub.s32 2, %v369
    %v371 = vrot.slane %v358, %v370
    %v372 = vlaneseq
    %v373 = vshrl.u32 %v372, 7
    %v374 = vsub.s32 3, %v373
    %v375 = vrot.slane %v358, %v374
    %v444 = vunpack.c.l.b16 %v70
    %v445 = vunpack.c.h.b16 %v70
    %v446 = vunpack.c.l.b16 %v71
    %v447 = vunpack.c.h.b16 %v71
    %v448 = vunpack.c.l.b16 %v72
    %v449 = vunpack.c.h.b16 %v72
    %v450 = vunpack.c.l.b16 %v73
    %v451 = vunpack.c.l.b16 %v74
    %v452 = vunpack.c.h.b16 %v74
    %v453 = vunpack.c.l.b16 %v75
    %v454 = vunpack.c.h.b16 %v75
    %v455 = vunpack.c.l.b16 %v76
    %v456 = vunpack.c.h.b16 %v76
    %v457 = vunpack.c.l.b16 %v77
    %v458 = vunpack.c.l.b16 %v78
    %v459 = vunpack.c.h.b16 %v78
    %v460 = vunpack.c.l.b16 %v79
    %v461 = vunpack.c.h.b16 %v79
    %v462 = vunpack.c.l.b16 %v80
    %v463 = vunpack.c.h.b16 %v80
    %v464 = vunpack.c.l.b16 %v81
    %v465 = vunpack.c.l.b16 %v82
    %v466 = vunpack.c.h.b16 %v82
    %v467 = vunpack.c.l.b16 %v83
    %v468 = vunpack.c.h.b16 %v83
    %v469 = vunpack.c.l.b16 %v84
    %v470 = vunpack.c.h.b16 %v84
    %v471 = vunpack.c.l.b16 %v85
    %v472 = vunpack.c.l.b16 %v86
    %v473 = vunpack.c.h.b16 %v86
    %v474 = vunpack.c.l.b16 %v87
    %v475 = vunpack.c.h.b16 %v87
    %v476 = vunpack.c.l.b16 %v88
    %v477 = vunpack.c.h.b16 %v88
    %v478 = vunpack.c.l.b16 %v89
    %v479 = vunpack.c.l.b16 %v90
    %v480 = vunpack.c.h.b16 %v90
    %v481 = vunpack.c.l.b16 %v91
    %v482 = vunpack.c.h.b16 %v91
    %v483 = vunpack.c.l.b16 %v92
    %v484 = vunpack.c.h.b16 %v92
    %v485 = vunpack.c.l.b16 %v93
    %v486 = vunpack.c.l.b16 %v94
    %v487 = vunpack.c.h.b16 %v94
    %v488 = vunpack.c.l.b16 %v95
    %v489 = vunpack.c.h.b16 %v95
    %v490 = vunpack.c.l.b16 %v96
    %v491 = vunpack.c.h.b16 %v96
    %v492 = vunpack.c.l.b16 %v97
    %v493 = vunpack.c.l.b16 %v98
    %v494 = vunpack.c.h.b16 %v98
    %v495 = vunpack.c.l.b16 %v99
    %v496 = vunpack.c.h.b16 %v99
    %v497 = vunpack.c.l.b16 %v100
    %v498 = vunpack.c.h.b16 %v100
    %v499 = vunpack.c.l.b16 %v101
    %v500 = vunpack.c.l.b16 %v102
    %v501 = vunpack.c.h.b16 %v102
    %v502 = vunpack.c.l.b16 %v103
    %v503 = vunpack.c.h.b16 %v103
    %v504 = vunpack.c.l.b16 %v104
    %v505 = vunpack.c.h.b16 %v104
    %v506 = vunpack.c.l.b16 %v105
    %v507 = vunpack.c.l.b16 %v106
    %v508 = vunpack.c.h.b16 %v106
    %v509 = vunpack.c.l.b16 %v107
    %v510 = vunpack.c.h.b16 %v107
    %v511 = vunpack.c.l.b16 %v108
    %v512 = vunpack.c.h.b16 %v108
    %v513 = vunpack.c.l.b16 %v109
    %v514 = vunpack.c.l.b16 %v110
    %v515 = vunpack.c.h.b16 %v110
    %v516 = vunpack.c.l.b16 %v111
    %v517 = vunpack.c.h.b16 %v111
    %v518 = vunpack.c.l.b16 %v112
    %v519 = vunpack.c.h.b16 %v112
    %v520 = vunpack.c.l.b16 %v113
    %v521 = vunpack.c.l.b16 %v114
    %v522 = vunpack.c.h.b16 %v114
    %v523 = vunpack.c.l.b16 %v115
    %v524 = vunpack.c.h.b16 %v115
    %v525 = vunpack.c.l.b16 %v116
    %v526 = vunpack.c.h.b16 %v116
    %v527 = vunpack.c.l.b16 %v117
    %v528 = vunpack.c.l.b16 %v118
    %v529 = vunpack.c.h.b16 %v118
    %v530 = vunpack.c.l.b16 %v119
    %v531 = vunpack.c.h.b16 %v119
    %v532 = vunpack.c.l.b16 %v120
    %v533 = vunpack.c.h.b16 %v120
    %v534 = vunpack.c.l.b16 %v121
    %v535 = vunpack.c.l.b16 %v122
    %v536 = vunpack.c.h.b16 %v122
    %v537 = vunpack.c.l.b16 %v123
    %v538 = vunpack.c.h.b16 %v123
    %v539 = vunpack.c.l.b16 %v124
    %v540 = vunpack.c.h.b16 %v124
    %v541 = vunpack.c.l.b16 %v125
    %v542 = vunpack.c.l.b16 %v126
    %v543 = vunpack.c.h.b16 %v126
    %v544 = vunpack.c.l.b16 %v127
    %v545 = vunpack.c.h.b16 %v127
    %v546 = vunpack.c.l.b16 %v128
    %v547 = vunpack.c.h.b16 %v128
    %v548 = vunpack.c.l.b16 %v129
    %v549 = vunpack.c.l.b16 %v130
    %v550 = vunpack.c.h.b16 %v130
    %v551 = vunpack.c.l.b16 %v131
    %v552 = vunpack.c.h.b16 %v131
    %v553 = vunpack.c.l.b16 %v132
    %v554 = vunpack.c.h.b16 %v132
    %v555 = vunpack.c.l.b16 %v133
    %v556 = vpack.c.b16 %v451, %v444
    %v557 = vpack.c.b16 %v452, %v445
    %v558 = vpack.c.b16 %v453, %v446
    %v559 = vpack.c.b16 %v454, %v447
    %v560 = vpack.c.b16 %v455, %v448
    %v561 = vpack.c.b16 %v456, %v449
    %v562 = vpack.c.b16 %v457, %v450
    %v563 = vpack.c.b16 %v465, %v458
    %v564 = vpack.c.b16 %v466, %v459
    %v565 = vpack.c.b16 %v467, %v460
    %v566 = vpack.c.b16 %v468, %v461
    %v567 = vpack.c.b16 %v469, %v462
    %v568 = vpack.c.b16 %v470, %v463
    %v569 = vpack.c.b16 %v471, %v464
    %v570 = vpack.c.b16 %v479, %v472
    %v571 = vpack.c.b16 %v480, %v473
    %v572 = vpack.c.b16 %v481, %v474
    %v573 = vpack.c.b16 %v482, %v475
    %v574 = vpack.c.b16 %v483, %v476
    %v575 = vpack.c.b16 %v484, %v477
    %v576 = vpack.c.b16 %v485, %v478
    %v577 = vpack.c.b16 %v493, %v486
    %v578 = vpack.c.b16 %v494, %v487
    %v579 = vpack.c.b16 %v495, %v488
    %v580 = vpack.c.b16 %v496, %v489
    %v581 = vpack.c.b16 %v497, %v490
    %v582 = vpack.c.b16 %v498, %v491
    %v583 = vpack.c.b16 %v499, %v492
    %v584 = vpack.c.b16 %v507, %v500
    %v585 = vpack.c.b16 %v508, %v501
    %v586 = vpack.c.b16 %v509, %v502
    %v587 = vpack.c.b16 %v510, %v503
    %v588 = vpack.c.b16 %v511, %v504
    %v589 = vpack.c.b16 %v512, %v505
    %v590 = vpack.c.b16 %v513, %v506
    %v591 = vpack.c.b16 %v521, %v514
    %v592 = vpack.c.b16 %v522, %v515
    %v593 = vpack.c.b16 %v523, %v516
    %v594 = vpack.c.b16 %v524, %v517
    %v595 = vpack.c.b16 %v525, %v518
    %v596 = vpack.c.b16 %v526, %v519
    %v597 = vpack.c.b16 %v527, %v520
    %v598 = vpack.c.b16 %v535, %v528
    %v599 = vpack.c.b16 %v536, %v529
    %v600 = vpack.c.b16 %v537, %v530
    %v601 = vpack.c.b16 %v538, %v531
    %v602 = vpack.c.b16 %v539, %v532
    %v603 = vpack.c.b16 %v540, %v533
    %v604 = vpack.c.b16 %v541, %v534
    %v605 = vpack.c.b16 %v549, %v542
    %v606 = vpack.c.b16 %v550, %v543
    %v607 = vpack.c.b16 %v551, %v544
    %v608 = vpack.c.b16 %v552, %v545
    %v609 = vpack.c.b16 %v553, %v546
    %v610 = vpack.c.b16 %v554, %v547
    %v611 = vpack.c.b16 %v555, %v548
    %v892 = vunpack.c.l.b16 %v134
    %v893 = vunpack.c.h.b16 %v134
    %v894 = vunpack.c.l.b16 %v135
    %v895 = vunpack.c.h.b16 %v135
    %v896 = vunpack.c.l.b16 %v136
    %v897 = vunpack.c.h.b16 %v136
    %v898 = vunpack.c.l.b16 %v137
    %v899 = vunpack.c.h.b16 %v137
    %v900 = vunpack.c.l.b16 %v138
    %v901 = vunpack.c.h.b16 %v138
    %v902 = vunpack.c.l.b16 %v139
    %v903 = vunpack.c.h.b16 %v139
    %v904 = vunpack.c.l.b16 %v140
    %v905 = vunpack.c.h.b16 %v140
    %v906 = vunpack.c.l.b16 %v141
    %v907 = vunpack.c.h.b16 %v141
    %v908 = vunpack.c.l.b16 %v142
    %v909 = vunpack.c.h.b16 %v142
    %v910 = vunpack.c.l.b16 %v143
    %v911 = vunpack.c.h.b16 %v143
    %v912 = vunpack.c.l.b16 %v144
    %v913 = vunpack.c.h.b16 %v144
    %v914 = vunpack.c.l.b16 %v145
    %v915 = vunpack.c.h.b16 %v145
    %v916 = vunpack.c.l.b16 %v146
    %v917 = vunpack.c.h.b16 %v146
    %v918 = vunpack.c.l.b16 %v147
    %v919 = vunpack.c.h.b16 %v147
    %v920 = vunpack.c.l.b16 %v148
    %v921 = vunpack.c.h.b16 %v148
    %v922 = vunpack.c.l.b16 %v149
    %v923 = vunpack.c.h.b16 %v149
    %v924 = vunpack.c.l.b16 %v150
    %v925 = vunpack.c.h.b16 %v150
    %v926 = vunpack.c.l.b16 %v151
    %v927 = vunpack.c.h.b16 %v151
    %v928 = vunpack.c.l.b16 %v152
    %v929 = vunpack.c.h.b16 %v152
    %v930 = vunpack.c.l.b16 %v153
    %v931 = vunpack.c.h.b16 %v153
    %v932 = vunpack.c.l.b16 %v154
    %v933 = vunpack.c.h.b16 %v154
    %v934 = vunpack.c.l.b16 %v155
    %v935 = vunpack.c.h.b16 %v155
    %v936 = vunpack.c.l.b16 %v156
    %v937 = vunpack.c.h.b16 %v156
    %v938 = vunpack.c.l.b16 %v157
    %v939 = vunpack.c.h.b16 %v157
    %v940 = vunpack.c.l.b16 %v158
    %v941 = vunpack.c.h.b16 %v158
    %v942 = vunpack.c.l.b16 %v159
    %v943 = vunpack.c.h.b16 %v159
    %v944 = vunpack.c.l.b16 %v160
    %v945 = vunpack.c.h.b16 %v160
    %v946 = vunpack.c.l.b16 %v161
    %v947 = vunpack.c.h.b16 %v161
    %v948 = vunpack.c.l.b16 %v162
    %v949 = vunpack.c.h.b16 %v162
    %v950 = vunpack.c.l.b16 %v163
    %v951 = vunpack.c.h.b16 %v163
    %v952 = vunpack.c.l.b16 %v164
    %v953 = vunpack.c.h.b16 %v164
    %v954 = vunpack.c.l.b16 %v165
    %v955 = vunpack.c.h.b16 %v165
    %v956 = vunpack.c.l.b16 %v166
    %v957 = vunpack.c.h.b16 %v166
    %v958 = vunpack.c.l.b16 %v167
    %v959 = vunpack.c.h.b16 %v167
    %v960 = vunpack.c.l.b16 %v168
    %v961 = vunpack.c.h.b16 %v168
    %v962 = vunpack.c.l.b16 %v169
    %v963 = vunpack.c.h.b16 %v169
    %v964 = vunpack.c.l.b16 %v170
    %v965 = vunpack.c.h.b16 %v170
    %v966 = vunpack.c.l.b16 %v171
    %v967 = vunpack.c.h.b16 %v171
    %v968 = vunpack.c.l.b16 %v172
    %v969 = vunpack.c.h.b16 %v172
    %v970 = vunpack.c.l.b16 %v173
    %v971 = vunpack.c.h.b16 %v173
    %v972 = vunpack.c.l.b16 %v174
    %v973 = vunpack.c.h.b16 %v174
    %v974 = vunpack.c.l.b16 %v175
    %v975 = vunpack.c.h.b16 %v175
    %v976 = vunpack.c.l.b16 %v176
    %v977 = vunpack.c.h.b16 %v176
    %v978 = vunpack.c.l.b16 %v177
    %v979 = vunpack.c.h.b16 %v177
    %v980 = vunpack.c.l.b16 %v178
    %v981 = vunpack.c.h.b16 %v178
    %v982 = vunpack.c.l.b16 %v179
    %v983 = vunpack.c.h.b16 %v179
    %v984 = vunpack.c.l.b16 %v180
    %v985 = vunpack.c.h.b16 %v180
    %v986 = vunpack.c.l.b16 %v181
    %v987 = vunpack.c.h.b16 %v181
    %v988 = vunpack.c.l.b16 %v182
    %v989 = vunpack.c.h.b16 %v182
    %v990 = vunpack.c.l.b16 %v183
    %v991 = vunpack.c.h.b16 %v183
    %v992 = vunpack.c.l.b16 %v184
    %v993 = vunpack.c.h.b16 %v184
    %v994 = vunpack.c.l.b16 %v185
    %v995 = vunpack.c.h.b16 %v185
    %v996 = vunpack.c.l.b16 %v186
    %v997 = vunpack.c.h.b16 %v186
    %v998 = vunpack.c.l.b16 %v187
    %v999 = vunpack.c.h.b16 %v187
    %v1000 = vunpack.c.l.b16 %v188
    %v1001 = vunpack.c.h.b16 %v188
    %v1002 = vunpack.c.l.b16 %v189
    %v1003 = vunpack.c.h.b16 %v189
    %v1004 = vunpack.c.l.b16 %v190
    %v1005 = vunpack.c.h.b16 %v190
    %v1006 = vunpack.c.l.b16 %v191
    %v1007 = vunpack.c.h.b16 %v191
    %v1008 = vunpack.c.l.b16 %v192
    %v1009 = vunpack.c.h.b16 %v192
    %v1010 = vunpack.c.l.b16 %v193
    %v1011 = vunpack.c.h.b16 %v193
    %v1012 = vunpack.c.l.b16 %v194
    %v1013 = vunpack.c.h.b16 %v194
    %v1014 = vunpack.c.l.b16 %v195
    %v1015 = vunpack.c.h.b16 %v195
    %v1016 = vunpack.c.l.b16 %v196
    %v1017 = vunpack.c.h.b16 %v196
    %v1018 = vunpack.c.l.b16 %v197
    %v1019 = vunpack.c.h.b16 %v197
    %v1020 = vunpack.c.l.b16 %v198
    %v1021 = vunpack.c.h.b16 %v198
    %v1022 = vunpack.c.l.b16 %v199
    %v1023 = vunpack.c.h.b16 %v199
    %v1024 = vunpack.c.l.b16 %v200
    %v1025 = vunpack.c.h.b16 %v200
    %v1026 = vunpack.c.l.b16 %v201
    %v1027 = vunpack.c.h.b16 %v201
    %v1028 = vunpack.c.l.b16 %v202
    %v1029 = vunpack.c.h.b16 %v202
    %v1030 = vunpack.c.l.b16 %v203
    %v1031 = vunpack.c.h.b16 %v203
    %v1032 = vunpack.c.l.b16 %v204
    %v1033 = vunpack.c.h.b16 %v204
    %v1034 = vunpack.c.l.b16 %v205
    %v1035 = vunpack.c.h.b16 %v205
    %v1036 = vunpack.c.l.b16 %v206
    %v1037 = vunpack.c.h.b16 %v206
    %v1038 = vunpack.c.l.b16 %v207
    %v1039 = vunpack.c.h.b16 %v207
    %v1040 = vunpack.c.l.b16 %v208
    %v1041 = vunpack.c.h.b16 %v208
    %v1042 = vunpack.c.l.b16 %v209
    %v1043 = vunpack.c.h.b16 %v209
    %v1044 = vunpack.c.l.b16 %v210
    %v1045 = vunpack.c.h.b16 %v210
    %v1046 = vunpack.c.l.b16 %v211
    %v1047 = vunpack.c.h.b16 %v211
    %v1048 = vunpack.c.l.b16 %v212
    %v1049 = vunpack.c.h.b16 %v212
    %v1050 = vunpack.c.l.b16 %v213
    %v1051 = vunpack.c.h.b16 %v213
    %v1052 = vunpack.c.l.b16 %v214
    %v1053 = vunpack.c.h.b16 %v214
    %v1054 = vunpack.c.l.b16 %v215
    %v1055 = vunpack.c.h.b16 %v215
    %v1056 = vunpack.c.l.b16 %v216
    %v1057 = vunpack.c.h.b16 %v216
    %v1058 = vunpack.c.l.b16 %v217
    %v1059 = vunpack.c.h.b16 %v217
    %v1060 = vunpack.c.l.b16 %v218
    %v1061 = vunpack.c.h.b16 %v218
    %v1062 = vunpack.c.l.b16 %v219
    %v1063 = vunpack.c.h.b16 %v219
    %v1064 = vunpack.c.l.b16 %v220
    %v1065 = vunpack.c.h.b16 %v220
    %v1066 = vunpack.c.l.b16 %v221
    %v1067 = vunpack.c.h.b16 %v221
    %v1068 = vunpack.c.l.b16 %v222
    %v1069 = vunpack.c.h.b16 %v222
    %v1070 = vunpack.c.l.b16 %v223
    %v1071 = vunpack.c.h.b16 %v223
    %v1072 = vunpack.c.l.b16 %v224
    %v1073 = vunpack.c.h.b16 %v224
    %v1074 = vunpack.c.l.b16 %v225
    %v1075 = vunpack.c.h.b16 %v225
    %v1076 = vunpack.c.l.b16 %v226
    %v1077 = vunpack.c.h.b16 %v226
    %v1078 = vunpack.c.l.b16 %v227
    %v1079 = vunpack.c.h.b16 %v227
    %v1080 = vunpack.c.l.b16 %v228
    %v1081 = vunpack.c.h.b16 %v228
    %v1082 = vunpack.c.l.b16 %v229
    %v1083 = vunpack.c.h.b16 %v229
    %v1084 = vunpack.c.l.b16 %v230
    %v1085 = vunpack.c.h.b16 %v230
    %v1086 = vunpack.c.l.b16 %v231
    %v1087 = vunpack.c.h.b16 %v231
    %v1088 = vunpack.c.l.b16 %v232
    %v1089 = vunpack.c.h.b16 %v232
    %v1090 = vunpack.c.l.b16 %v233
    %v1091 = vunpack.c.h.b16 %v233
    %v1092 = vunpack.c.l.b16 %v234
    %v1093 = vunpack.c.h.b16 %v234
    %v1094 = vunpack.c.l.b16 %v235
    %v1095 = vunpack.c.h.b16 %v235
    %v1096 = vunpack.c.l.b16 %v236
    %v1097 = vunpack.c.h.b16 %v236
    %v1098 = vunpack.c.l.b16 %v237
    %v1099 = vunpack.c.h.b16 %v237
    %v1100 = vunpack.c.l.b16 %v238
    %v1101 = vunpack.c.h.b16 %v238
    %v1102 = vunpack.c.l.b16 %v239
    %v1103 = vunpack.c.h.b16 %v239
    %v1104 = vunpack.c.l.b16 %v240
    %v1105 = vunpack.c.h.b16 %v240
    %v1106 = vunpack.c.l.b16 %v241
    %v1107 = vunpack.c.h.b16 %v241
    %v1108 = vunpack.c.l.b16 %v242
    %v1109 = vunpack.c.h.b16 %v242
    %v1110 = vunpack.c.l.b16 %v243
    %v1111 = vunpack.c.h.b16 %v243
    %v1112 = vunpack.c.l.b16 %v244
    %v1113 = vunpack.c.h.b16 %v244
    %v1114 = vunpack.c.l.b16 %v245
    %v1115 = vunpack.c.h.b16 %v245
    %v1116 = vunpack.c.l.b16 %v246
    %v1117 = vunpack.c.h.b16 %v246
    %v1118 = vunpack.c.l.b16 %v247
    %v1119 = vunpack.c.h.b16 %v247
    %v1120 = vunpack.c.l.b16 %v248
    %v1121 = vunpack.c.h.b16 %v248
    %v1122 = vunpack.c.l.b16 %v249
    %v1123 = vunpack.c.h.b16 %v249
    %v1124 = vunpack.c.l.b16 %v250
    %v1125 = vunpack.c.h.b16 %v250
    %v1126 = vunpack.c.l.b16 %v251
    %v1127 = vunpack.c.h.b16 %v251
    %v1128 = vunpack.c.l.b16 %v252
    %v1129 = vunpack.c.h.b16 %v252
    %v1130 = vunpack.c.l.b16 %v253
    %v1131 = vunpack.c.h.b16 %v253
    %v1132 = vunpack.c.l.b16 %v254
    %v1133 = vunpack.c.h.b16 %v254
    %v1134 = vunpack.c.l.b16 %v255
    %v1135 = vunpack.c.h.b16 %v255
    %v1136 = vunpack.c.l.b16 %v256
    %v1137 = vunpack.c.h.b16 %v256
    %v1138 = vunpack.c.l.b16 %v257
    %v1139 = vunpack.c.h.b16 %v257
    %v1140 = vunpack.c.l.b16 %v258
    %v1141 = vunpack.c.h.b16 %v258
    %v1142 = vunpack.c.l.b16 %v259
    %v1143 = vunpack.c.h.b16 %v259
    %v1144 = vunpack.c.l.b16 %v260
    %v1145 = vunpack.c.h.b16 %v260
    %v1146 = vunpack.c.l.b16 %v261
    %v1147 = vunpack.c.h.b16 %v261
    %v1148 = vunpack.c.l.b16 %v262
    %v1149 = vunpack.c.h.b16 %v262
    %v1150 = vunpack.c.l.b16 %v263
    %v1151 = vunpack.c.h.b16 %v263
    %v1152 = vunpack.c.l.b16 %v264
    %v1153 = vunpack.c.h.b16 %v264
    %v1154 = vunpack.c.l.b16 %v265
    %v1155 = vunpack.c.h.b16 %v265
    %v1156 = vunpack.c.l.b16 %v266
    %v1157 = vunpack.c.h.b16 %v266
    %v1158 = vunpack.c.l.b16 %v267
    %v1159 = vunpack.c.h.b16 %v267
    %v1160 = vunpack.c.l.b16 %v268
    %v1161 = vunpack.c.h.b16 %v268
    %v1162 = vunpack.c.l.b16 %v269
    %v1163 = vunpack.c.h.b16 %v269
    %v1164 = vunpack.c.l.b16 %v270
    %v1165 = vunpack.c.h.b16 %v270
    %v1166 = vunpack.c.l.b16 %v271
    %v1167 = vunpack.c.h.b16 %v271
    %v1168 = vunpack.c.l.b16 %v272
    %v1169 = vunpack.c.h.b16 %v272
    %v1170 = vunpack.c.l.b16 %v273
    %v1171 = vunpack.c.h.b16 %v273
    %v1172 = vunpack.c.l.b16 %v274
    %v1173 = vunpack.c.h.b16 %v274
    %v1174 = vunpack.c.l.b16 %v275
    %v1175 = vunpack.c.h.b16 %v275
    %v1176 = vunpack.c.l.b16 %v276
    %v1177 = vunpack.c.h.b16 %v276
    %v1178 = vunpack.c.l.b16 %v277
    %v1179 = vunpack.c.h.b16 %v277
    %v1180 = vunpack.c.l.b16 %v278
    %v1181 = vunpack.c.h.b16 %v278
    %v1182 = vunpack.c.l.b16 %v279
    %v1183 = vunpack.c.h.b16 %v279
    %v1184 = vunpack.c.l.b16 %v280
    %v1185 = vunpack.c.h.b16 %v280
    %v1186 = vunpack.c.l.b16 %v281
    %v1187 = vunpack.c.h.b16 %v281
    %v1188 = vunpack.c.l.b16 %v282
    %v1189 = vunpack.c.h.b16 %v282
    %v1190 = vunpack.c.l.b16 %v283
    %v1191 = vunpack.c.h.b16 %v283
    %v1192 = vunpack.c.l.b16 %v284
    %v1193 = vunpack.c.h.b16 %v284
    %v1194 = vunpack.c.l.b16 %v285
    %v1195 = vunpack.c.h.b16 %v285
    %v1196 = vunpack.c.l.b16 %v286
    %v1197 = vunpack.c.h.b16 %v286
    %v1198 = vunpack.c.l.b16 %v287
    %v1199 = vunpack.c.h.b16 %v287
    %v1200 = vunpack.c.l.b16 %v288
    %v1201 = vunpack.c.h.b16 %v288
    %v1202 = vunpack.c.l.b16 %v289
    %v1203 = vunpack.c.h.b16 %v289
    %v1204 = vunpack.c.l.b16 %v290
    %v1205 = vunpack.c.h.b16 %v290
    %v1206 = vunpack.c.l.b16 %v291
    %v1207 = vunpack.c.h.b16 %v291
    %v1208 = vunpack.c.l.b16 %v292
    %v1209 = vunpack.c.h.b16 %v292
    %v1210 = vunpack.c.l.b16 %v293
    %v1211 = vunpack.c.h.b16 %v293
    %v1212 = vunpack.c.l.b16 %v294
    %v1213 = vunpack.c.h.b16 %v294
    %v1214 = vunpack.c.l.b16 %v295
    %v1215 = vunpack.c.h.b16 %v295
    %v1216 = vunpack.c.l.b16 %v296
    %v1217 = vunpack.c.h.b16 %v296
    %v1218 = vunpack.c.l.b16 %v297
    %v1219 = vunpack.c.h.b16 %v297
    %v1220 = vunpack.c.l.b16 %v298
    %v1221 = vunpack.c.h.b16 %v298
    %v1222 = vunpack.c.l.b16 %v299
    %v1223 = vunpack.c.h.b16 %v299
    %v1224 = vunpack.c.l.b16 %v300
    %v1225 = vunpack.c.h.b16 %v300
    %v1226 = vunpack.c.l.b16 %v301
    %v1227 = vunpack.c.h.b16 %v301
    %v1228 = vunpack.c.l.b16 %v302
    %v1229 = vunpack.c.h.b16 %v302
    %v1230 = vunpack.c.l.b16 %v303
    %v1231 = vunpack.c.h.b16 %v303
    %v1232 = vunpack.c.l.b16 %v304
    %v1233 = vunpack.c.h.b16 %v304
    %v1234 = vunpack.c.l.b16 %v305
    %v1235 = vunpack.c.h.b16 %v305
    %v1236 = vunpack.c.l.b16 %v306
    %v1237 = vunpack.c.h.b16 %v306
    %v1238 = vunpack.c.l.b16 %v307
    %v1239 = vunpack.c.h.b16 %v307
    %v1240 = vunpack.c.l.b16 %v308
    %v1241 = vunpack.c.h.b16 %v308
    %v1242 = vunpack.c.l.b16 %v309
    %v1243 = vunpack.c.h.b16 %v309
    %v1244 = vunpack.c.l.b16 %v310
    %v1245 = vunpack.c.h.b16 %v310
    %v1246 = vunpack.c.l.b16 %v311
    %v1247 = vunpack.c.h.b16 %v311
    %v1248 = vunpack.c.l.b16 %v312
    %v1249 = vunpack.c.h.b16 %v312
    %v1250 = vunpack.c.l.b16 %v313
    %v1251 = vunpack.c.h.b16 %v313
    %v1252 = vunpack.c.l.b16 %v314
    %v1253 = vunpack.c.h.b16 %v314
    %v1254 = vunpack.c.l.b16 %v315
    %v1255 = vunpack.c.h.b16 %v315
    %v1256 = vunpack.c.l.b16 %v316
    %v1257 = vunpack.c.h.b16 %v316
    %v1258 = vunpack.c.l.b16 %v317
    %v1259 = vunpack.c.h.b16 %v317
    %v1260 = vunpack.c.l.b16 %v318
    %v1261 = vunpack.c.h.b16 %v318
    %v1262 = vunpack.c.l.b16 %v319
    %v1263 = vunpack.c.h.b16 %v319
    %v1264 = vunpack.c.l.b16 %v320
    %v1265 = vunpack.c.h.b16 %v320
    %v1266 = vunpack.c.l.b16 %v321
    %v1267 = vunpack.c.h.b16 %v321
    %v1268 = vunpack.c.l.b16 %v322
    %v1269 = vunpack.c.h.b16 %v322
    %v1270 = vunpack.c.l.b16 %v323
    %v1271 = vunpack.c.h.b16 %v323
    %v1272 = vunpack.c.l.b16 %v324
    %v1273 = vunpack.c.h.b16 %v324
    %v1274 = vunpack.c.l.b16 %v325
    %v1275 = vunpack.c.h.b16 %v325
    %v1276 = vunpack.c.l.b16 %v326
    %v1277 = vunpack.c.h.b16 %v326
    %v1278 = vunpack.c.l.b16 %v327
    %v1279 = vunpack.c.h.b16 %v327
    %v1280 = vunpack.c.l.b16 %v328
    %v1281 = vunpack.c.h.b16 %v328
    %v1282 = vunpack.c.l.b16 %v329
    %v1283 = vunpack.c.h.b16 %v329
    %v1284 = vunpack.c.l.b16 %v330
    %v1285 = vunpack.c.h.b16 %v330
    %v1286 = vunpack.c.l.b16 %v331
    %v1287 = vunpack.c.h.b16 %v331
    %v1288 = vunpack.c.l.b16 %v332
    %v1289 = vunpack.c.h.b16 %v332
    %v1290 = vunpack.c.l.b16 %v333
    %v1291 = vunpack.c.h.b16 %v333
    %v1292 = vunpack.c.l.b16 %v334
    %v1293 = vunpack.c.h.b16 %v334
    %v1294 = vunpack.c.l.b16 %v335
    %v1295 = vunpack.c.h.b16 %v335
    %v1296 = vunpack.c.l.b16 %v336
    %v1297 = vunpack.c.h.b16 %v336
    %v1298 = vunpack.c.l.b16 %v337
    %v1299 = vunpack.c.h.b16 %v337
    %v1300 = vunpack.c.l.b16 %v338
    %v1301 = vunpack.c.h.b16 %v338
    %v1302 = vunpack.c.l.b16 %v339
    %v1303 = vunpack.c.h.b16 %v339
    %v1304 = vunpack.c.l.b16 %v340
    %v1305 = vunpack.c.h.b16 %v340
    %v1306 = vunpack.c.l.b16 %v341
    %v1307 = vunpack.c.h.b16 %v341
    %v1308 = vunpack.c.l.b16 %v342
    %v1309 = vunpack.c.h.b16 %v342
    %v1310 = vunpack.c.l.b16 %v343
    %v1311 = vunpack.c.h.b16 %v343
    %v1312 = vunpack.c.l.b16 %v344
    %v1313 = vunpack.c.h.b16 %v344
    %v1314 = vunpack.c.l.b16 %v345
    %v1315 = vunpack.c.h.b16 %v345
    %v1316 = vunpack.c.l.b16 %v346
    %v1317 = vunpack.c.h.b16 %v346
    %v1318 = vunpack.c.l.b16 %v347
    %v1319 = vunpack.c.h.b16 %v347
    %v1320 = vunpack.c.l.b16 %v348
    %v1321 = vunpack.c.h.b16 %v348
    %v1322 = vunpack.c.l.b16 %v349
    %v1323 = vunpack.c.h.b16 %v349
    %v1324 = vunpack.c.l.b16 %v350
    %v1325 = vunpack.c.h.b16 %v350
    %v1326 = vunpack.c.l.b16 %v351
    %v1327 = vunpack.c.h.b16 %v351
    %v1328 = vunpack.c.l.b16 %v352
    %v1329 = vunpack.c.h.b16 %v352
    %v1330 = vunpack.c.l.b16 %v353
    %v1331 = vunpack.c.h.b16 %v353
    %v1332 = vunpack.c.l.b16 %v354
    %v1333 = vunpack.c.h.b16 %v354
    %v1334 = vunpack.c.l.b16 %v355
    %v1335 = vunpack.c.h.b16 %v355
    %v1336 = vunpack.c.l.b16 %v356
    %v1337 = vunpack.c.h.b16 %v356
    %v1338 = vunpack.c.l.b16 %v357
    %v1339 = vunpack.c.h.b16 %v357
    %v1340 = vpack.c.b16 %v896, %v892
    %v1341 = vpack.c.b16 %v897, %v893
    %v1342 = vpack.c.b16 %v898, %v894
    %v1343 = vpack.c.b16 %v899, %v895
    %v1344 = vpack.c.b16 %v904, %v900
    %v1345 = vpack.c.b16 %v905, %v901
    %v1346 = vpack.c.b16 %v906, %v902
    %v1347 = vpack.c.b16 %v907, %v903
    %v1348 = vpack.c.b16 %v912, %v908
    %v1349 = vpack.c.b16 %v913, %v909
    %v1350 = vpack.c.b16 %v914, %v910
    %v1351 = vpack.c.b16 %v915, %v911
    %v1352 = vpack.c.b16 %v920, %v916
    %v1353 = vpack.c.b16 %v921, %v917
    %v1354 = vpack.c.b16 %v922, %v918
    %v1355 = vpack.c.b16 %v923, %v919
    %v1356 = vpack.c.b16 %v928, %v924
    %v1357 = vpack.c.b16 %v929, %v925
    %v1358 = vpack.c.b16 %v930, %v926
    %v1359 = vpack.c.b16 %v931, %v927
    %v1360 = vpack.c.b16 %v936, %v932
    %v1361 = vpack.c.b16 %v937, %v933
    %v1362 = vpack.c.b16 %v938, %v934
    %v1363 = vpack.c.b16 %v939, %v935
    %v1364 = vpack.c.b16 %v944, %v940
    %v1365 = vpack.c.b16 %v945, %v941
    %v1366 = vpack.c.b16 %v946, %v942
    %v1367 = vpack.c.b16 %v947, %v943
    %v1368 = vpack.c.b16 %v952, %v948
    %v1369 = vpack.c.b16 %v953, %v949
    %v1370 = vpack.c.b16 %v954, %v950
    %v1371 = vpack.c.b16 %v955, %v951
    %v1372 = vpack.c.b16 %v960, %v956
    %v1373 = vpack.c.b16 %v961, %v957
    %v1374 = vpack.c.b16 %v962, %v958
    %v1375 = vpack.c.b16 %v963, %v959
    %v1376 = vpack.c.b16 %v968, %v964
    %v1377 = vpack.c.b16 %v969, %v965
    %v1378 = vpack.c.b16 %v970, %v966
    %v1379 = vpack.c.b16 %v971, %v967
    %v1380 = vpack.c.b16 %v976, %v972
    %v1381 = vpack.c.b16 %v977, %v973
    %v1382 = vpack.c.b16 %v978, %v974
    %v1383 = vpack.c.b16 %v979, %v975
    %v1384 = vpack.c.b16 %v984, %v980
    %v1385 = vpack.c.b16 %v985, %v981
    %v1386 = vpack.c.b16 %v986, %v982
    %v1387 = vpack.c.b16 %v987, %v983
    %v1388 = vpack.c.b16 %v992, %v988
    %v1389 = vpack.c.b16 %v993, %v989
    %v1390 = vpack.c.b16 %v994, %v990
    %v1391 = vpack.c.b16 %v995, %v991
    %v1392 = vpack.c.b16 %v1000, %v996
    %v1393 = vpack.c.b16 %v1001, %v997
    %v1394 = vpack.c.b16 %v1002, %v998
    %v1395 = vpack.c.b16 %v1003, %v999
    %v1396 = vpack.c.b16 %v1008, %v1004
    %v1397 = vpack.c.b16 %v1009, %v1005
    %v1398 = vpack.c.b16 %v1010, %v1006
    %v1399 = vpack.c.b16 %v1011, %v1007
    %v1400 = vpack.c.b16 %v1016, %v1012
    %v1401 = vpack.c.b16 %v1017, %v1013
    %v1402 = vpack.c.b16 %v1018, %v1014
    %v1403 = vpack.c.b16 %v1019, %v1015
    %v1404 = vpack.c.b16 %v1024, %v1020
    %v1405 = vpack.c.b16 %v1025, %v1021
    %v1406 = vpack.c.b16 %v1026, %v1022
    %v1407 = vpack.c.b16 %v1027, %v1023
    %v1408 = vpack.c.b16 %v1032, %v1028
    %v1409 = vpack.c.b16 %v1033, %v1029
    %v1410 = vpack.c.b16 %v1034, %v1030
    %v1411 = vpack.c.b16 %v1035, %v1031
    %v1412 = vpack.c.b16 %v1040, %v1036
    %v1413 = vpack.c.b16 %v1041, %v1037
    %v1414 = vpack.c.b16 %v1042, %v1038
    %v1415 = vpack.c.b16 %v1043, %v1039
    %v1416 = vpack.c.b16 %v1048, %v1044
    %v1417 = vpack.c.b16 %v1049, %v1045
    %v1418 = vpack.c.b16 %v1050, %v1046
    %v1419 = vpack.c.b16 %v1051, %v1047
    %v1420 = vpack.c.b16 %v1056, %v1052
    %v1421 = vpack.c.b16 %v1057, %v1053
    %v1422 = vpack.c.b16 %v1058, %v1054
    %v1423 = vpack.c.b16 %v1059, %v1055
    %v1424 = vpack.c.b16 %v1064, %v1060
    %v1425 = vpack.c.b16 %v1065, %v1061
    %v1426 = vpack.c.b16 %v1066, %v1062
    %v1427 = vpack.c.b16 %v1067, %v1063
    %v1428 = vpack.c.b16 %v1072, %v1068
    %v1429 = vpack.c.b16 %v1073, %v1069
    %v1430 = vpack.c.b16 %v1074, %v1070
    %v1431 = vpack.c.b16 %v1075, %v1071
    %v1432 = vpack.c.b16 %v1080, %v1076
    %v1433 = vpack.c.b16 %v1081, %v1077
    %v1434 = vpack.c.b16 %v1082, %v1078
    %v1435 = vpack.c.b16 %v1083, %v1079
    %v1436 = vpack.c.b16 %v1088, %v1084
    %v1437 = vpack.c.b16 %v1089, %v1085
    %v1438 = vpack.c.b16 %v1090, %v1086
    %v1439 = vpack.c.b16 %v1091, %v1087
    %v1440 = vpack.c.b16 %v1096, %v1092
    %v1441 = vpack.c.b16 %v1097, %v1093
    %v1442 = vpack.c.b16 %v1098, %v1094
    %v1443 = vpack.c.b16 %v1099, %v1095
    %v1444 = vpack.c.b16 %v1104, %v1100
    %v1445 = vpack.c.b16 %v1105, %v1101
    %v1446 = vpack.c.b16 %v1106, %v1102
    %v1447 = vpack.c.b16 %v1107, %v1103
    %v1448 = vpack.c.b16 %v1112, %v1108
    %v1449 = vpack.c.b16 %v1113, %v1109
    %v1450 = vpack.c.b16 %v1114, %v1110
    %v1451 = vpack.c.b16 %v1115, %v1111
    %v1452 = vpack.c.b16 %v1120, %v1116
    %v1453 = vpack.c.b16 %v1121, %v1117
    %v1454 = vpack.c.b16 %v1122, %v1118
    %v1455 = vpack.c.b16 %v1123, %v1119
    %v1456 = vpack.c.b16 %v1128, %v1124
    %v1457 = vpack.c.b16 %v1129, %v1125
    %v1458 = vpack.c.b16 %v1130, %v1126
    %v1459 = vpack.c.b16 %v1131, %v1127
    %v1460 = vpack.c.b16 %v1136, %v1132
    %v1461 = vpack.c.b16 %v1137, %v1133
    %v1462 = vpack.c.b16 %v1138, %v1134
    %v1463 = vpack.c.b16 %v1139, %v1135
    %v1464 = vpack.c.b16 %v1144, %v1140
    %v1465 = vpack.c.b16 %v1145, %v1141
    %v1466 = vpack.c.b16 %v1146, %v1142
    %v1467 = vpack.c.b16 %v1147, %v1143
    %v1468 = vpack.c.b16 %v1152, %v1148
    %v1469 = vpack.c.b16 %v1153, %v1149
    %v1470 = vpack.c.b16 %v1154, %v1150
    %v1471 = vpack.c.b16 %v1155, %v1151
    %v1472 = vpack.c.b16 %v1160, %v1156
    %v1473 = vpack.c.b16 %v1161, %v1157
    %v1474 = vpack.c.b16 %v1162, %v1158
    %v1475 = vpack.c.b16 %v1163, %v1159
    %v1476 = vpack.c.b16 %v1168, %v1164
    %v1477 = vpack.c.b16 %v1169, %v1165
    %v1478 = vpack.c.b16 %v1170, %v1166
    %v1479 = vpack.c.b16 %v1171, %v1167
    %v1480 = vpack.c.b16 %v1176, %v1172
    %v1481 = vpack.c.b16 %v1177, %v1173
    %v1482 = vpack.c.b16 %v1178, %v1174
    %v1483 = vpack.c.b16 %v1179, %v1175
    %v1484 = vpack.c.b16 %v1184, %v1180
    %v1485 = vpack.c.b16 %v1185, %v1181
    %v1486 = vpack.c.b16 %v1186, %v1182
    %v1487 = vpack.c.b16 %v1187, %v1183
    %v1488 = vpack.c.b16 %v1192, %v1188
    %v1489 = vpack.c.b16 %v1193, %v1189
    %v1490 = vpack.c.b16 %v1194, %v1190
    %v1491 = vpack.c.b16 %v1195, %v1191
    %v1492 = vpack.c.b16 %v1200, %v1196
    %v1493 = vpack.c.b16 %v1201, %v1197
    %v1494 = vpack.c.b16 %v1202, %v1198
    %v1495 = vpack.c.b16 %v1203, %v1199
    %v1496 = vpack.c.b16 %v1208, %v1204
    %v1497 = vpack.c.b16 %v1209, %v1205
    %v1498 = vpack.c.b16 %v1210, %v1206
    %v1499 = vpack.c.b16 %v1211, %v1207
    %v1500 = vpack.c.b16 %v1216, %v1212
    %v1501 = vpack.c.b16 %v1217, %v1213
    %v1502 = vpack.c.b16 %v1218, %v1214
    %v1503 = vpack.c.b16 %v1219, %v1215
    %v1504 = vpack.c.b16 %v1224, %v1220
    %v1505 = vpack.c.b16 %v1225, %v1221
    %v1506 = vpack.c.b16 %v1226, %v1222
    %v1507 = vpack.c.b16 %v1227, %v1223
    %v1508 = vpack.c.b16 %v1232, %v1228
    %v1509 = vpack.c.b16 %v1233, %v1229
    %v1510 = vpack.c.b16 %v1234, %v1230
    %v1511 = vpack.c.b16 %v1235, %v1231
    %v1512 = vpack.c.b16 %v1240, %v1236
    %v1513 = vpack.c.b16 %v1241, %v1237
    %v1514 = vpack.c.b16 %v1242, %v1238
    %v1515 = vpack.c.b16 %v1243, %v1239
    %v1516 = vpack.c.b16 %v1248, %v1244
    %v1517 = vpack.c.b16 %v1249, %v1245
    %v1518 = vpack.c.b16 %v1250, %v1246
    %v1519 = vpack.c.b16 %v1251, %v1247
    %v1520 = vpack.c.b16 %v1256, %v1252
    %v1521 = vpack.c.b16 %v1257, %v1253
    %v1522 = vpack.c.b16 %v1258, %v1254
    %v1523 = vpack.c.b16 %v1259, %v1255
    %v1524 = vpack.c.b16 %v1264, %v1260
    %v1525 = vpack.c.b16 %v1265, %v1261
    %v1526 = vpack.c.b16 %v1266, %v1262
    %v1527 = vpack.c.b16 %v1267, %v1263
    %v1528 = vpack.c.b16 %v1272, %v1268
    %v1529 = vpack.c.b16 %v1273, %v1269
    %v1530 = vpack.c.b16 %v1274, %v1270
    %v1531 = vpack.c.b16 %v1275, %v1271
    %v1532 = vpack.c.b16 %v1280, %v1276
    %v1533 = vpack.c.b16 %v1281, %v1277
    %v1534 = vpack.c.b16 %v1282, %v1278
    %v1535 = vpack.c.b16 %v1283, %v1279
    %v1536 = vpack.c.b16 %v1288, %v1284
    %v1537 = vpack.c.b16 %v1289, %v1285
    %v1538 = vpack.c.b16 %v1290, %v1286
    %v1539 = vpack.c.b16 %v1291, %v1287
    %v1540 = vpack.c.b16 %v1296, %v1292
    %v1541 = vpack.c.b16 %v1297, %v1293
    %v1542 = vpack.c.b16 %v1298, %v1294
    %v1543 = vpack.c.b16 %v1299, %v1295
    %v1544 = vpack.c.b16 %v1304, %v1300
    %v1545 = vpack.c.b16 %v1305, %v1301
    %v1546 = vpack.c.b16 %v1306, %v1302
    %v1547 = vpack.c.b16 %v1307, %v1303
    %v1548 = vpack.c.b16 %v1312, %v1308
    %v1549 = vpack.c.b16 %v1313, %v1309
    %v1550 = vpack.c.b16 %v1314, %v1310
    %v1551 = vpack.c.b16 %v1315, %v1311
    %v1552 = vpack.c.b16 %v1320, %v1316
    %v1553 = vpack.c.b16 %v1321, %v1317
    %v1554 = vpack.c.b16 %v1322, %v1318
    %v1555 = vpack.c.b16 %v1323, %v1319
    %v1556 = vpack.c.b16 %v1328, %v1324
    %v1557 = vpack.c.b16 %v1329, %v1325
    %v1558 = vpack.c.b16 %v1330, %v1326
    %v1559 = vpack.c.b16 %v1331, %v1327
    %v1560 = vpack.c.b16 %v1336, %v1332
    %v1561 = vpack.c.b16 %v1337, %v1333
    %v1562 = vpack.c.b16 %v1338, %v1334
    %v1563 = vpack.c.b16 %v1339, %v1335
    %1788 = vmatprep.subr.bf16.mxu0 %v1341
    %1789 = vmatpush1.bf16.msra.mxu0 %v1340
    %1790 = vmatprep.subr.bf16.mxu0 %v1345
    %1791 = vmatpush1.bf16.msra.mxu0 %v1344
    %1792 = vmatprep.subr.bf16.mxu0 %v1349
    %1793 = vmatpush1.bf16.msra.mxu0 %v1348
    %1794 = vmatprep.subr.bf16.mxu0 %v1353
    %1795 = vmatpush1.bf16.msra.mxu0 %v1352
    %1796 = vmatprep.subr.bf16.mxu0 %v1357
    %1797 = vmatpush1.bf16.msra.mxu0 %v1356
    %1798 = vmatprep.subr.bf16.mxu0 %v1361
    %1799 = vmatpush1.bf16.msra.mxu0 %v1360
    %1800 = vmatprep.subr.bf16.mxu0 %v1365
    %1801 = vmatpush1.bf16.msra.mxu0 %v1364
    %1802 = vmatprep.subr.bf16.mxu0 %v1369
    %1803 = vmatpush1.bf16.msra.mxu0 %v1368
    %1804 = vmatprep.subr.bf16.mxu0 %v1373
    %1805 = vmatpush1.bf16.msra.mxu0 %v1372
    %1806 = vmatprep.subr.bf16.mxu0 %v1377
    %1807 = vmatpush1.bf16.msra.mxu0 %v1376
    %1808 = vmatprep.subr.bf16.mxu0 %v1381
    %1809 = vmatpush1.bf16.msra.mxu0 %v1380
    %1810 = vmatprep.subr.bf16.mxu0 %v1385
    %1811 = vmatpush1.bf16.msra.mxu0 %v1384
    %1812 = vmatprep.subr.bf16.mxu0 %v1389
    %1813 = vmatpush1.bf16.msra.mxu0 %v1388
    %1814 = vmatprep.subr.bf16.mxu0 %v1393
    %1815 = vmatpush1.bf16.msra.mxu0 %v1392
    %1816 = vmatprep.subr.bf16.mxu0 %v1397
    %1817 = vmatpush1.bf16.msra.mxu0 %v1396
    %1818 = vmatprep.subr.bf16.mxu0 %v1401
    %1819 = vmatpush1.bf16.msra.mxu0 %v1400
    %1820 = vmatprep.mubr.bf16.mxu0 %v557
    %1821 = vmatmul.mubr.bf16.gmra.mrb[0].mxu0 %v556
    %v1822 = vpop.f32.mrb[0].mxu0
    %v1823 = vadd.f32 %v363, %v1822
    %v1824 = vpop.f32.mrb[0].mxu0
    %v1825 = vadd.f32 %v367, %v1824
    %v1826 = vpop.f32.mrb[0].mxu0
    %v1827 = vadd.f32 %v363, %v1826
    %v1828 = vpop.f32.mrb[0].mxu0
    %v1829 = vadd.f32 %v367, %v1828
    %1830 = vmatprep.mubr.bf16.mxu0 %v564
    %1831 = vmatmul.mubr.bf16.gmra.mrb[0].mxu0 %v563
    %v1832 = vpop.f32.mrb[0].mxu0
    %v1833 = vadd.f32 %v363, %v1832
    %v1834 = vpop.f32.mrb[0].mxu0
    %v1835 = vadd.f32 %v367, %v1834
    %v1836 = vpop.f32.mrb[0].mxu0
    %v1837 = vadd.f32 %v363, %v1836
    %v1838 = vpop.f32.mrb[0].mxu0
    %v1839 = vadd.f32 %v367, %v1838
    %1840 = vmatprep.mubr.bf16.mxu0 %v571
    %1841 = vmatmul.mubr.bf16.gmra.mrb[0].mxu0 %v570
    %v1842 = vpop.f32.mrb[0].mxu0
    %v1843 = vadd.f32 %v363, %v1842
    %v1844 = vpop.f32.mrb[0].mxu0
    %v1845 = vadd.f32 %v367, %v1844
    %v1846 = vpop.f32.mrb[0].mxu0
    %v1847 = vadd.f32 %v363, %v1846
    %v1848 = vpop.f32.mrb[0].mxu0
    %v1849 = vadd.f32 %v367, %v1848
    %1850 = vmatprep.mubr.bf16.mxu0 %v578
    %1851 = vmatmul.mubr.bf16.gmra.mrb[0].mxu0 %v577
    %v1852 = vpop.f32.mrb[0].mxu0
    %v1853 = vadd.f32 %v363, %v1852
    %v1854 = vpop.f32.mrb[0].mxu0
    %v1855 = vadd.f32 %v367, %v1854
    %v1856 = vpop.f32.mrb[0].mxu0
    %v1857 = vadd.f32 %v363, %v1856
    %v1858 = vpop.f32.mrb[0].mxu0
    %v1859 = vadd.f32 %v367, %v1858
    %1860 = vmatprep.mubr.bf16.mxu0 %v585
    %1861 = vmatmul.mubr.bf16.gmra.mrb[0].mxu0 %v584
    %v1862 = vpop.f32.mrb[0].mxu0
    %v1863 = vadd.f32 %v363, %v1862
    %v1864 = vpop.f32.mrb[0].mxu0
    %v1865 = vadd.f32 %v367, %v1864
    %v1866 = vpop.f32.mrb[0].mxu0
    %v1867 = vadd.f32 %v363, %v1866
    %v1868 = vpop.f32.mrb[0].mxu0
    %v1869 = vadd.f32 %v367, %v1868
    %1870 = vmatprep.mubr.bf16.mxu0 %v592
    %1871 = vmatmul.mubr.bf16.gmra.mrb[0].mxu0 %v591
    %v1872 = vpop.f32.mrb[0].mxu0
    %v1873 = vadd.f32 %v363, %v1872
    %v1874 = vpop.f32.mrb[0].mxu0
    %v1875 = vadd.f32 %v367, %v1874
    %v1876 = vpop.f32.mrb[0].mxu0
    %v1877 = vadd.f32 %v363, %v1876
    %v1878 = vpop.f32.mrb[0].mxu0
    %v1879 = vadd.f32 %v367, %v1878
    %1880 = vmatprep.mubr.bf16.mxu0 %v599
    %1881 = vmatmul.mubr.bf16.gmra.mrb[0].mxu0 %v598
    %v1882 = vpop.f32.mrb[0].mxu0
    %v1883 = vadd.f32 %v363, %v1882
    %v1884 = vpop.f32.mrb[0].mxu0
    %v1885 = vadd.f32 %v367, %v1884
    %v1886 = vpop.f32.mrb[0].mxu0
    %v1887 = vadd.f32 %v363, %v1886
    %v1888 = vpop.f32.mrb[0].mxu0
    %v1889 = vadd.f32 %v367, %v1888
    %1890 = vmatprep.mubr.bf16.mxu0 %v606
    %1891 = vmatmul.mubr.bf16.gmra.mrb[0].mxu0 %v605
    %v1892 = vpop.f32.mrb[0].mxu0
    %v1893 = vadd.f32 %v363, %v1892
    %v1894 = vpop.f32.mrb[0].mxu0
    %v1895 = vadd.f32 %v367, %v1894
    %v1896 = vpop.f32.mrb[0].mxu0
    %v1897 = vadd.f32 %v363, %v1896
    %v1898 = vpop.f32.mrb[0].mxu0
    %v1899 = vadd.f32 %v367, %v1898
    %1900 = vdwg.mxu0
    %1901 = vmatprep.subr.bf16.mxu0 %v1405
    %1902 = vmatpush1.bf16.msra.mxu0 %v1404
    %1903 = vmatprep.subr.bf16.mxu0 %v1409
    %1904 = vmatpush1.bf16.msra.mxu0 %v1408
    %1905 = vmatprep.subr.bf16.mxu0 %v1413
    %1906 = vmatpush1.bf16.msra.mxu0 %v1412
    %1907 = vmatprep.subr.bf16.mxu0 %v1417
    %1908 = vmatpush1.bf16.msra.mxu0 %v1416
    %1909 = vmatprep.subr.bf16.mxu0 %v1421
    %1910 = vmatpush1.bf16.msra.mxu0 %v1420
    %1911 = vmatprep.subr.bf16.mxu0 %v1425
    %1912 = vmatpush1.bf16.msra.mxu0 %v1424
    %1913 = vmatprep.subr.bf16.mxu0 %v1429
    %1914 = vmatpush1.bf16.msra.mxu0 %v1428
    %1915 = vmatprep.subr.bf16.mxu0 %v1433
    %1916 = vmatpush1.bf16.msra.mxu0 %v1432
    %1917 = vmatprep.subr.bf16.mxu0 %v1437
    %1918 = vmatpush1.bf16.msra.mxu0 %v1436
    %1919 = vmatprep.subr.bf16.mxu0 %v1441
    %1920 = vmatpush1.bf16.msra.mxu0 %v1440
    %1921 = vmatprep.subr.bf16.mxu0 %v1445
    %1922 = vmatpush1.bf16.msra.mxu0 %v1444
    %1923 = vmatprep.subr.bf16.mxu0 %v1449
    %1924 = vmatpush1.bf16.msra.mxu0 %v1448
    %1925 = vmatprep.subr.bf16.mxu0 %v1453
    %1926 = vmatpush1.bf16.msra.mxu0 %v1452
    %1927 = vmatprep.subr.bf16.mxu0 %v1457
    %1928 = vmatpush1.bf16.msra.mxu0 %v1456
    %1929 = vmatprep.subr.bf16.mxu0 %v1461
    %1930 = vmatpush1.bf16.msra.mxu0 %v1460
    %1931 = vmatprep.subr.bf16.mxu0 %v1465
    %1932 = vmatpush1.bf16.msra.mxu0 %v1464
    %1933 = vmatprep.mubr.bf16.mxu0 %v559
    %1934 = vmatmul.mubr.bf16.gmra.mrb[0].mxu0 %v558
    %v1935 = vpop.f32.mrb[0].mxu0
    %v1936 = vadd.f32 %v1823, %v1935
    %v1937 = vpop.f32.mrb[0].mxu0
    %v1938 = vadd.f32 %v1825, %v1937
    %v1939 = vpop.f32.mrb[0].mxu0
    %v1940 = vadd.f32 %v1827, %v1939
    %v1941 = vpop.f32.mrb[0].mxu0
    %v1942 = vadd.f32 %v1829, %v1941
    %1943 = vmatprep.mubr.bf16.mxu0 %v566
    %1944 = vmatmul.mubr.bf16.gmra.mrb[0].mxu0 %v565
    %v1945 = vpop.f32.mrb[0].mxu0
    %v1946 = vadd.f32 %v1833, %v1945
    %v1947 = vpop.f32.mrb[0].mxu0
    %v1948 = vadd.f32 %v1835, %v1947
    %v1949 = vpop.f32.mrb[0].mxu0
    %v1950 = vadd.f32 %v1837, %v1949
    %v1951 = vpop.f32.mrb[0].mxu0
    %v1952 = vadd.f32 %v1839, %v1951
    %1953 = vmatprep.mubr.bf16.mxu0 %v573
    %1954 = vmatmul.mubr.bf16.gmra.mrb[0].mxu0 %v572
    %v1955 = vpop.f32.mrb[0].mxu0
    %v1956 = vadd.f32 %v1843, %v1955
    %v1957 = vpop.f32.mrb[0].mxu0
    %v1958 = vadd.f32 %v1845, %v1957
    %v1959 = vpop.f32.mrb[0].mxu0
    %v1960 = vadd.f32 %v1847, %v1959
    %v1961 = vpop.f32.mrb[0].mxu0
    %v1962 = vadd.f32 %v1849, %v1961
    %1963 = vmatprep.mubr.bf16.mxu0 %v580
    %1964 = vmatmul.mubr.bf16.gmra.mrb[0].mxu0 %v579
    %v1965 = vpop.f32.mrb[0].mxu0
    %v1966 = vadd.f32 %v1853, %v1965
    %v1967 = vpop.f32.mrb[0].mxu0
    %v1968 = vadd.f32 %v1855, %v1967
    %v1969 = vpop.f32.mrb[0].mxu0
    %v1970 = vadd.f32 %v1857, %v1969
    %v1971 = vpop.f32.mrb[0].mxu0
    %v1972 = vadd.f32 %v1859, %v1971
    %1973 = vmatprep.mubr.bf16.mxu0 %v587
    %1974 = vmatmul.mubr.bf16.gmra.mrb[0].mxu0 %v586
    %v1975 = vpop.f32.mrb[0].mxu0
    %v1976 = vadd.f32 %v1863, %v1975
    %v1977 = vpop.f32.mrb[0].mxu0
    %v1978 = vadd.f32 %v1865, %v1977
    %v1979 = vpop.f32.mrb[0].mxu0
    %v1980 = vadd.f32 %v1867, %v1979
    %v1981 = vpop.f32.mrb[0].mxu0
    %v1982 = vadd.f32 %v1869, %v1981
    %1983 = vmatprep.mubr.bf16.mxu0 %v594
    %1984 = vmatmul.mubr.bf16.gmra.mrb[0].mxu0 %v593
    %v1985 = vpop.f32.mrb[0].mxu0
    %v1986 = vadd.f32 %v1873, %v1985
    %v1987 = vpop.f32.mrb[0].mxu0
    %v1988 = vadd.f32 %v1875, %v1987
    %v1989 = vpop.f32.mrb[0].mxu0
    %v1990 = vadd.f32 %v1877, %v1989
    %v1991 = vpop.f32.mrb[0].mxu0
    %v1992 = vadd.f32 %v1879, %v1991
    %1993 = vmatprep.mubr.bf16.mxu0 %v601
    %1994 = vmatmul.mubr.bf16.gmra.mrb[0].mxu0 %v600
    %v1995 = vpop.f32.mrb[0].mxu0
    %v1996 = vadd.f32 %v1883, %v1995
    %v1997 = vpop.f32.mrb[0].mxu0
    %v1998 = vadd.f32 %v1885, %v1997
    %v1999 = vpop.f32.mrb[0].mxu0
    %v2000 = vadd.f32 %v1887, %v1999
    %v2001 = vpop.f32.mrb[0].mxu0
    %v2002 = vadd.f32 %v1889, %v2001
    %2003 = vmatprep.mubr.bf16.mxu0 %v608
    %2004 = vmatmul.mubr.bf16.gmra.mrb[0].mxu0 %v607
    %v2005 = vpop.f32.mrb[0].mxu0
    %v2006 = vadd.f32 %v1893, %v2005
    %v2007 = vpop.f32.mrb[0].mxu0
    %v2008 = vadd.f32 %v1895, %v2007
    %v2009 = vpop.f32.mrb[0].mxu0
    %v2010 = vadd.f32 %v1897, %v2009
    %v2011 = vpop.f32.mrb[0].mxu0
    %v2012 = vadd.f32 %v1899, %v2011
    %2013 = vdwg.mxu0
    %2014 = vmatprep.subr.bf16.mxu0 %v1469
    %2015 = vmatpush1.bf16.msra.mxu0 %v1468
    %2016 = vmatprep.subr.bf16.mxu0 %v1473
    %2017 = vmatpush1.bf16.msra.mxu0 %v1472
    %2018 = vmatprep.subr.bf16.mxu0 %v1477
    %2019 = vmatpush1.bf16.msra.mxu0 %v1476
    %2020 = vmatprep.subr.bf16.mxu0 %v1481
    %2021 = vmatpush1.bf16.msra.mxu0 %v1480
    %2022 = vmatprep.subr.bf16.mxu0 %v1485
    %2023 = vmatpush1.bf16.msra.mxu0 %v1484
    %2024 = vmatprep.subr.bf16.mxu0 %v1489
    %2025 = vmatpush1.bf16.msra.mxu0 %v1488
    %2026 = vmatprep.subr.bf16.mxu0 %v1493
    %2027 = vmatpush1.bf16.msra.mxu0 %v1492
    %2028 = vmatprep.subr.bf16.mxu0 %v1497
    %2029 = vmatpush1.bf16.msra.mxu0 %v1496
    %2030 = vmatprep.subr.bf16.mxu0 %v1501
    %2031 = vmatpush1.bf16.msra.mxu0 %v1500
    %2032 = vmatprep.subr.bf16.mxu0 %v1505
    %2033 = vmatpush1.bf16.msra.mxu0 %v1504
    %2034 = vmatprep.subr.bf16.mxu0 %v1509
    %2035 = vmatpush1.bf16.msra.mxu0 %v1508
    %2036 = vmatprep.subr.bf16.mxu0 %v1513
    %2037 = vmatpush1.bf16.msra.mxu0 %v1512
    %2038 = vmatprep.subr.bf16.mxu0 %v1517
    %2039 = vmatpush1.bf16.msra.mxu0 %v1516
    %2040 = vmatprep.subr.bf16.mxu0 %v1521
    %2041 = vmatpush1.bf16.msra.mxu0 %v1520
    %2042 = vmatprep.subr.bf16.mxu0 %v1525
    %2043 = vmatpush1.bf16.msra.mxu0 %v1524
    %2044 = vmatprep.subr.bf16.mxu0 %v1529
    %2045 = vmatpush1.bf16.msra.mxu0 %v1528
    %2046 = vmatprep.mubr.bf16.mxu0 %v561
    %2047 = vmatmul.mubr.bf16.gmra.mrb[0].mxu0 %v560
    %v2048 = vpop.f32.mrb[0].mxu0
    %v2049 = vadd.f32 %v1936, %v2048
    %v2050 = vpop.f32.mrb[0].mxu0
    %v2051 = vadd.f32 %v1938, %v2050
    %v2052 = vpop.f32.mrb[0].mxu0
    %v2053 = vadd.f32 %v1940, %v2052
    %v2054 = vpop.f32.mrb[0].mxu0
    %v2055 = vadd.f32 %v1942, %v2054
    %2056 = vmatprep.mubr.bf16.mxu0 %v568
    %2057 = vmatmul.mubr.bf16.gmra.mrb[0].mxu0 %v567
    %v2058 = vpop.f32.mrb[0].mxu0
    %v2059 = vadd.f32 %v1946, %v2058
    %v2060 = vpop.f32.mrb[0].mxu0
    %v2061 = vadd.f32 %v1948, %v2060
    %v2062 = vpop.f32.mrb[0].mxu0
    %v2063 = vadd.f32 %v1950, %v2062
    %v2064 = vpop.f32.mrb[0].mxu0
    %v2065 = vadd.f32 %v1952, %v2064
    %2066 = vmatprep.mubr.bf16.mxu0 %v575
    %2067 = vmatmul.mubr.bf16.gmra.mrb[0].mxu0 %v574
    %v2068 = vpop.f32.mrb[0].mxu0
    %v2069 = vadd.f32 %v1956, %v2068
    %v2070 = vpop.f32.mrb[0].mxu0
    %v2071 = vadd.f32 %v1958, %v2070
    %v2072 = vpop.f32.mrb[0].mxu0
    %v2073 = vadd.f32 %v1960, %v2072
    %v2074 = vpop.f32.mrb[0].mxu0
    %v2075 = vadd.f32 %v1962, %v2074
    %2076 = vmatprep.mubr.bf16.mxu0 %v582
    %2077 = vmatmul.mubr.bf16.gmra.mrb[0].mxu0 %v581
    %v2078 = vpop.f32.mrb[0].mxu0
    %v2079 = vadd.f32 %v1966, %v2078
    %v2080 = vpop.f32.mrb[0].mxu0
    %v2081 = vadd.f32 %v1968, %v2080
    %v2082 = vpop.f32.mrb[0].mxu0
    %v2083 = vadd.f32 %v1970, %v2082
    %v2084 = vpop.f32.mrb[0].mxu0
    %v2085 = vadd.f32 %v1972, %v2084
    %2086 = vmatprep.mubr.bf16.mxu0 %v589
    %2087 = vmatmul.mubr.bf16.gmra.mrb[0].mxu0 %v588
    %v2088 = vpop.f32.mrb[0].mxu0
    %v2089 = vadd.f32 %v1976, %v2088
    %v2090 = vpop.f32.mrb[0].mxu0
    %v2091 = vadd.f32 %v1978, %v2090
    %v2092 = vpop.f32.mrb[0].mxu0
    %v2093 = vadd.f32 %v1980, %v2092
    %v2094 = vpop.f32.mrb[0].mxu0
    %v2095 = vadd.f32 %v1982, %v2094
    %2096 = vmatprep.mubr.bf16.mxu0 %v596
    %2097 = vmatmul.mubr.bf16.gmra.mrb[0].mxu0 %v595
    %v2098 = vpop.f32.mrb[0].mxu0
    %v2099 = vadd.f32 %v1986, %v2098
    %v2100 = vpop.f32.mrb[0].mxu0
    %v2101 = vadd.f32 %v1988, %v2100
    %v2102 = vpop.f32.mrb[0].mxu0
    %v2103 = vadd.f32 %v1990, %v2102
    %v2104 = vpop.f32.mrb[0].mxu0
    %v2105 = vadd.f32 %v1992, %v2104
    %2106 = vmatprep.mubr.bf16.mxu0 %v603
    %2107 = vmatmul.mubr.bf16.gmra.mrb[0].mxu0 %v602
    %v2108 = vpop.f32.mrb[0].mxu0
    %v2109 = vadd.f32 %v1996, %v2108
    %v2110 = vpop.f32.mrb[0].mxu0
    %v2111 = vadd.f32 %v1998, %v2110
    %v2112 = vpop.f32.mrb[0].mxu0
    %v2113 = vadd.f32 %v2000, %v2112
    %v2114 = vpop.f32.mrb[0].mxu0
    %v2115 = vadd.f32 %v2002, %v2114
    %2116 = vmatprep.mubr.bf16.mxu0 %v610
    %2117 = vmatmul.mubr.bf16.gmra.mrb[0].mxu0 %v609
    %v2118 = vpop.f32.mrb[0].mxu0
    %v2119 = vadd.f32 %v2006, %v2118
    %v2120 = vpop.f32.mrb[0].mxu0
    %v2121 = vadd.f32 %v2008, %v2120
    %v2122 = vpop.f32.mrb[0].mxu0
    %v2123 = vadd.f32 %v2010, %v2122
    %v2124 = vpop.f32.mrb[0].mxu0
    %v2125 = vadd.f32 %v2012, %v2124
    %2126 = vdwg.mxu0
    %2127 = vmatprep.subr.bf16.mxu0 %v1533
    %2128 = vmatpush1.bf16.msra.mxu0 %v1532
    %2129 = vmatprep.subr.bf16.mxu0 %v1537
    %2130 = vmatpush1.bf16.msra.mxu0 %v1536
    %2131 = vmatprep.subr.bf16.mxu0 %v1541
    %2132 = vmatpush1.bf16.msra.mxu0 %v1540
    %2133 = vmatprep.subr.bf16.mxu0 %v1545
    %2134 = vmatpush1.bf16.msra.mxu0 %v1544
    %2135 = vmatprep.subr.bf16.mxu0 %v1549
    %2136 = vmatpush1.bf16.msra.mxu0 %v1548
    %2137 = vmatprep.subr.bf16.mxu0 %v1553
    %2138 = vmatpush1.bf16.msra.mxu0 %v1552
    %2139 = vmatprep.subr.bf16.mxu0 %v1557
    %2140 = vmatpush1.bf16.msra.mxu0 %v1556
    %2141 = vmatprep.subr.bf16.mxu0 %v1561
    %2142 = vmatpush1.bf16.msra.mxu0 %v1560
    %2143 = vmatprep.subr.bf16.mxu0 0
    %2144 = vmatpush1.bf16.msra.mxu0 0
    %2145 = vmatprep.subr.bf16.mxu0 0
    %2146 = vmatpush1.bf16.msra.mxu0 0
    %2147 = vmatprep.subr.bf16.mxu0 0
    %2148 = vmatpush1.bf16.msra.mxu0 0
    %2149 = vmatprep.subr.bf16.mxu0 0
    %2150 = vmatpush1.bf16.msra.mxu0 0
    %2151 = vmatprep.subr.bf16.mxu0 0
    %2152 = vmatpush1.bf16.msra.mxu0 0
    %2153 = vmatprep.subr.bf16.mxu0 0
    %2154 = vmatpush1.bf16.msra.mxu0 0
    %2155 = vmatprep.subr.bf16.mxu0 0
    %2156 = vmatpush1.bf16.msra.mxu0 0
    %2157 = vmatprep.subr.bf16.mxu0 0
    %2158 = vmatpush1.bf16.msra.mxu0 0
    %2159 = vmatprep.mubr.bf16.mxu0 0
    %2160 = vmatmul.mubr.bf16.gmra.mrb[0].mxu0 %v562
    %v2161 = vpop.f32.mrb[0].mxu0
    %v2162 = vadd.f32 %v2049, %v2161
    %v2163 = vpop.f32.mrb[0].mxu0
    %v2164 = vadd.f32 %v2051, %v2163
    %v2165 = vpop.f32.mrb[0].mxu0
    %v2166 = vadd.f32 %v2053, %v2165
    %v2167 = vpop.f32.mrb[0].mxu0
    %v2168 = vadd.f32 %v2055, %v2167
    %2169 = vmatprep.mubr.bf16.mxu0 0
    %2170 = vmatmul.mubr.bf16.gmra.mrb[0].mxu0 %v569
    %v2171 = vpop.f32.mrb[0].mxu0
    %v2172 = vadd.f32 %v2059, %v2171
    %v2173 = vpop.f32.mrb[0].mxu0
    %v2174 = vadd.f32 %v2061, %v2173
    %v2175 = vpop.f32.mrb[0].mxu0
    %v2176 = vadd.f32 %v2063, %v2175
    %v2177 = vpop.f32.mrb[0].mxu0
    %v2178 = vadd.f32 %v2065, %v2177
    %2179 = vmatprep.mubr.bf16.mxu0 0
    %2180 = vmatmul.mubr.bf16.gmra.mrb[0].mxu0 %v576
    %v2181 = vpop.f32.mrb[0].mxu0
    %v2182 = vadd.f32 %v2069, %v2181
    %v2183 = vpop.f32.mrb[0].mxu0
    %v2184 = vadd.f32 %v2071, %v2183
    %v2185 = vpop.f32.mrb[0].mxu0
    %v2186 = vadd.f32 %v2073, %v2185
    %v2187 = vpop.f32.mrb[0].mxu0
    %v2188 = vadd.f32 %v2075, %v2187
    %2189 = vmatprep.mubr.bf16.mxu0 0
    %2190 = vmatmul.mubr.bf16.gmra.mrb[0].mxu0 %v583
    %v2191 = vpop.f32.mrb[0].mxu0
    %v2192 = vadd.f32 %v2079, %v2191
    %v2193 = vpop.f32.mrb[0].mxu0
    %v2194 = vadd.f32 %v2081, %v2193
    %v2195 = vpop.f32.mrb[0].mxu0
    %v2196 = vadd.f32 %v2083, %v2195
    %v2197 = vpop.f32.mrb[0].mxu0
    %v2198 = vadd.f32 %v2085, %v2197
    %2199 = vmatprep.mubr.bf16.mxu0 0
    %2200 = vmatmul.mubr.bf16.gmra.mrb[0].mxu0 %v590
    %v2201 = vpop.f32.mrb[0].mxu0
    %v2202 = vadd.f32 %v2089, %v2201
    %v2203 = vpop.f32.mrb[0].mxu0
    %v2204 = vadd.f32 %v2091, %v2203
    %v2205 = vpop.f32.mrb[0].mxu0
    %v2206 = vadd.f32 %v2093, %v2205
    %v2207 = vpop.f32.mrb[0].mxu0
    %v2208 = vadd.f32 %v2095, %v2207
    %2209 = vmatprep.mubr.bf16.mxu0 0
    %2210 = vmatmul.mubr.bf16.gmra.mrb[0].mxu0 %v597
    %v2211 = vpop.f32.mrb[0].mxu0
    %v2212 = vadd.f32 %v2099, %v2211
    %v2213 = vpop.f32.mrb[0].mxu0
    %v2214 = vadd.f32 %v2101, %v2213
    %v2215 = vpop.f32.mrb[0].mxu0
    %v2216 = vadd.f32 %v2103, %v2215
    %v2217 = vpop.f32.mrb[0].mxu0
    %v2218 = vadd.f32 %v2105, %v2217
    %2219 = vmatprep.mubr.bf16.mxu0 0
    %2220 = vmatmul.mubr.bf16.gmra.mrb[0].mxu0 %v604
    %v2221 = vpop.f32.mrb[0].mxu0
    %v2222 = vadd.f32 %v2109, %v2221
    %v2223 = vpop.f32.mrb[0].mxu0
    %v2224 = vadd.f32 %v2111, %v2223
    %v2225 = vpop.f32.mrb[0].mxu0
    %v2226 = vadd.f32 %v2113, %v2225
    %v2227 = vpop.f32.mrb[0].mxu0
    %v2228 = vadd.f32 %v2115, %v2227
    %2229 = vmatprep.mubr.bf16.mxu0 0
    %2230 = vmatmul.mubr.bf16.gmra.mrb[0].mxu0 %v611
    %v2231 = vpop.f32.mrb[0].mxu0
    %v2232 = vadd.f32 %v2119, %v2231
    %v2233 = vpop.f32.mrb[0].mxu0
    %v2234 = vadd.f32 %v2121, %v2233
    %v2235 = vpop.f32.mrb[0].mxu0
    %v2236 = vadd.f32 %v2123, %v2235
    %v2237 = vpop.f32.mrb[0].mxu0
    %v2238 = vadd.f32 %v2125, %v2237
    %2239 = vdwg.mxu0
    %2240 = vmatprep.subr.bf16.mxu0 %v1343
    %2241 = vmatpush1.bf16.msra.mxu0 %v1342
    %2242 = vmatprep.subr.bf16.mxu0 %v1347
    %2243 = vmatpush1.bf16.msra.mxu0 %v1346
    %2244 = vmatprep.subr.bf16.mxu0 %v1351
    %2245 = vmatpush1.bf16.msra.mxu0 %v1350
    %2246 = vmatprep.subr.bf16.mxu0 %v1355
    %2247 = vmatpush1.bf16.msra.mxu0 %v1354
    %2248 = vmatprep.subr.bf16.mxu0 %v1359
    %2249 = vmatpush1.bf16.msra.mxu0 %v1358
    %2250 = vmatprep.subr.bf16.mxu0 %v1363
    %2251 = vmatpush1.bf16.msra.mxu0 %v1362
    %2252 = vmatprep.subr.bf16.mxu0 %v1367
    %2253 = vmatpush1.bf16.msra.mxu0 %v1366
    %2254 = vmatprep.subr.bf16.mxu0 %v1371
    %2255 = vmatpush1.bf16.msra.mxu0 %v1370
    %2256 = vmatprep.subr.bf16.mxu0 %v1375
    %2257 = vmatpush1.bf16.msra.mxu0 %v1374
    %2258 = vmatprep.subr.bf16.mxu0 %v1379
    %2259 = vmatpush1.bf16.msra.mxu0 %v1378
    %2260 = vmatprep.subr.bf16.mxu0 %v1383
    %2261 = vmatpush1.bf16.msra.mxu0 %v1382
    %2262 = vmatprep.subr.bf16.mxu0 %v1387
    %2263 = vmatpush1.bf16.msra.mxu0 %v1386
    %2264 = vmatprep.subr.bf16.mxu0 %v1391
    %2265 = vmatpush1.bf16.msra.mxu0 %v1390
    %2266 = vmatprep.subr.bf16.mxu0 %v1395
    %2267 = vmatpush1.bf16.msra.mxu0 %v1394
    %2268 = vmatprep.subr.bf16.mxu0 %v1399
    %2269 = vmatpush1.bf16.msra.mxu0 %v1398
    %2270 = vmatprep.subr.bf16.mxu0 %v1403
    %2271 = vmatpush1.bf16.msra.mxu0 %v1402
    %2272 = vmatprep.mubr.bf16.mxu0 %v557
    %2273 = vmatmul.mubr.bf16.gmra.mrb[0].mxu0 %v556
    %v2274 = vpop.f32.mrb[0].mxu0
    %v2275 = vadd.f32 %v371, %v2274
    %v2276 = vpop.f32.mrb[0].mxu0
    %v2277 = vadd.f32 %v375, %v2276
    %v2278 = vpop.f32.mrb[0].mxu0
    %v2279 = vadd.f32 %v371, %v2278
    %v2280 = vpop.f32.mrb[0].mxu0
    %v2281 = vadd.f32 %v375, %v2280
    %2282 = vmatprep.mubr.bf16.mxu0 %v564
    %2283 = vmatmul.mubr.bf16.gmra.mrb[0].mxu0 %v563
    %v2284 = vpop.f32.mrb[0].mxu0
    %v2285 = vadd.f32 %v371, %v2284
    %v2286 = vpop.f32.mrb[0].mxu0
    %v2287 = vadd.f32 %v375, %v2286
    %v2288 = vpop.f32.mrb[0].mxu0
    %v2289 = vadd.f32 %v371, %v2288
    %v2290 = vpop.f32.mrb[0].mxu0
    %v2291 = vadd.f32 %v375, %v2290
    %2292 = vmatprep.mubr.bf16.mxu0 %v571
    %2293 = vmatmul.mubr.bf16.gmra.mrb[0].mxu0 %v570
    %v2294 = vpop.f32.mrb[0].mxu0
    %v2295 = vadd.f32 %v371, %v2294
    %v2296 = vpop.f32.mrb[0].mxu0
    %v2297 = vadd.f32 %v375, %v2296
    %v2298 = vpop.f32.mrb[0].mxu0
    %v2299 = vadd.f32 %v371, %v2298
    %v2300 = vpop.f32.mrb[0].mxu0
    %v2301 = vadd.f32 %v375, %v2300
    %2302 = vmatprep.mubr.bf16.mxu0 %v578
    %2303 = vmatmul.mubr.bf16.gmra.mrb[0].mxu0 %v577
    %v2304 = vpop.f32.mrb[0].mxu0
    %v2305 = vadd.f32 %v371, %v2304
    %v2306 = vpop.f32.mrb[0].mxu0
    %v2307 = vadd.f32 %v375, %v2306
    %v2308 = vpop.f32.mrb[0].mxu0
    %v2309 = vadd.f32 %v371, %v2308
    %v2310 = vpop.f32.mrb[0].mxu0
    %v2311 = vadd.f32 %v375, %v2310
    %2312 = vmatprep.mubr.bf16.mxu0 %v585
    %2313 = vmatmul.mubr.bf16.gmra.mrb[0].mxu0 %v584
    %v2314 = vpop.f32.mrb[0].mxu0
    %v2315 = vadd.f32 %v371, %v2314
    %v2316 = vpop.f32.mrb[0].mxu0
    %v2317 = vadd.f32 %v375, %v2316
    %v2318 = vpop.f32.mrb[0].mxu0
    %v2319 = vadd.f32 %v371, %v2318
    %v2320 = vpop.f32.mrb[0].mxu0
    %v2321 = vadd.f32 %v375, %v2320
    %2322 = vmatprep.mubr.bf16.mxu0 %v592
    %2323 = vmatmul.mubr.bf16.gmra.mrb[0].mxu0 %v591
    %v2324 = vpop.f32.mrb[0].mxu0
    %v2325 = vadd.f32 %v371, %v2324
    %v2326 = vpop.f32.mrb[0].mxu0
    %v2327 = vadd.f32 %v375, %v2326
    %v2328 = vpop.f32.mrb[0].mxu0
    %v2329 = vadd.f32 %v371, %v2328
    %v2330 = vpop.f32.mrb[0].mxu0
    %v2331 = vadd.f32 %v375, %v2330
    %2332 = vmatprep.mubr.bf16.mxu0 %v599
    %2333 = vmatmul.mubr.bf16.gmra.mrb[0].mxu0 %v598
    %v2334 = vpop.f32.mrb[0].mxu0
    %v2335 = vadd.f32 %v371, %v2334
    %v2336 = vpop.f32.mrb[0].mxu0
    %v2337 = vadd.f32 %v375, %v2336
    %v2338 = vpop.f32.mrb[0].mxu0
    %v2339 = vadd.f32 %v371, %v2338
    %v2340 = vpop.f32.mrb[0].mxu0
    %v2341 = vadd.f32 %v375, %v2340
    %2342 = vmatprep.mubr.bf16.mxu0 %v606
    %2343 = vmatmul.mubr.bf16.gmra.mrb[0].mxu0 %v605
    %v2344 = vpop.f32.mrb[0].mxu0
    %v2345 = vadd.f32 %v371, %v2344
    %v2346 = vpop.f32.mrb[0].mxu0
    %v2347 = vadd.f32 %v375, %v2346
    %v2348 = vpop.f32.mrb[0].mxu0
    %v2349 = vadd.f32 %v371, %v2348
    %v2350 = vpop.f32.mrb[0].mxu0
    %v2351 = vadd.f32 %v375, %v2350
    %2352 = vdwg.mxu0
    %2353 = vmatprep.subr.bf16.mxu0 %v1407
    %2354 = vmatpush1.bf16.msra.mxu0 %v1406
    %2355 = vmatprep.subr.bf16.mxu0 %v1411
    %2356 = vmatpush1.bf16.msra.mxu0 %v1410
    %2357 = vmatprep.subr.bf16.mxu0 %v1415
    %2358 = vmatpush1.bf16.msra.mxu0 %v1414
    %2359 = vmatprep.subr.bf16.mxu0 %v1419
    %2360 = vmatpush1.bf16.msra.mxu0 %v1418
    %2361 = vmatprep.subr.bf16.mxu0 %v1423
    %2362 = vmatpush1.bf16.msra.mxu0 %v1422
    %2363 = vmatprep.subr.bf16.mxu0 %v1427
    %2364 = vmatpush1.bf16.msra.mxu0 %v1426
    %2365 = vmatprep.subr.bf16.mxu0 %v1431
    %2366 = vmatpush1.bf16.msra.mxu0 %v1430
    %2367 = vmatprep.subr.bf16.mxu0 %v1435
    %2368 = vmatpush1.bf16.msra.mxu0 %v1434
    %2369 = vmatprep.subr.bf16.mxu0 %v1439
    %2370 = vmatpush1.bf16.msra.mxu0 %v1438
    %2371 = vmatprep.subr.bf16.mxu0 %v1443
    %2372 = vmatpush1.bf16.msra.mxu0 %v1442
    %2373 = vmatprep.subr.bf16.mxu0 %v1447
    %2374 = vmatpush1.bf16.msra.mxu0 %v1446
    %2375 = vmatprep.subr.bf16.mxu0 %v1451
    %2376 = vmatpush1.bf16.msra.mxu0 %v1450
    %2377 = vmatprep.subr.bf16.mxu0 %v1455
    %2378 = vmatpush1.bf16.msra.mxu0 %v1454
    %2379 = vmatprep.subr.bf16.mxu0 %v1459
    %2380 = vmatpush1.bf16.msra.mxu0 %v1458
    %2381 = vmatprep.subr.bf16.mxu0 %v1463
    %2382 = vmatpush1.bf16.msra.mxu0 %v1462
    %2383 = vmatprep.subr.bf16.mxu0 %v1467
    %2384 = vmatpush1.bf16.msra.mxu0 %v1466
    %2385 = vmatprep.mubr.bf16.mxu0 %v559
    %2386 = vmatmul.mubr.bf16.gmra.mrb[0].mxu0 %v558
    %v2387 = vpop.f32.mrb[0].mxu0
    %v2388 = vadd.f32 %v2275, %v2387
    %v2389 = vpop.f32.mrb[0].mxu0
    %v2390 = vadd.f32 %v2277, %v2389
    %v2391 = vpop.f32.mrb[0].mxu0
    %v2392 = vadd.f32 %v2279, %v2391
    %v2393 = vpop.f32.mrb[0].mxu0
    %v2394 = vadd.f32 %v2281, %v2393
    %2395 = vmatprep.mubr.bf16.mxu0 %v566
    %2396 = vmatmul.mubr.bf16.gmra.mrb[0].mxu0 %v565
    %v2397 = vpop.f32.mrb[0].mxu0
    %v2398 = vadd.f32 %v2285, %v2397
    %v2399 = vpop.f32.mrb[0].mxu0
    %v2400 = vadd.f32 %v2287, %v2399
    %v2401 = vpop.f32.mrb[0].mxu0
    %v2402 = vadd.f32 %v2289, %v2401
    %v2403 = vpop.f32.mrb[0].mxu0
    %v2404 = vadd.f32 %v2291, %v2403
    %2405 = vmatprep.mubr.bf16.mxu0 %v573
    %2406 = vmatmul.mubr.bf16.gmra.mrb[0].mxu0 %v572
    %v2407 = vpop.f32.mrb[0].mxu0
    %v2408 = vadd.f32 %v2295, %v2407
    %v2409 = vpop.f32.mrb[0].mxu0
    %v2410 = vadd.f32 %v2297, %v2409
    %v2411 = vpop.f32.mrb[0].mxu0
    %v2412 = vadd.f32 %v2299, %v2411
    %v2413 = vpop.f32.mrb[0].mxu0
    %v2414 = vadd.f32 %v2301, %v2413
    %2415 = vmatprep.mubr.bf16.mxu0 %v580
    %2416 = vmatmul.mubr.bf16.gmra.mrb[0].mxu0 %v579
    %v2417 = vpop.f32.mrb[0].mxu0
    %v2418 = vadd.f32 %v2305, %v2417
    %v2419 = vpop.f32.mrb[0].mxu0
    %v2420 = vadd.f32 %v2307, %v2419
    %v2421 = vpop.f32.mrb[0].mxu0
    %v2422 = vadd.f32 %v2309, %v2421
    %v2423 = vpop.f32.mrb[0].mxu0
    %v2424 = vadd.f32 %v2311, %v2423
    %2425 = vmatprep.mubr.bf16.mxu0 %v587
    %2426 = vmatmul.mubr.bf16.gmra.mrb[0].mxu0 %v586
    %v2427 = vpop.f32.mrb[0].mxu0
    %v2428 = vadd.f32 %v2315, %v2427
    %v2429 = vpop.f32.mrb[0].mxu0
    %v2430 = vadd.f32 %v2317, %v2429
    %v2431 = vpop.f32.mrb[0].mxu0
    %v2432 = vadd.f32 %v2319, %v2431
    %v2433 = vpop.f32.mrb[0].mxu0
    %v2434 = vadd.f32 %v2321, %v2433
    %2435 = vmatprep.mubr.bf16.mxu0 %v594
    %2436 = vmatmul.mubr.bf16.gmra.mrb[0].mxu0 %v593
    %v2437 = vpop.f32.mrb[0].mxu0
    %v2438 = vadd.f32 %v2325, %v2437
    %v2439 = vpop.f32.mrb[0].mxu0
    %v2440 = vadd.f32 %v2327, %v2439
    %v2441 = vpop.f32.mrb[0].mxu0
    %v2442 = vadd.f32 %v2329, %v2441
    %v2443 = vpop.f32.mrb[0].mxu0
    %v2444 = vadd.f32 %v2331, %v2443
    %2445 = vmatprep.mubr.bf16.mxu0 %v601
    %2446 = vmatmul.mubr.bf16.gmra.mrb[0].mxu0 %v600
    %v2447 = vpop.f32.mrb[0].mxu0
    %v2448 = vadd.f32 %v2335, %v2447
    %v2449 = vpop.f32.mrb[0].mxu0
    %v2450 = vadd.f32 %v2337, %v2449
    %v2451 = vpop.f32.mrb[0].mxu0
    %v2452 = vadd.f32 %v2339, %v2451
    %v2453 = vpop.f32.mrb[0].mxu0
    %v2454 = vadd.f32 %v2341, %v2453
    %2455 = vmatprep.mubr.bf16.mxu0 %v608
    %2456 = vmatmul.mubr.bf16.gmra.mrb[0].mxu0 %v607
    %v2457 = vpop.f32.mrb[0].mxu0
    %v2458 = vadd.f32 %v2345, %v2457
    %v2459 = vpop.f32.mrb[0].mxu0
    %v2460 = vadd.f32 %v2347, %v2459
    %v2461 = vpop.f32.mrb[0].mxu0
    %v2462 = vadd.f32 %v2349, %v2461
    %v2463 = vpop.f32.mrb[0].mxu0
    %v2464 = vadd.f32 %v2351, %v2463
    %2465 = vdwg.mxu0
    %2466 = vmatprep.subr.bf16.mxu0 %v1471
    %2467 = vmatpush1.bf16.msra.mxu0 %v1470
    %2468 = vmatprep.subr.bf16.mxu0 %v1475
    %2469 = vmatpush1.bf16.msra.mxu0 %v1474
    %2470 = vmatprep.subr.bf16.mxu0 %v1479
    %2471 = vmatpush1.bf16.msra.mxu0 %v1478
    %2472 = vmatprep.subr.bf16.mxu0 %v1483
    %2473 = vmatpush1.bf16.msra.mxu0 %v1482
    %2474 = vmatprep.subr.bf16.mxu0 %v1487
    %2475 = vmatpush1.bf16.msra.mxu0 %v1486
    %2476 = vmatprep.subr.bf16.mxu0 %v1491
    %2477 = vmatpush1.bf16.msra.mxu0 %v1490
    %2478 = vmatprep.subr.bf16.mxu0 %v1495
    %2479 = vmatpush1.bf16.msra.mxu0 %v1494
    %2480 = vmatprep.subr.bf16.mxu0 %v1499
    %2481 = vmatpush1.bf16.msra.mxu0 %v1498
    %2482 = vmatprep.subr.bf16.mxu0 %v1503
    %2483 = vmatpush1.bf16.msra.mxu0 %v1502
    %2484 = vmatprep.subr.bf16.mxu0 %v1507
    %2485 = vmatpush1.bf16.msra.mxu0 %v1506
    %2486 = vmatprep.subr.bf16.mxu0 %v1511
    %2487 = vmatpush1.bf16.msra.mxu0 %v1510
    %2488 = vmatprep.subr.bf16.mxu0 %v1515
    %2489 = vmatpush1.bf16.msra.mxu0 %v1514
    %2490 = vmatprep.subr.bf16.mxu0 %v1519
    %2491 = vmatpush1.bf16.msra.mxu0 %v1518
    %2492 = vmatprep.subr.bf16.mxu0 %v1523
    %2493 = vmatpush1.bf16.msra.mxu0 %v1522
    %2494 = vmatprep.subr.bf16.mxu0 %v1527
    %2495 = vmatpush1.bf16.msra.mxu0 %v1526
    %2496 = vmatprep.subr.bf16.mxu0 %v1531
    %2497 = vmatpush1.bf16.msra.mxu0 %v1530
    %2498 = vmatprep.mubr.bf16.mxu0 %v561
    %2499 = vmatmul.mubr.bf16.gmra.mrb[0].mxu0 %v560
    %v2500 = vpop.f32.mrb[0].mxu0
    %v2501 = vadd.f32 %v2388, %v2500
    %v2502 = vpop.f32.mrb[0].mxu0
    %v2503 = vadd.f32 %v2390, %v2502
    %v2504 = vpop.f32.mrb[0].mxu0
    %v2505 = vadd.f32 %v2392, %v2504
    %v2506 = vpop.f32.mrb[0].mxu0
    %v2507 = vadd.f32 %v2394, %v2506
    %2508 = vmatprep.mubr.bf16.mxu0 %v568
    %2509 = vmatmul.mubr.bf16.gmra.mrb[0].mxu0 %v567
    %v2510 = vpop.f32.mrb[0].mxu0
    %v2511 = vadd.f32 %v2398, %v2510
    %v2512 = vpop.f32.mrb[0].mxu0
    %v2513 = vadd.f32 %v2400, %v2512
    %v2514 = vpop.f32.mrb[0].mxu0
    %v2515 = vadd.f32 %v2402, %v2514
    %v2516 = vpop.f32.mrb[0].mxu0
    %v2517 = vadd.f32 %v2404, %v2516
    %2518 = vmatprep.mubr.bf16.mxu0 %v575
    %2519 = vmatmul.mubr.bf16.gmra.mrb[0].mxu0 %v574
    %v2520 = vpop.f32.mrb[0].mxu0
    %v2521 = vadd.f32 %v2408, %v2520
    %v2522 = vpop.f32.mrb[0].mxu0
    %v2523 = vadd.f32 %v2410, %v2522
    %v2524 = vpop.f32.mrb[0].mxu0
    %v2525 = vadd.f32 %v2412, %v2524
    %v2526 = vpop.f32.mrb[0].mxu0
    %v2527 = vadd.f32 %v2414, %v2526
    %2528 = vmatprep.mubr.bf16.mxu0 %v582
    %2529 = vmatmul.mubr.bf16.gmra.mrb[0].mxu0 %v581
    %v2530 = vpop.f32.mrb[0].mxu0
    %v2531 = vadd.f32 %v2418, %v2530
    %v2532 = vpop.f32.mrb[0].mxu0
    %v2533 = vadd.f32 %v2420, %v2532
    %v2534 = vpop.f32.mrb[0].mxu0
    %v2535 = vadd.f32 %v2422, %v2534
    %v2536 = vpop.f32.mrb[0].mxu0
    %v2537 = vadd.f32 %v2424, %v2536
    %2538 = vmatprep.mubr.bf16.mxu0 %v589
    %2539 = vmatmul.mubr.bf16.gmra.mrb[0].mxu0 %v588
    %v2540 = vpop.f32.mrb[0].mxu0
    %v2541 = vadd.f32 %v2428, %v2540
    %v2542 = vpop.f32.mrb[0].mxu0
    %v2543 = vadd.f32 %v2430, %v2542
    %v2544 = vpop.f32.mrb[0].mxu0
    %v2545 = vadd.f32 %v2432, %v2544
    %v2546 = vpop.f32.mrb[0].mxu0
    %v2547 = vadd.f32 %v2434, %v2546
    %2548 = vmatprep.mubr.bf16.mxu0 %v596
    %2549 = vmatmul.mubr.bf16.gmra.mrb[0].mxu0 %v595
    %v2550 = vpop.f32.mrb[0].mxu0
    %v2551 = vadd.f32 %v2438, %v2550
    %v2552 = vpop.f32.mrb[0].mxu0
    %v2553 = vadd.f32 %v2440, %v2552
    %v2554 = vpop.f32.mrb[0].mxu0
    %v2555 = vadd.f32 %v2442, %v2554
    %v2556 = vpop.f32.mrb[0].mxu0
    %v2557 = vadd.f32 %v2444, %v2556
    %2558 = vmatprep.mubr.bf16.mxu0 %v603
    %2559 = vmatmul.mubr.bf16.gmra.mrb[0].mxu0 %v602
    %v2560 = vpop.f32.mrb[0].mxu0
    %v2561 = vadd.f32 %v2448, %v2560
    %v2562 = vpop.f32.mrb[0].mxu0
    %v2563 = vadd.f32 %v2450, %v2562
    %v2564 = vpop.f32.mrb[0].mxu0
    %v2565 = vadd.f32 %v2452, %v2564
    %v2566 = vpop.f32.mrb[0].mxu0
    %v2567 = vadd.f32 %v2454, %v2566
    %2568 = vmatprep.mubr.bf16.mxu0 %v610
    %2569 = vmatmul.mubr.bf16.gmra.mrb[0].mxu0 %v609
    %v2570 = vpop.f32.mrb[0].mxu0
    %v2571 = vadd.f32 %v2458, %v2570
    %v2572 = vpop.f32.mrb[0].mxu0
    %v2573 = vadd.f32 %v2460, %v2572
    %v2574 = vpop.f32.mrb[0].mxu0
    %v2575 = vadd.f32 %v2462, %v2574
    %v2576 = vpop.f32.mrb[0].mxu0
    %v2577 = vadd.f32 %v2464, %v2576
    %2578 = vdwg.mxu0
    %2579 = vmatprep.subr.bf16.mxu0 %v1535
    %2580 = vmatpush1.bf16.msra.mxu0 %v1534
    %2581 = vmatprep.subr.bf16.mxu0 %v1539
    %2582 = vmatpush1.bf16.msra.mxu0 %v1538
    %2583 = vmatprep.subr.bf16.mxu0 %v1543
    %2584 = vmatpush1.bf16.msra.mxu0 %v1542
    %2585 = vmatprep.subr.bf16.mxu0 %v1547
    %2586 = vmatpush1.bf16.msra.mxu0 %v1546
    %2587 = vmatprep.subr.bf16.mxu0 %v1551
    %2588 = vmatpush1.bf16.msra.mxu0 %v1550
    %2589 = vmatprep.subr.bf16.mxu0 %v1555
    %2590 = vmatpush1.bf16.msra.mxu0 %v1554
    %2591 = vmatprep.subr.bf16.mxu0 %v1559
    %2592 = vmatpush1.bf16.msra.mxu0 %v1558
    %2593 = vmatprep.subr.bf16.mxu0 %v1563
    %2594 = vmatpush1.bf16.msra.mxu0 %v1562
    %2595 = vmatprep.subr.bf16.mxu0 0
    %2596 = vmatpush1.bf16.msra.mxu0 0
    %2597 = vmatprep.subr.bf16.mxu0 0
    %2598 = vmatpush1.bf16.msra.mxu0 0
    %2599 = vmatprep.subr.bf16.mxu0 0
    %2600 = vmatpush1.bf16.msra.mxu0 0
    %2601 = vmatprep.subr.bf16.mxu0 0
    %2602 = vmatpush1.bf16.msra.mxu0 0
    %2603 = vmatprep.subr.bf16.mxu0 0
    %2604 = vmatpush1.bf16.msra.mxu0 0
    %2605 = vmatprep.subr.bf16.mxu0 0
    %2606 = vmatpush1.bf16.msra.mxu0 0
    %2607 = vmatprep.subr.bf16.mxu0 0
    %2608 = vmatpush1.bf16.msra.mxu0 0
    %2609 = vmatprep.subr.bf16.mxu0 0
    %2610 = vmatpush1.bf16.msra.mxu0 0
    %2611 = vmatprep.mubr.bf16.mxu0 0
    %2612 = vmatmul.mubr.bf16.gmra.mrb[0].mxu0 %v562
    %v2613 = vpop.f32.mrb[0].mxu0
    %v2614 = vadd.f32 %v2501, %v2613
    %v2615 = vpop.f32.mrb[0].mxu0
    %v2616 = vadd.f32 %v2503, %v2615
    %v2617 = vpop.f32.mrb[0].mxu0
    %v2618 = vadd.f32 %v2505, %v2617
    %v2619 = vpop.f32.mrb[0].mxu0
    %v2620 = vadd.f32 %v2507, %v2619
    %2621 = vmatprep.mubr.bf16.mxu0 0
    %2622 = vmatmul.mubr.bf16.gmra.mrb[0].mxu0 %v569
    %v2623 = vpop.f32.mrb[0].mxu0
    %v2624 = vadd.f32 %v2511, %v2623
    %v2625 = vpop.f32.mrb[0].mxu0
    %v2626 = vadd.f32 %v2513, %v2625
    %v2627 = vpop.f32.mrb[0].mxu0
    %v2628 = vadd.f32 %v2515, %v2627
    %v2629 = vpop.f32.mrb[0].mxu0
    %v2630 = vadd.f32 %v2517, %v2629
    %2631 = vmatprep.mubr.bf16.mxu0 0
    %2632 = vmatmul.mubr.bf16.gmra.mrb[0].mxu0 %v576
    %v2633 = vpop.f32.mrb[0].mxu0
    %v2634 = vadd.f32 %v2521, %v2633
    %v2635 = vpop.f32.mrb[0].mxu0
    %v2636 = vadd.f32 %v2523, %v2635
    %v2637 = vpop.f32.mrb[0].mxu0
    %v2638 = vadd.f32 %v2525, %v2637
    %v2639 = vpop.f32.mrb[0].mxu0
    %v2640 = vadd.f32 %v2527, %v2639
    %2641 = vmatprep.mubr.bf16.mxu0 0
    %2642 = vmatmul.mubr.bf16.gmra.mrb[0].mxu0 %v583
    %v2643 = vpop.f32.mrb[0].mxu0
    %v2644 = vadd.f32 %v2531, %v2643
    %v2645 = vpop.f32.mrb[0].mxu0
    %v2646 = vadd.f32 %v2533, %v2645
    %v2647 = vpop.f32.mrb[0].mxu0
    %v2648 = vadd.f32 %v2535, %v2647
    %v2649 = vpop.f32.mrb[0].mxu0
    %v2650 = vadd.f32 %v2537, %v2649
    %2651 = vmatprep.mubr.bf16.mxu0 0
    %2652 = vmatmul.mubr.bf16.gmra.mrb[0].mxu0 %v590
    %v2653 = vpop.f32.mrb[0].mxu0
    %v2654 = vadd.f32 %v2541, %v2653
    %v2655 = vpop.f32.mrb[0].mxu0
    %v2656 = vadd.f32 %v2543, %v2655
    %v2657 = vpop.f32.mrb[0].mxu0
    %v2658 = vadd.f32 %v2545, %v2657
    %v2659 = vpop.f32.mrb[0].mxu0
    %v2660 = vadd.f32 %v2547, %v2659
    %2661 = vmatprep.mubr.bf16.mxu0 0
    %2662 = vmatmul.mubr.bf16.gmra.mrb[0].mxu0 %v597
    %v2663 = vpop.f32.mrb[0].mxu0
    %v2664 = vadd.f32 %v2551, %v2663
    %v2665 = vpop.f32.mrb[0].mxu0
    %v2666 = vadd.f32 %v2553, %v2665
    %v2667 = vpop.f32.mrb[0].mxu0
    %v2668 = vadd.f32 %v2555, %v2667
    %v2669 = vpop.f32.mrb[0].mxu0
    %v2670 = vadd.f32 %v2557, %v2669
    %2671 = vmatprep.mubr.bf16.mxu0 0
    %2672 = vmatmul.mubr.bf16.gmra.mrb[0].mxu0 %v604
    %v2673 = vpop.f32.mrb[0].mxu0
    %v2674 = vadd.f32 %v2561, %v2673
    %v2675 = vpop.f32.mrb[0].mxu0
    %v2676 = vadd.f32 %v2563, %v2675
    %v2677 = vpop.f32.mrb[0].mxu0
    %v2678 = vadd.f32 %v2565, %v2677
    %v2679 = vpop.f32.mrb[0].mxu0
    %v2680 = vadd.f32 %v2567, %v2679
    %2681 = vmatprep.mubr.bf16.mxu0 0
    %2682 = vmatmul.mubr.bf16.gmra.mrb[0].mxu0 %v611
    %v2683 = vpop.f32.mrb[0].mxu0
    %v2684 = vadd.f32 %v2571, %v2683
    %v2685 = vpop.f32.mrb[0].mxu0
    %v2686 = vadd.f32 %v2573, %v2685
    %v2687 = vpop.f32.mrb[0].mxu0
    %v2688 = vadd.f32 %v2575, %v2687
    %v2689 = vpop.f32.mrb[0].mxu0
    %v2690 = vadd.f32 %v2577, %v2689
    %2691 = vdwg.mxu0
    %vm2692 = vcmp.gt.f32.partialorder %v2162, 0.0
    %vm2693 = vcmp.gt.f32.partialorder %v2164, 0.0
    %vm2694 = vcmp.gt.f32.partialorder %v2614, 0.0
    %vm2695 = vcmp.gt.f32.partialorder %v2616, 0.0
    %vm2696 = vcmp.gt.f32.partialorder %v2166, 0.0
    %vm2697 = vcmp.gt.f32.partialorder %v2168, 0.0
    %vm2698 = vcmp.gt.f32.partialorder %v2618, 0.0
    %vm2699 = vcmp.gt.f32.partialorder %v2620, 0.0
    %vm2700 = vcmp.gt.f32.partialorder %v2172, 0.0
    %vm2701 = vcmp.gt.f32.partialorder %v2174, 0.0
    %vm2702 = vcmp.gt.f32.partialorder %v2624, 0.0
    %vm2703 = vcmp.gt.f32.partialorder %v2626, 0.0
    %vm2704 = vcmp.gt.f32.partialorder %v2176, 0.0
    %vm2705 = vcmp.gt.f32.partialorder %v2178, 0.0
    %vm2706 = vcmp.gt.f32.partialorder %v2628, 0.0
    %vm2707 = vcmp.gt.f32.partialorder %v2630, 0.0
    %vm2708 = vcmp.gt.f32.partialorder %v2182, 0.0
    %vm2709 = vcmp.gt.f32.partialorder %v2184, 0.0
    %vm2710 = vcmp.gt.f32.partialorder %v2634, 0.0
    %vm2711 = vcmp.gt.f32.partialorder %v2636, 0.0
    %vm2712 = vcmp.gt.f32.partialorder %v2186, 0.0
    %vm2713 = vcmp.gt.f32.partialorder %v2188, 0.0
    %vm2714 = vcmp.gt.f32.partialorder %v2638, 0.0
    %vm2715 = vcmp.gt.f32.partialorder %v2640, 0.0
    %vm2716 = vcmp.gt.f32.partialorder %v2192, 0.0
    %vm2717 = vcmp.gt.f32.partialorder %v2194, 0.0
    %vm2718 = vcmp.gt.f32.partialorder %v2644, 0.0
    %vm2719 = vcmp.gt.f32.partialorder %v2646, 0.0
    %vm2720 = vcmp.gt.f32.partialorder %v2196, 0.0
    %vm2721 = vcmp.gt.f32.partialorder %v2198, 0.0
    %vm2722 = vcmp.gt.f32.partialorder %v2648, 0.0
    %vm2723 = vcmp.gt.f32.partialorder %v2650, 0.0
    %vm2724 = vcmp.gt.f32.partialorder %v2202, 0.0
    %vm2725 = vcmp.gt.f32.partialorder %v2204, 0.0
    %vm2726 = vcmp.gt.f32.partialorder %v2654, 0.0
    %vm2727 = vcmp.gt.f32.partialorder %v2656, 0.0
    %vm2728 = vcmp.gt.f32.partialorder %v2206, 0.0
    %vm2729 = vcmp.gt.f32.partialorder %v2208, 0.0
    %vm2730 = vcmp.gt.f32.partialorder %v2658, 0.0
    %vm2731 = vcmp.gt.f32.partialorder %v2660, 0.0
    %vm2732 = vcmp.gt.f32.partialorder %v2212, 0.0
    %vm2733 = vcmp.gt.f32.partialorder %v2214, 0.0
    %vm2734 = vcmp.gt.f32.partialorder %v2664, 0.0
    %vm2735 = vcmp.gt.f32.partialorder %v2666, 0.0
    %vm2736 = vcmp.gt.f32.partialorder %v2216, 0.0
    %vm2737 = vcmp.gt.f32.partialorder %v2218, 0.0
    %vm2738 = vcmp.gt.f32.partialorder %v2668, 0.0
    %vm2739 = vcmp.gt.f32.partialorder %v2670, 0.0
    %vm2740 = vcmp.gt.f32.partialorder %v2222, 0.0
    %vm2741 = vcmp.gt.f32.partialorder %v2224, 0.0
    %vm2742 = vcmp.gt.f32.partialorder %v2674, 0.0
    %vm2743 = vcmp.gt.f32.partialorder %v2676, 0.0
    %vm2744 = vcmp.gt.f32.partialorder %v2226, 0.0
    %vm2745 = vcmp.gt.f32.partialorder %v2228, 0.0
    %vm2746 = vcmp.gt.f32.partialorder %v2678, 0.0
    %vm2747 = vcmp.gt.f32.partialorder %v2680, 0.0
    %vm2748 = vcmp.gt.f32.partialorder %v2232, 0.0
    %vm2749 = vcmp.gt.f32.partialorder %v2234, 0.0
    %vm2750 = vcmp.gt.f32.partialorder %v2684, 0.0
    %vm2751 = vcmp.gt.f32.partialorder %v2686, 0.0
    %vm2752 = vcmp.gt.f32.partialorder %v2236, 0.0
    %vm2753 = vcmp.gt.f32.partialorder %v2238, 0.0
    %vm2754 = vcmp.gt.f32.partialorder %v2688, 0.0
    %vm2755 = vcmp.gt.f32.partialorder %v2690, 0.0
    %v2756 = vmul.f32 %v2162, 0.2
    %v2757 = vmul.f32 %v2164, 0.2
    %v2758 = vmul.f32 %v2614, 0.2
    %v2759 = vmul.f32 %v2616, 0.2
    %v2760 = vmul.f32 %v2166, 0.2
    %v2761 = vmul.f32 %v2168, 0.2
    %v2762 = vmul.f32 %v2618, 0.2
    %v2763 = vmul.f32 %v2620, 0.2
    %v2764 = vmul.f32 %v2172, 0.2
    %v2765 = vmul.f32 %v2174, 0.2
    %v2766 = vmul.f32 %v2624, 0.2
    %v2767 = vmul.f32 %v2626, 0.2
    %v2768 = vmul.f32 %v2176, 0.2
    %v2769 = vmul.f32 %v2178, 0.2
    %v2770 = vmul.f32 %v2628, 0.2
    %v2771 = vmul.f32 %v2630, 0.2
    %v2772 = vmul.f32 %v2182, 0.2
    %v2773 = vmul.f32 %v2184, 0.2
    %v2774 = vmul.f32 %v2634, 0.2
    %v2775 = vmul.f32 %v2636, 0.2
    %v2776 = vmul.f32 %v2186, 0.2
    %v2777 = vmul.f32 %v2188, 0.2
    %v2778 = vmul.f32 %v2638, 0.2
    %v2779 = vmul.f32 %v2640, 0.2
    %v2780 = vmul.f32 %v2192, 0.2
    %v2781 = vmul.f32 %v2194, 0.2
    %v2782 = vmul.f32 %v2644, 0.2
    %v2783 = vmul.f32 %v2646, 0.2
    %v2784 = vmul.f32 %v2196, 0.2
    %v2785 = vmul.f32 %v2198, 0.2
    %v2786 = vmul.f32 %v2648, 0.2
    %v2787 = vmul.f32 %v2650, 0.2
    %v2788 = vmul.f32 %v2202, 0.2
    %v2789 = vmul.f32 %v2204, 0.2
    %v2790 = vmul.f32 %v2654, 0.2
    %v2791 = vmul.f32 %v2656, 0.2
    %v2792 = vmul.f32 %v2206, 0.2
    %v2793 = vmul.f32 %v2208, 0.2
    %v2794 = vmul.f32 %v2658, 0.2
    %v2795 = vmul.f32 %v2660, 0.2
    %v2796 = vmul.f32 %v2212, 0.2
    %v2797 = vmul.f32 %v2214, 0.2
    %v2798 = vmul.f32 %v2664, 0.2
    %v2799 = vmul.f32 %v2666, 0.2
    %v2800 = vmul.f32 %v2216, 0.2
    %v2801 = vmul.f32 %v2218, 0.2
    %v2802 = vmul.f32 %v2668, 0.2
    %v2803 = vmul.f32 %v2670, 0.2
    %v2804 = vmul.f32 %v2222, 0.2
    %v2805 = vmul.f32 %v2224, 0.2
    %v2806 = vmul.f32 %v2674, 0.2
    %v2807 = vmul.f32 %v2676, 0.2
    %v2808 = vmul.f32 %v2226, 0.2
    %v2809 = vmul.f32 %v2228, 0.2
    %v2810 = vmul.f32 %v2678, 0.2
    %v2811 = vmul.f32 %v2680, 0.2
    %v2812 = vmul.f32 %v2232, 0.2
    %v2813 = vmul.f32 %v2234, 0.2
    %v2814 = vmul.f32 %v2684, 0.2
    %v2815 = vmul.f32 %v2686, 0.2
    %v2816 = vmul.f32 %v2236, 0.2
    %v2817 = vmul.f32 %v2238, 0.2
    %v2818 = vmul.f32 %v2688, 0.2
    %v2819 = vmul.f32 %v2690, 0.2
    %v2820 = vsel %vm2692, %v2162, %v2756
    %v2821 = vsel %vm2693, %v2164, %v2757
    %v2822 = vsel %vm2694, %v2614, %v2758
    %v2823 = vsel %vm2695, %v2616, %v2759
    %v2824 = vsel %vm2696, %v2166, %v2760
    %v2825 = vsel %vm2697, %v2168, %v2761
    %v2826 = vsel %vm2698, %v2618, %v2762
    %v2827 = vsel %vm2699, %v2620, %v2763
    %v2828 = vsel %vm2700, %v2172, %v2764
    %v2829 = vsel %vm2701, %v2174, %v2765
    %v2830 = vsel %vm2702, %v2624, %v2766
    %v2831 = vsel %vm2703, %v2626, %v2767
    %v2832 = vsel %vm2704, %v2176, %v2768
    %v2833 = vsel %vm2705, %v2178, %v2769
    %v2834 = vsel %vm2706, %v2628, %v2770
    %v2835 = vsel %vm2707, %v2630, %v2771
    %v2836 = vsel %vm2708, %v2182, %v2772
    %v2837 = vsel %vm2709, %v2184, %v2773
    %v2838 = vsel %vm2710, %v2634, %v2774
    %v2839 = vsel %vm2711, %v2636, %v2775
    %v2840 = vsel %vm2712, %v2186, %v2776
    %v2841 = vsel %vm2713, %v2188, %v2777
    %v2842 = vsel %vm2714, %v2638, %v2778
    %v2843 = vsel %vm2715, %v2640, %v2779
    %v2844 = vsel %vm2716, %v2192, %v2780
    %v2845 = vsel %vm2717, %v2194, %v2781
    %v2846 = vsel %vm2718, %v2644, %v2782
    %v2847 = vsel %vm2719, %v2646, %v2783
    %v2848 = vsel %vm2720, %v2196, %v2784
    %v2849 = vsel %vm2721, %v2198, %v2785
    %v2850 = vsel %vm2722, %v2648, %v2786
    %v2851 = vsel %vm2723, %v2650, %v2787
    %v2852 = vsel %vm2724, %v2202, %v2788
    %v2853 = vsel %vm2725, %v2204, %v2789
    %v2854 = vsel %vm2726, %v2654, %v2790
    %v2855 = vsel %vm2727, %v2656, %v2791
    %v2856 = vsel %vm2728, %v2206, %v2792
    %v2857 = vsel %vm2729, %v2208, %v2793
    %v2858 = vsel %vm2730, %v2658, %v2794
    %v2859 = vsel %vm2731, %v2660, %v2795
    %v2860 = vsel %vm2732, %v2212, %v2796
    %v2861 = vsel %vm2733, %v2214, %v2797
    %v2862 = vsel %vm2734, %v2664, %v2798
    %v2863 = vsel %vm2735, %v2666, %v2799
    %v2864 = vsel %vm2736, %v2216, %v2800
    %v2865 = vsel %vm2737, %v2218, %v2801
    %v2866 = vsel %vm2738, %v2668, %v2802
    %v2867 = vsel %vm2739, %v2670, %v2803
    %v2868 = vsel %vm2740, %v2222, %v2804
    %v2869 = vsel %vm2741, %v2224, %v2805
    %v2870 = vsel %vm2742, %v2674, %v2806
    %v2871 = vsel %vm2743, %v2676, %v2807
    %v2872 = vsel %vm2744, %v2226, %v2808
    %v2873 = vsel %vm2745, %v2228, %v2809
    %v2874 = vsel %vm2746, %v2678, %v2810
    %v2875 = vsel %vm2747, %v2680, %v2811
    %v2876 = vsel %vm2748, %v2232, %v2812
    %v2877 = vsel %vm2749, %v2234, %v2813
    %v2878 = vsel %vm2750, %v2684, %v2814
    %v2879 = vsel %vm2751, %v2686, %v2815
    %v2880 = vsel %vm2752, %v2236, %v2816
    %v2881 = vsel %vm2753, %v2238, %v2817
    %v2882 = vsel %vm2754, %v2688, %v2818
    %v2883 = vsel %vm2755, %v2690, %v2819
    %v2884 = vpack.c.bf16 %v2824, %v2820
    %v2885 = vpack.c.bf16 %v2825, %v2821
    %v2886 = vpack.c.bf16 %v2826, %v2822
    %v2887 = vpack.c.bf16 %v2827, %v2823
    %v2888 = vpack.c.bf16 %v2832, %v2828
    %v2889 = vpack.c.bf16 %v2833, %v2829
    %v2890 = vpack.c.bf16 %v2834, %v2830
    %v2891 = vpack.c.bf16 %v2835, %v2831
    %v2892 = vpack.c.bf16 %v2840, %v2836
    %v2893 = vpack.c.bf16 %v2841, %v2837
    %v2894 = vpack.c.bf16 %v2842, %v2838
    %v2895 = vpack.c.bf16 %v2843, %v2839
    %v2896 = vpack.c.bf16 %v2848, %v2844
    %v2897 = vpack.c.bf16 %v2849, %v2845
    %v2898 = vpack.c.bf16 %v2850, %v2846
    %v2899 = vpack.c.bf16 %v2851, %v2847
    %v2900 = vpack.c.bf16 %v2856, %v2852
    %v2901 = vpack.c.bf16 %v2857, %v2853
    %v2902 = vpack.c.bf16 %v2858, %v2854
    %v2903 = vpack.c.bf16 %v2859, %v2855
    %v2904 = vpack.c.bf16 %v2864, %v2860
    %v2905 = vpack.c.bf16 %v2865, %v2861
    %v2906 = vpack.c.bf16 %v2866, %v2862
    %v2907 = vpack.c.bf16 %v2867, %v2863
    %v2908 = vpack.c.bf16 %v2872, %v2868
    %v2909 = vpack.c.bf16 %v2873, %v2869
    %v2910 = vpack.c.bf16 %v2874, %v2870
    %v2911 = vpack.c.bf16 %v2875, %v2871
    %v2912 = vpack.c.bf16 %v2880, %v2876
    %v2913 = vpack.c.bf16 %v2881, %v2877
    %v2914 = vpack.c.bf16 %v2882, %v2878
    %v2915 = vpack.c.bf16 %v2883, %v2879
    %v2916 = vld [vmem:[#allocation7] sm:$0xff]
    %v2917 = vld [vmem:[#allocation7 + $0x8] sm:$0xff]
    %v2918 = vld [vmem:[#allocation7 + $0x10] sm:$0xff]
    %v2919 = vld [vmem:[#allocation7 + $0x18] sm:$0xff]
    %v2920 = vld [vmem:[#allocation7 + $0x20] sm:$0xff]
    %v2921 = vld [vmem:[#allocation7 + $0x28] sm:$0xff]
    %v2922 = vld [vmem:[#allocation7 + $0x30] sm:$0xff]
    %v2923 = vld [vmem:[#allocation7 + $0x38] sm:$0xff]
    %v2924 = vld [vmem:[#allocation7 + $0x40] sm:$0xff]
    %v2925 = vld [vmem:[#allocation7 + $0x48] sm:$0xff]
    %v2926 = vld [vmem:[#allocation7 + $0x50] sm:$0xff]
    %v2927 = vld [vmem:[#allocation7 + $0x58] sm:$0xff]
    %v2928 = vld [vmem:[#allocation7 + $0x60] sm:$0xff]
    %v2929 = vld [vmem:[#allocation7 + $0x68] sm:$0xff]
    %v2930 = vld [vmem:[#allocation7 + $0x70] sm:$0xff]
    %v2931 = vld [vmem:[#allocation7 + $0x78] sm:$0xff]
    %v2932 = vld [vmem:[#allocation7 + $0x80] sm:$0xff]
    %v2933 = vld [vmem:[#allocation7 + $0x88] sm:$0xff]
    %v2934 = vld [vmem:[#allocation7 + $0x90] sm:$0xff]
    %v2935 = vld [vmem:[#allocation7 + $0x98] sm:$0xff]
    %v2936 = vld [vmem:[#allocation7 + $0xa0] sm:$0xff]
    %v2937 = vld [vmem:[#allocation7 + $0xa8] sm:$0xff]
    %v2938 = vld [vmem:[#allocation7 + $0xb0] sm:$0xff]
    %v2939 = vld [vmem:[#allocation7 + $0xb8] sm:$0xff]
    %v2940 = vld [vmem:[#allocation7 + $0xc0] sm:$0xff]
    %v2941 = vld [vmem:[#allocation7 + $0xc8] sm:$0xff]
    %v2942 = vld [vmem:[#allocation7 + $0xd0] sm:$0xff]
    %v2943 = vld [vmem:[#allocation7 + $0xd8] sm:$0xff]
    %v2944 = vld [vmem:[#allocation7 + $0xe0] sm:$0xff]
    %v2945 = vld [vmem:[#allocation7 + $0xe8] sm:$0xff]
    %v2946 = vld [vmem:[#allocation7 + $0xf0] sm:$0xff]
    %v2947 = vld [vmem:[#allocation7 + $0xf8] sm:$0xff]
    %v2948 = vld [vmem:[#allocation7 + $0x100] sm:$0xff]
    %v2949 = vld [vmem:[#allocation7 + $0x108] sm:$0xff]
    %v2950 = vld [vmem:[#allocation7 + $0x110] sm:$0xff]
    %v2951 = vld [vmem:[#allocation7 + $0x118] sm:$0xff]
    %v2952 = vld [vmem:[#allocation7 + $0x120] sm:$0xff]
    %v2953 = vld [vmem:[#allocation7 + $0x128] sm:$0xff]
    %v2954 = vld [vmem:[#allocation7 + $0x130] sm:$0xff]
    %v2955 = vld [vmem:[#allocation7 + $0x138] sm:$0xff]
    %v2956 = vld [vmem:[#allocation7 + $0x140] sm:$0xff]
    %v2957 = vld [vmem:[#allocation7 + $0x148] sm:$0xff]
    %v2958 = vld [vmem:[#allocation7 + $0x150] sm:$0xff]
    %v2959 = vld [vmem:[#allocation7 + $0x158] sm:$0xff]
    %v2960 = vld [vmem:[#allocation7 + $0x160] sm:$0xff]
    %v2961 = vld [vmem:[#allocation7 + $0x168] sm:$0xff]
    %v2962 = vld [vmem:[#allocation7 + $0x170] sm:$0xff]
    %v2963 = vld [vmem:[#allocation7 + $0x178] sm:$0xff]
    %v2964 = vld [vmem:[#allocation7 + $0x180] sm:$0xff]
    %v2965 = vld [vmem:[#allocation7 + $0x188] sm:$0xff]
    %v2966 = vld [vmem:[#allocation7 + $0x190] sm:$0xff]
    %v2967 = vld [vmem:[#allocation7 + $0x198] sm:$0xff]
    %v2968 = vld [vmem:[#allocation7 + $0x1a0] sm:$0xff]
    %v2969 = vld [vmem:[#allocation7 + $0x1a8] sm:$0xff]
    %v2970 = vld [vmem:[#allocation7 + $0x1b0] sm:$0xff]
    %v2971 = vld [vmem:[#allocation7 + $0x1b8] sm:$0xff]
    %v2972 = vld [vmem:[#allocation7 + $0x1c0] sm:$0xff]
    %v2973 = vld [vmem:[#allocation7 + $0x1c8] sm:$0xff]
    %v2974 = vld [vmem:[#allocation7 + $0x1d0] sm:$0xff]
    %v2975 = vld [vmem:[#allocation7 + $0x1d8] sm:$0xff]
    %v2976 = vld [vmem:[#allocation7 + $0x1e0] sm:$0xff]
    %v2977 = vld [vmem:[#allocation7 + $0x1e8] sm:$0xff]
    %v2978 = vld [vmem:[#allocation7 + $0x1f0] sm:$0xff]
    %v2979 = vld [vmem:[#allocation7 + $0x1f8] sm:$0xff]
    %v2980 = vld [vmem:[%s4] sm:$0x3]
    %v2982 = vlaneseq
    %v2983 = vshrl.u32 %v2982, 7
    %v2984 = vsub.s32 0, %v2983
    %v2985 = vrot.slane %v2980, %v2984
    %v2986 = vlaneseq
    %v2987 = vshrl.u32 %v2986, 7
    %v2988 = vsub.s32 1, %v2987
    %v2989 = vrot.slane %v2980, %v2988
    %v3056 = vunpack.c.l.b16 %v2916
    %v3057 = vunpack.c.h.b16 %v2916
    %v3058 = vunpack.c.l.b16 %v2917
    %v3059 = vunpack.c.h.b16 %v2917
    %v3060 = vunpack.c.l.b16 %v2918
    %v3061 = vunpack.c.h.b16 %v2918
    %v3062 = vunpack.c.l.b16 %v2919
    %v3063 = vunpack.c.h.b16 %v2919
    %v3064 = vunpack.c.l.b16 %v2920
    %v3065 = vunpack.c.h.b16 %v2920
    %v3066 = vunpack.c.l.b16 %v2921
    %v3067 = vunpack.c.h.b16 %v2921
    %v3068 = vunpack.c.l.b16 %v2922
    %v3069 = vunpack.c.h.b16 %v2922
    %v3070 = vunpack.c.l.b16 %v2923
    %v3071 = vunpack.c.h.b16 %v2923
    %v3072 = vunpack.c.l.b16 %v2924
    %v3073 = vunpack.c.h.b16 %v2924
    %v3074 = vunpack.c.l.b16 %v2925
    %v3075 = vunpack.c.h.b16 %v2925
    %v3076 = vunpack.c.l.b16 %v2926
    %v3077 = vunpack.c.h.b16 %v2926
    %v3078 = vunpack.c.l.b16 %v2927
    %v3079 = vunpack.c.h.b16 %v2927
    %v3080 = vunpack.c.l.b16 %v2928
    %v3081 = vunpack.c.h.b16 %v2928
    %v3082 = vunpack.c.l.b16 %v2929
    %v3083 = vunpack.c.h.b16 %v2929
    %v3084 = vunpack.c.l.b16 %v2930
    %v3085 = vunpack.c.h.b16 %v2930
    %v3086 = vunpack.c.l.b16 %v2931
    %v3087 = vunpack.c.h.b16 %v2931
    %v3088 = vunpack.c.l.b16 %v2932
    %v3089 = vunpack.c.h.b16 %v2932
    %v3090 = vunpack.c.l.b16 %v2933
    %v3091 = vunpack.c.h.b16 %v2933
    %v3092 = vunpack.c.l.b16 %v2934
    %v3093 = vunpack.c.h.b16 %v2934
    %v3094 = vunpack.c.l.b16 %v2935
    %v3095 = vunpack.c.h.b16 %v2935
    %v3096 = vunpack.c.l.b16 %v2936
    %v3097 = vunpack.c.h.b16 %v2936
    %v3098 = vunpack.c.l.b16 %v2937
    %v3099 = vunpack.c.h.b16 %v2937
    %v3100 = vunpack.c.l.b16 %v2938
    %v3101 = vunpack.c.h.b16 %v2938
    %v3102 = vunpack.c.l.b16 %v2939
    %v3103 = vunpack.c.h.b16 %v2939
    %v3104 = vunpack.c.l.b16 %v2940
    %v3105 = vunpack.c.h.b16 %v2940
    %v3106 = vunpack.c.l.b16 %v2941
    %v3107 = vunpack.c.h.b16 %v2941
    %v3108 = vunpack.c.l.b16 %v2942
    %v3109 = vunpack.c.h.b16 %v2942
    %v3110 = vunpack.c.l.b16 %v2943
    %v3111 = vunpack.c.h.b16 %v2943
    %v3112 = vunpack.c.l.b16 %v2944
    %v3113 = vunpack.c.h.b16 %v2944
    %v3114 = vunpack.c.l.b16 %v2945
    %v3115 = vunpack.c.h.b16 %v2945
    %v3116 = vunpack.c.l.b16 %v2946
    %v3117 = vunpack.c.h.b16 %v2946
    %v3118 = vunpack.c.l.b16 %v2947
    %v3119 = vunpack.c.h.b16 %v2947
    %v3120 = vunpack.c.l.b16 %v2948
    %v3121 = vunpack.c.h.b16 %v2948
    %v3122 = vunpack.c.l.b16 %v2949
    %v3123 = vunpack.c.h.b16 %v2949
    %v3124 = vunpack.c.l.b16 %v2950
    %v3125 = vunpack.c.h.b16 %v2950
    %v3126 = vunpack.c.l.b16 %v2951
    %v3127 = vunpack.c.h.b16 %v2951
    %v3128 = vunpack.c.l.b16 %v2952
    %v3129 = vunpack.c.h.b16 %v2952
    %v3130 = vunpack.c.l.b16 %v2953
    %v3131 = vunpack.c.h.b16 %v2953
    %v3132 = vunpack.c.l.b16 %v2954
    %v3133 = vunpack.c.h.b16 %v2954
    %v3134 = vunpack.c.l.b16 %v2955
    %v3135 = vunpack.c.h.b16 %v2955
    %v3136 = vunpack.c.l.b16 %v2956
    %v3137 = vunpack.c.h.b16 %v2956
    %v3138 = vunpack.c.l.b16 %v2957
    %v3139 = vunpack.c.h.b16 %v2957
    %v3140 = vunpack.c.l.b16 %v2958
    %v3141 = vunpack.c.h.b16 %v2958
    %v3142 = vunpack.c.l.b16 %v2959
    %v3143 = vunpack.c.h.b16 %v2959
    %v3144 = vunpack.c.l.b16 %v2960
    %v3145 = vunpack.c.h.b16 %v2960
    %v3146 = vunpack.c.l.b16 %v2961
    %v3147 = vunpack.c.h.b16 %v2961
    %v3148 = vunpack.c.l.b16 %v2962
    %v3149 = vunpack.c.h.b16 %v2962
    %v3150 = vunpack.c.l.b16 %v2963
    %v3151 = vunpack.c.h.b16 %v2963
    %v3152 = vunpack.c.l.b16 %v2964
    %v3153 = vunpack.c.h.b16 %v2964
    %v3154 = vunpack.c.l.b16 %v2965
    %v3155 = vunpack.c.h.b16 %v2965
    %v3156 = vunpack.c.l.b16 %v2966
    %v3157 = vunpack.c.h.b16 %v2966
    %v3158 = vunpack.c.l.b16 %v2967
    %v3159 = vunpack.c.h.b16 %v2967
    %v3160 = vunpack.c.l.b16 %v2968
    %v3161 = vunpack.c.h.b16 %v2968
    %v3162 = vunpack.c.l.b16 %v2969
    %v3163 = vunpack.c.h.b16 %v2969
    %v3164 = vunpack.c.l.b16 %v2970
    %v3165 = vunpack.c.h.b16 %v2970
    %v3166 = vunpack.c.l.b16 %v2971
    %v3167 = vunpack.c.h.b16 %v2971
    %v3168 = vunpack.c.l.b16 %v2972
    %v3169 = vunpack.c.h.b16 %v2972
    %v3170 = vunpack.c.l.b16 %v2973
    %v3171 = vunpack.c.h.b16 %v2973
    %v3172 = vunpack.c.l.b16 %v2974
    %v3173 = vunpack.c.h.b16 %v2974
    %v3174 = vunpack.c.l.b16 %v2975
    %v3175 = vunpack.c.h.b16 %v2975
    %v3176 = vunpack.c.l.b16 %v2976
    %v3177 = vunpack.c.h.b16 %v2976
    %v3178 = vunpack.c.l.b16 %v2977
    %v3179 = vunpack.c.h.b16 %v2977
    %v3180 = vunpack.c.l.b16 %v2978
    %v3181 = vunpack.c.h.b16 %v2978
    %v3182 = vunpack.c.l.b16 %v2979
    %v3183 = vunpack.c.h.b16 %v2979
    %v3184 = vpack.c.b16 %v3058, %v3056
    %v3185 = vpack.c.b16 %v3059, %v3057
    %v3186 = vpack.c.b16 %v3062, %v3060
    %v3187 = vpack.c.b16 %v3063, %v3061
    %v3188 = vpack.c.b16 %v3066, %v3064
    %v3189 = vpack.c.b16 %v3067, %v3065
    %v3190 = vpack.c.b16 %v3070, %v3068
    %v3191 = vpack.c.b16 %v3071, %v3069
    %v3192 = vpack.c.b16 %v3074, %v3072
    %v3193 = vpack.c.b16 %v3075, %v3073
    %v3194 = vpack.c.b16 %v3078, %v3076
    %v3195 = vpack.c.b16 %v3079, %v3077
    %v3196 = vpack.c.b16 %v3082, %v3080
    %v3197 = vpack.c.b16 %v3083, %v3081
    %v3198 = vpack.c.b16 %v3086, %v3084
    %v3199 = vpack.c.b16 %v3087, %v3085
    %v3200 = vpack.c.b16 %v3090, %v3088
    %v3201 = vpack.c.b16 %v3091, %v3089
    %v3202 = vpack.c.b16 %v3094, %v3092
    %v3203 = vpack.c.b16 %v3095, %v3093
    %v3204 = vpack.c.b16 %v3098, %v3096
    %v3205 = vpack.c.b16 %v3099, %v3097
    %v3206 = vpack.c.b16 %v3102, %v3100
    %v3207 = vpack.c.b16 %v3103, %v3101
    %v3208 = vpack.c.b16 %v3106, %v3104
    %v3209 = vpack.c.b16 %v3107, %v3105
    %v3210 = vpack.c.b16 %v3110, %v3108
    %v3211 = vpack.c.b16 %v3111, %v3109
    %v3212 = vpack.c.b16 %v3114, %v3112
    %v3213 = vpack.c.b16 %v3115, %v3113
    %v3214 = vpack.c.b16 %v3118, %v3116
    %v3215 = vpack.c.b16 %v3119, %v3117
    %v3216 = vpack.c.b16 %v3122, %v3120
    %v3217 = vpack.c.b16 %v3123, %v3121
    %v3218 = vpack.c.b16 %v3126, %v3124
    %v3219 = vpack.c.b16 %v3127, %v3125
    %v3220 = vpack.c.b16 %v3130, %v3128
    %v3221 = vpack.c.b16 %v3131, %v3129
    %v3222 = vpack.c.b16 %v3134, %v3132
    %v3223 = vpack.c.b16 %v3135, %v3133
    %v3224 = vpack.c.b16 %v3138, %v3136
    %v3225 = vpack.c.b16 %v3139, %v3137
    %v3226 = vpack.c.b16 %v3142, %v3140
    %v3227 = vpack.c.b16 %v3143, %v3141
    %v3228 = vpack.c.b16 %v3146, %v3144
    %v3229 = vpack.c.b16 %v3147, %v3145
    %v3230 = vpack.c.b16 %v3150, %v3148
    %v3231 = vpack.c.b16 %v3151, %v3149
    %v3232 = vpack.c.b16 %v3154, %v3152
    %v3233 = vpack.c.b16 %v3155, %v3153
    %v3234 = vpack.c.b16 %v3158, %v3156
    %v3235 = vpack.c.b16 %v3159, %v3157
    %v3236 = vpack.c.b16 %v3162, %v3160
    %v3237 = vpack.c.b16 %v3163, %v3161
    %v3238 = vpack.c.b16 %v3166, %v3164
    %v3239 = vpack.c.b16 %v3167, %v3165
    %v3240 = vpack.c.b16 %v3170, %v3168
    %v3241 = vpack.c.b16 %v3171, %v3169
    %v3242 = vpack.c.b16 %v3174, %v3172
    %v3243 = vpack.c.b16 %v3175, %v3173
    %v3244 = vpack.c.b16 %v3178, %v3176
    %v3245 = vpack.c.b16 %v3179, %v3177
    %v3246 = vpack.c.b16 %v3182, %v3180
    %v3247 = vpack.c.b16 %v3183, %v3181
    %3312 = vmatprep.subr.bf16.mxu0 %v3185
    %3313 = vmatpush1.bf16.msra.mxu0 %v3184
    %3314 = vmatprep.subr.bf16.mxu0 %v3187
    %3315 = vmatpush1.bf16.msra.mxu0 %v3186
    %3316 = vmatprep.subr.bf16.mxu0 %v3189
    %3317 = vmatpush1.bf16.msra.mxu0 %v3188
    %3318 = vmatprep.subr.bf16.mxu0 %v3191
    %3319 = vmatpush1.bf16.msra.mxu0 %v3190
    %3320 = vmatprep.subr.bf16.mxu0 %v3193
    %3321 = vmatpush1.bf16.msra.mxu0 %v3192
    %3322 = vmatprep.subr.bf16.mxu0 %v3195
    %3323 = vmatpush1.bf16.msra.mxu0 %v3194
    %3324 = vmatprep.subr.bf16.mxu0 %v3197
    %3325 = vmatpush1.bf16.msra.mxu0 %v3196
    %3326 = vmatprep.subr.bf16.mxu0 %v3199
    %3327 = vmatpush1.bf16.msra.mxu0 %v3198
    %3328 = vmatprep.subr.bf16.mxu0 %v3201
    %3329 = vmatpush1.bf16.msra.mxu0 %v3200
    %3330 = vmatprep.subr.bf16.mxu0 %v3203
    %3331 = vmatpush1.bf16.msra.mxu0 %v3202
    %3332 = vmatprep.subr.bf16.mxu0 %v3205
    %3333 = vmatpush1.bf16.msra.mxu0 %v3204
    %3334 = vmatprep.subr.bf16.mxu0 %v3207
    %3335 = vmatpush1.bf16.msra.mxu0 %v3206
    %3336 = vmatprep.subr.bf16.mxu0 %v3209
    %3337 = vmatpush1.bf16.msra.mxu0 %v3208
    %3338 = vmatprep.subr.bf16.mxu0 %v3211
    %3339 = vmatpush1.bf16.msra.mxu0 %v3210
    %3340 = vmatprep.subr.bf16.mxu0 %v3213
    %3341 = vmatpush1.bf16.msra.mxu0 %v3212
    %3342 = vmatprep.subr.bf16.mxu0 %v3215
    %3343 = vmatpush1.bf16.msra.mxu0 %v3214
    %3344 = vmatprep.mubr.bf16.mxu0 %v2885
    %3345 = vmatmul.mubr.bf16.gmra.mrb[0].mxu0 %v2884
    %v3346 = vpop.f32.mrb[0].mxu0
    %v3347 = vadd.f32 %v2985, %v3346
    %v3348 = vpop.f32.mrb[0].mxu0
    %v3349 = vadd.f32 %v2989, %v3348
    %v3350 = vpop.f32.mrb[0].mxu0
    %v3351 = vadd.f32 %v2985, %v3350
    %v3352 = vpop.f32.mrb[0].mxu0
    %v3353 = vadd.f32 %v2989, %v3352
    %3354 = vmatprep.mubr.bf16.mxu0 %v2889
    %3355 = vmatmul.mubr.bf16.gmra.mrb[0].mxu0 %v2888
    %v3356 = vpop.f32.mrb[0].mxu0
    %v3357 = vadd.f32 %v2985, %v3356
    %v3358 = vpop.f32.mrb[0].mxu0
    %v3359 = vadd.f32 %v2989, %v3358
    %v3360 = vpop.f32.mrb[0].mxu0
    %v3361 = vadd.f32 %v2985, %v3360
    %v3362 = vpop.f32.mrb[0].mxu0
    %v3363 = vadd.f32 %v2989, %v3362
    %3364 = vmatprep.mubr.bf16.mxu0 %v2893
    %3365 = vmatmul.mubr.bf16.gmra.mrb[0].mxu0 %v2892
    %v3366 = vpop.f32.mrb[0].mxu0
    %v3367 = vadd.f32 %v2985, %v3366
    %v3368 = vpop.f32.mrb[0].mxu0
    %v3369 = vadd.f32 %v2989, %v3368
    %v3370 = vpop.f32.mrb[0].mxu0
    %v3371 = vadd.f32 %v2985, %v3370
    %v3372 = vpop.f32.mrb[0].mxu0
    %v3373 = vadd.f32 %v2989, %v3372
    %3374 = vmatprep.mubr.bf16.mxu0 %v2897
    %3375 = vmatmul.mubr.bf16.gmra.mrb[0].mxu0 %v2896
    %v3376 = vpop.f32.mrb[0].mxu0
    %v3377 = vadd.f32 %v2985, %v3376
    %v3378 = vpop.f32.mrb[0].mxu0
    %v3379 = vadd.f32 %v2989, %v3378
    %v3380 = vpop.f32.mrb[0].mxu0
    %v3381 = vadd.f32 %v2985, %v3380
    %v3382 = vpop.f32.mrb[0].mxu0
    %v3383 = vadd.f32 %v2989, %v3382
    %3384 = vmatprep.mubr.bf16.mxu0 %v2901
    %3385 = vmatmul.mubr.bf16.gmra.mrb[0].mxu0 %v2900
    %v3386 = vpop.f32.mrb[0].mxu0
    %v3387 = vadd.f32 %v2985, %v3386
    %v3388 = vpop.f32.mrb[0].mxu0
    %v3389 = vadd.f32 %v2989, %v3388
    %v3390 = vpop.f32.mrb[0].mxu0
    %v3391 = vadd.f32 %v2985, %v3390
    %v3392 = vpop.f32.mrb[0].mxu0
    %v3393 = vadd.f32 %v2989, %v3392
    %3394 = vmatprep.mubr.bf16.mxu0 %v2905
    %3395 = vmatmul.mubr.bf16.gmra.mrb[0].mxu0 %v2904
    %v3396 = vpop.f32.mrb[0].mxu0
    %v3397 = vadd.f32 %v2985, %v3396
    %v3398 = vpop.f32.mrb[0].mxu0
    %v3399 = vadd.f32 %v2989, %v3398
    %v3400 = vpop.f32.mrb[0].mxu0
    %v3401 = vadd.f32 %v2985, %v3400
    %v3402 = vpop.f32.mrb[0].mxu0
    %v3403 = vadd.f32 %v2989, %v3402
    %3404 = vmatprep.mubr.bf16.mxu0 %v2909
    %3405 = vmatmul.mubr.bf16.gmra.mrb[0].mxu0 %v2908
    %v3406 = vpop.f32.mrb[0].mxu0
    %v3407 = vadd.f32 %v2985, %v3406
    %v3408 = vpop.f32.mrb[0].mxu0
    %v3409 = vadd.f32 %v2989, %v3408
    %v3410 = vpop.f32.mrb[0].mxu0
    %v3411 = vadd.f32 %v2985, %v3410
    %v3412 = vpop.f32.mrb[0].mxu0
    %v3413 = vadd.f32 %v2989, %v3412
    %3414 = vmatprep.mubr.bf16.mxu0 %v2913
    %3415 = vmatmul.mubr.bf16.gmra.mrb[0].mxu0 %v2912
    %v3416 = vpop.f32.mrb[0].mxu0
    %v3417 = vadd.f32 %v2985, %v3416
    %v3418 = vpop.f32.mrb[0].mxu0
    %v3419 = vadd.f32 %v2989, %v3418
    %v3420 = vpop.f32.mrb[0].mxu0
    %v3421 = vadd.f32 %v2985, %v3420
    %v3422 = vpop.f32.mrb[0].mxu0
    %v3423 = vadd.f32 %v2989, %v3422
    %3424 = vdwg.mxu0
    %3425 = vmatprep.subr.bf16.mxu0 %v3217
    %3426 = vmatpush1.bf16.msra.mxu0 %v3216
    %3427 = vmatprep.subr.bf16.mxu0 %v3219
    %3428 = vmatpush1.bf16.msra.mxu0 %v3218
    %3429 = vmatprep.subr.bf16.mxu0 %v3221
    %3430 = vmatpush1.bf16.msra.mxu0 %v3220
    %3431 = vmatprep.subr.bf16.mxu0 %v3223
    %3432 = vmatpush1.bf16.msra.mxu0 %v3222
    %3433 = vmatprep.subr.bf16.mxu0 %v3225
    %3434 = vmatpush1.bf16.msra.mxu0 %v3224
    %3435 = vmatprep.subr.bf16.mxu0 %v3227
    %3436 = vmatpush1.bf16.msra.mxu0 %v3226
    %3437 = vmatprep.subr.bf16.mxu0 %v3229
    %3438 = vmatpush1.bf16.msra.mxu0 %v3228
    %3439 = vmatprep.subr.bf16.mxu0 %v3231
    %3440 = vmatpush1.bf16.msra.mxu0 %v3230
    %3441 = vmatprep.subr.bf16.mxu0 %v3233
    %3442 = vmatpush1.bf16.msra.mxu0 %v3232
    %3443 = vmatprep.subr.bf16.mxu0 %v3235
    %3444 = vmatpush1.bf16.msra.mxu0 %v3234
    %3445 = vmatprep.subr.bf16.mxu0 %v3237
    %3446 = vmatpush1.bf16.msra.mxu0 %v3236
    %3447 = vmatprep.subr.bf16.mxu0 %v3239
    %3448 = vmatpush1.bf16.msra.mxu0 %v3238
    %3449 = vmatprep.subr.bf16.mxu0 %v3241
    %3450 = vmatpush1.bf16.msra.mxu0 %v3240
    %3451 = vmatprep.subr.bf16.mxu0 %v3243
    %3452 = vmatpush1.bf16.msra.mxu0 %v3242
    %3453 = vmatprep.subr.bf16.mxu0 %v3245
    %3454 = vmatpush1.bf16.msra.mxu0 %v3244
    %3455 = vmatprep.subr.bf16.mxu0 %v3247
    %3456 = vmatpush1.bf16.msra.mxu0 %v3246
    %3457 = vmatprep.mubr.bf16.mxu0 %v2887
    %3458 = vmatmul.mubr.bf16.gmra.mrb[0].mxu0 %v2886
    %v3459 = vpop.f32.mrb[0].mxu0
    %v3460 = vadd.f32 %v3347, %v3459
    %v3461 = vpop.f32.mrb[0].mxu0
    %v3462 = vadd.f32 %v3349, %v3461
    %v3463 = vpop.f32.mrb[0].mxu0
    %v3464 = vadd.f32 %v3351, %v3463
    %v3465 = vpop.f32.mrb[0].mxu0
    %v3466 = vadd.f32 %v3353, %v3465
    %3467 = vmatprep.mubr.bf16.mxu0 %v2891
    %3468 = vmatmul.mubr.bf16.gmra.mrb[0].mxu0 %v2890
    %v3469 = vpop.f32.mrb[0].mxu0
    %v3470 = vadd.f32 %v3357, %v3469
    %v3471 = vpop.f32.mrb[0].mxu0
    %v3472 = vadd.f32 %v3359, %v3471
    %v3473 = vpop.f32.mrb[0].mxu0
    %v3474 = vadd.f32 %v3361, %v3473
    %v3475 = vpop.f32.mrb[0].mxu0
    %v3476 = vadd.f32 %v3363, %v3475
    %3477 = vmatprep.mubr.bf16.mxu0 %v2895
    %3478 = vmatmul.mubr.bf16.gmra.mrb[0].mxu0 %v2894
    %v3479 = vpop.f32.mrb[0].mxu0
    %v3480 = vadd.f32 %v3367, %v3479
    %v3481 = vpop.f32.mrb[0].mxu0
    %v3482 = vadd.f32 %v3369, %v3481
    %v3483 = vpop.f32.mrb[0].mxu0
    %v3484 = vadd.f32 %v3371, %v3483
    %v3485 = vpop.f32.mrb[0].mxu0
    %v3486 = vadd.f32 %v3373, %v3485
    %3487 = vmatprep.mubr.bf16.mxu0 %v2899
    %3488 = vmatmul.mubr.bf16.gmra.mrb[0].mxu0 %v2898
    %v3489 = vpop.f32.mrb[0].mxu0
    %v3490 = vadd.f32 %v3377, %v3489
    %v3491 = vpop.f32.mrb[0].mxu0
    %v3492 = vadd.f32 %v3379, %v3491
    %v3493 = vpop.f32.mrb[0].mxu0
    %v3494 = vadd.f32 %v3381, %v3493
    %v3495 = vpop.f32.mrb[0].mxu0
    %v3496 = vadd.f32 %v3383, %v3495
    %3497 = vmatprep.mubr.bf16.mxu0 %v2903
    %3498 = vmatmul.mubr.bf16.gmra.mrb[0].mxu0 %v2902
    %v3499 = vpop.f32.mrb[0].mxu0
    %v3500 = vadd.f32 %v3387, %v3499
    %v3501 = vpop.f32.mrb[0].mxu0
    %v3502 = vadd.f32 %v3389, %v3501
    %v3503 = vpop.f32.mrb[0].mxu0
    %v3504 = vadd.f32 %v3391, %v3503
    %v3505 = vpop.f32.mrb[0].mxu0
    %v3506 = vadd.f32 %v3393, %v3505
    %3507 = vmatprep.mubr.bf16.mxu0 %v2907
    %3508 = vmatmul.mubr.bf16.gmra.mrb[0].mxu0 %v2906
    %v3509 = vpop.f32.mrb[0].mxu0
    %v3510 = vadd.f32 %v3397, %v3509
    %v3511 = vpop.f32.mrb[0].mxu0
    %v3512 = vadd.f32 %v3399, %v3511
    %v3513 = vpop.f32.mrb[0].mxu0
    %v3514 = vadd.f32 %v3401, %v3513
    %v3515 = vpop.f32.mrb[0].mxu0
    %v3516 = vadd.f32 %v3403, %v3515
    %3517 = vmatprep.mubr.bf16.mxu0 %v2911
    %3518 = vmatmul.mubr.bf16.gmra.mrb[0].mxu0 %v2910
    %v3519 = vpop.f32.mrb[0].mxu0
    %v3520 = vadd.f32 %v3407, %v3519
    %v3521 = vpop.f32.mrb[0].mxu0
    %v3522 = vadd.f32 %v3409, %v3521
    %v3523 = vpop.f32.mrb[0].mxu0
    %v3524 = vadd.f32 %v3411, %v3523
    %v3525 = vpop.f32.mrb[0].mxu0
    %v3526 = vadd.f32 %v3413, %v3525
    %3527 = vmatprep.mubr.bf16.mxu0 %v2915
    %3528 = vmatmul.mubr.bf16.gmra.mrb[0].mxu0 %v2914
    %v3529 = vpop.f32.mrb[0].mxu0
    %v3530 = vadd.f32 %v3417, %v3529
    %v3531 = vpop.f32.mrb[0].mxu0
    %v3532 = vadd.f32 %v3419, %v3531
    %v3533 = vpop.f32.mrb[0].mxu0
    %v3534 = vadd.f32 %v3421, %v3533
    %v3535 = vpop.f32.mrb[0].mxu0
    %v3536 = vadd.f32 %v3423, %v3535
    %3537 = vdwg.mxu0
    %vm3538 = vcmp.gt.f32.partialorder %v3460, 0.0
    %vm3539 = vcmp.gt.f32.partialorder %v3462, 0.0
    %vm3540 = vcmp.gt.f32.partialorder %v3464, 0.0
    %vm3541 = vcmp.gt.f32.partialorder %v3466, 0.0
    %vm3542 = vcmp.gt.f32.partialorder %v3470, 0.0
    %vm3543 = vcmp.gt.f32.partialorder %v3472, 0.0
    %vm3544 = vcmp.gt.f32.partialorder %v3474, 0.0
    %vm3545 = vcmp.gt.f32.partialorder %v3476, 0.0
    %vm3546 = vcmp.gt.f32.partialorder %v3480, 0.0
    %vm3547 = vcmp.gt.f32.partialorder %v3482, 0.0
    %vm3548 = vcmp.gt.f32.partialorder %v3484, 0.0
    %vm3549 = vcmp.gt.f32.partialorder %v3486, 0.0
    %vm3550 = vcmp.gt.f32.partialorder %v3490, 0.0
    %vm3551 = vcmp.gt.f32.partialorder %v3492, 0.0
    %vm3552 = vcmp.gt.f32.partialorder %v3494, 0.0
    %vm3553 = vcmp.gt.f32.partialorder %v3496, 0.0
    %vm3554 = vcmp.gt.f32.partialorder %v3500, 0.0
    %vm3555 = vcmp.gt.f32.partialorder %v3502, 0.0
    %vm3556 = vcmp.gt.f32.partialorder %v3504, 0.0
    %vm3557 = vcmp.gt.f32.partialorder %v3506, 0.0
    %vm3558 = vcmp.gt.f32.partialorder %v3510, 0.0
    %vm3559 = vcmp.gt.f32.partialorder %v3512, 0.0
    %vm3560 = vcmp.gt.f32.partialorder %v3514, 0.0
    %vm3561 = vcmp.gt.f32.partialorder %v3516, 0.0
    %vm3562 = vcmp.gt.f32.partialorder %v3520, 0.0
    %vm3563 = vcmp.gt.f32.partialorder %v3522, 0.0
    %vm3564 = vcmp.gt.f32.partialorder %v3524, 0.0
    %vm3565 = vcmp.gt.f32.partialorder %v3526, 0.0
    %vm3566 = vcmp.gt.f32.partialorder %v3530, 0.0
    %vm3567 = vcmp.gt.f32.partialorder %v3532, 0.0
    %vm3568 = vcmp.gt.f32.partialorder %v3534, 0.0
    %vm3569 = vcmp.gt.f32.partialorder %v3536, 0.0
    %v3570 = vmul.f32 %v3460, 0.2
    %v3571 = vmul.f32 %v3462, 0.2
    %v3572 = vmul.f32 %v3464, 0.2
    %v3573 = vmul.f32 %v3466, 0.2
    %v3574 = vmul.f32 %v3470, 0.2
    %v3575 = vmul.f32 %v3472, 0.2
    %v3576 = vmul.f32 %v3474, 0.2
    %v3577 = vmul.f32 %v3476, 0.2
    %v3578 = vmul.f32 %v3480, 0.2
    %v3579 = vmul.f32 %v3482, 0.2
    %v3580 = vmul.f32 %v3484, 0.2
    %v3581 = vmul.f32 %v3486, 0.2
    %v3582 = vmul.f32 %v3490, 0.2
    %v3583 = vmul.f32 %v3492, 0.2
    %v3584 = vmul.f32 %v3494, 0.2
    %v3585 = vmul.f32 %v3496, 0.2
    %v3586 = vmul.f32 %v3500, 0.2
    %v3587 = vmul.f32 %v3502, 0.2
    %v3588 = vmul.f32 %v3504, 0.2
    %v3589 = vmul.f32 %v3506, 0.2
    %v3590 = vmul.f32 %v3510, 0.2
    %v3591 = vmul.f32 %v3512, 0.2
    %v3592 = vmul.f32 %v3514, 0.2
    %v3593 = vmul.f32 %v3516, 0.2
    %v3594 = vmul.f32 %v3520, 0.2
    %v3595 = vmul.f32 %v3522, 0.2
    %v3596 = vmul.f32 %v3524, 0.2
    %v3597 = vmul.f32 %v3526, 0.2
    %v3598 = vmul.f32 %v3530, 0.2
    %v3599 = vmul.f32 %v3532, 0.2
    %v3600 = vmul.f32 %v3534, 0.2
    %v3601 = vmul.f32 %v3536, 0.2
    %v3602 = vsel %vm3538, %v3460, %v3570
    %v3603 = vsel %vm3539, %v3462, %v3571
    %v3604 = vsel %vm3540, %v3464, %v3572
    %v3605 = vsel %vm3541, %v3466, %v3573
    %v3606 = vsel %vm3542, %v3470, %v3574
    %v3607 = vsel %vm3543, %v3472, %v3575
    %v3608 = vsel %vm3544, %v3474, %v3576
    %v3609 = vsel %vm3545, %v3476, %v3577
    %v3610 = vsel %vm3546, %v3480, %v3578
    %v3611 = vsel %vm3547, %v3482, %v3579
    %v3612 = vsel %vm3548, %v3484, %v3580
    %v3613 = vsel %vm3549, %v3486, %v3581
    %v3614 = vsel %vm3550, %v3490, %v3582
    %v3615 = vsel %vm3551, %v3492, %v3583
    %v3616 = vsel %vm3552, %v3494, %v3584
    %v3617 = vsel %vm3553, %v3496, %v3585
    %v3618 = vsel %vm3554, %v3500, %v3586
    %v3619 = vsel %vm3555, %v3502, %v3587
    %v3620 = vsel %vm3556, %v3504, %v3588
    %v3621 = vsel %vm3557, %v3506, %v3589
    %v3622 = vsel %vm3558, %v3510, %v3590
    %v3623 = vsel %vm3559, %v3512, %v3591
    %v3624 = vsel %vm3560, %v3514, %v3592
    %v3625 = vsel %vm3561, %v3516, %v3593
    %v3626 = vsel %vm3562, %v3520, %v3594
    %v3627 = vsel %vm3563, %v3522, %v3595
    %v3628 = vsel %vm3564, %v3524, %v3596
    %v3629 = vsel %vm3565, %v3526, %v3597
    %v3630 = vsel %vm3566, %v3530, %v3598
    %v3631 = vsel %vm3567, %v3532, %v3599
    %v3632 = vsel %vm3568, %v3534, %v3600
    %v3633 = vsel %vm3569, %v3536, %v3601
    %v3634 = vld [vmem:[%s5] sm:$0x3]
    %v3636 = vlaneseq
    %v3637 = vshrl.u32 %v3636, 7
    %v3638 = vsub.s32 0, %v3637
    %v3639 = vrot.slane %v3634, %v3638
    %v3640 = vlaneseq
    %v3641 = vshrl.u32 %v3640, 7
    %v3642 = vsub.s32 1, %v3641
    %v3643 = vrot.slane %v3634, %v3642
    %v3646 = vmul.f32 %v3602, %v3639
    %v3647 = vmul.f32 %v3603, %v3643
    %v3648 = vmul.f32 %v3604, %v3639
    %v3649 = vmul.f32 %v3605, %v3643
    %v3650 = vmul.f32 %v3606, %v3639
    %v3651 = vmul.f32 %v3607, %v3643
    %v3652 = vmul.f32 %v3608, %v3639
    %v3653 = vmul.f32 %v3609, %v3643
    %v3654 = vmul.f32 %v3610, %v3639
    %v3655 = vmul.f32 %v3611, %v3643
    %v3656 = vmul.f32 %v3612, %v3639
    %v3657 = vmul.f32 %v3613, %v3643
    %v3658 = vmul.f32 %v3614, %v3639
    %v3659 = vmul.f32 %v3615, %v3643
    %v3660 = vmul.f32 %v3616, %v3639
    %v3661 = vmul.f32 %v3617, %v3643
    %v3662 = vmul.f32 %v3618, %v3639
    %v3663 = vmul.f32 %v3619, %v3643
    %v3664 = vmul.f32 %v3620, %v3639
    %v3665 = vmul.f32 %v3621, %v3643
    %v3666 = vmul.f32 %v3622, %v3639
    %v3667 = vmul.f32 %v3623, %v3643
    %v3668 = vmul.f32 %v3624, %v3639
    %v3669 = vmul.f32 %v3625, %v3643
    %v3670 = vmul.f32 %v3626, %v3639
    %v3671 = vmul.f32 %v3627, %v3643
    %v3672 = vmul.f32 %v3628, %v3639
    %v3673 = vmul.f32 %v3629, %v3643
    %v3674 = vmul.f32 %v3630, %v3639
    %v3675 = vmul.f32 %v3631, %v3643
    %v3676 = vmul.f32 %v3632, %v3639
    %v3677 = vmul.f32 %v3633, %v3643
    %v3678 = vadd.f32 %v3646, %v3647
    %3679 = vadd.xlane.f32.xlu0 %v3678
    %v3680 = vpop.xlane.xlu0 %3679
    %v3681 = vadd.f32 %v3648, %v3649
    %3682 = vadd.xlane.f32.xlu0 %v3681
    %v3683 = vpop.xlane.xlu0 %3682
    %v3684 = vadd.f32 %v3650, %v3651
    %3685 = vadd.xlane.f32.xlu0 %v3684
    %v3686 = vpop.xlane.xlu0 %3685
    %v3687 = vadd.f32 %v3652, %v3653
    %3688 = vadd.xlane.f32.xlu0 %v3687
    %v3689 = vpop.xlane.xlu0 %3688
    %v3690 = vadd.f32 %v3654, %v3655
    %3691 = vadd.xlane.f32.xlu0 %v3690
    %v3692 = vpop.xlane.xlu0 %3691
    %v3693 = vadd.f32 %v3656, %v3657
    %3694 = vadd.xlane.f32.xlu0 %v3693
    %v3695 = vpop.xlane.xlu0 %3694
    %v3696 = vadd.f32 %v3658, %v3659
    %3697 = vadd.xlane.f32.xlu0 %v3696
    %v3698 = vpop.xlane.xlu0 %3697
    %v3699 = vadd.f32 %v3660, %v3661
    %3700 = vadd.xlane.f32.xlu0 %v3699
    %v3701 = vpop.xlane.xlu0 %3700
    %v3702 = vadd.f32 %v3662, %v3663
    %3703 = vadd.xlane.f32.xlu0 %v3702
    %v3704 = vpop.xlane.xlu0 %3703
    %v3705 = vadd.f32 %v3664, %v3665
    %3706 = vadd.xlane.f32.xlu0 %v3705
    %v3707 = vpop.xlane.xlu0 %3706
    %v3708 = vadd.f32 %v3666, %v3667
    %3709 = vadd.xlane.f32.xlu0 %v3708
    %v3710 = vpop.xlane.xlu0 %3709
    %v3711 = vadd.f32 %v3668, %v3669
    %3712 = vadd.xlane.f32.xlu0 %v3711
    %v3713 = vpop.xlane.xlu0 %3712
    %v3714 = vadd.f32 %v3670, %v3671
    %3715 = vadd.xlane.f32.xlu0 %v3714
    %v3716 = vpop.xlane.xlu0 %3715
    %v3717 = vadd.f32 %v3672, %v3673
    %3718 = vadd.xlane.f32.xlu0 %v3717
    %v3719 = vpop.xlane.xlu0 %3718
    %v3720 = vadd.f32 %v3674, %v3675
    %3721 = vadd.xlane.f32.xlu0 %v3720
    %v3722 = vpop.xlane.xlu0 %3721
    %v3723 = vadd.f32 %v3676, %v3677
    %3724 = vadd.xlane.f32.xlu0 %v3723
    %v3725 = vpop.xlane.xlu0 %3724
    %v3726 = vld [vmem:[#allocation2] sm:$0x1]
    %v3728 = vlaneseq
    %v3729 = vshrl.u32 %v3728, 7
    %v3730 = vsub.s32 0, %v3729
    %v3731 = vrot.slane %v3726, %v3730
    %v3733 = vadd.f32 %v3680, %v3731
    %v3734 = vadd.f32 %v3683, %v3731
    %v3735 = vadd.f32 %v3686, %v3731
    %v3736 = vadd.f32 %v3689, %v3731
    %v3737 = vadd.f32 %v3692, %v3731
    %v3738 = vadd.f32 %v3695, %v3731
    %v3739 = vadd.f32 %v3698, %v3731
    %v3740 = vadd.f32 %v3701, %v3731
    %v3741 = vadd.f32 %v3704, %v3731
    %v3742 = vadd.f32 %v3707, %v3731
    %v3743 = vadd.f32 %v3710, %v3731
    %v3744 = vadd.f32 %v3713, %v3731
    %v3745 = vadd.f32 %v3716, %v3731
    %v3746 = vadd.f32 %v3719, %v3731
    %v3747 = vadd.f32 %v3722, %v3731
    %v3748 = vadd.f32 %v3725, %v3731
    %v3749 = vxor.u32 %v3733, 2147483648
    %v3750 = vxor.u32 %v3734, 2147483648
    %v3751 = vxor.u32 %v3735, 2147483648
    %v3752 = vxor.u32 %v3736, 2147483648
    %v3753 = vxor.u32 %v3737, 2147483648
    %v3754 = vxor.u32 %v3738, 2147483648
    %v3755 = vxor.u32 %v3739, 2147483648
    %v3756 = vxor.u32 %v3740, 2147483648
    %v3757 = vxor.u32 %v3741, 2147483648
    %v3758 = vxor.u32 %v3742, 2147483648
    %v3759 = vxor.u32 %v3743, 2147483648
    %v3760 = vxor.u32 %v3744, 2147483648
    %v3761 = vxor.u32 %v3745, 2147483648
    %v3762 = vxor.u32 %v3746, 2147483648
    %v3763 = vxor.u32 %v3747, 2147483648
    %v3764 = vxor.u32 %v3748, 2147483648
    %v3765 = vmul.f32 %v3749, 1.442695
    %v3766 = vpow.pop %v3765
    %v3767 = vmul.f32 %v3750, 1.442695
    %v3768 = vpow.pop %v3767
    %v3769 = vmul.f32 %v3751, 1.442695
    %v3770 = vpow.pop %v3769
    %v3771 = vmul.f32 %v3752, 1.442695
    %v3772 = vpow.pop %v3771
    %v3773 = vmul.f32 %v3753, 1.442695
    %v3774 = vpow.pop %v3773
    %v3775 = vmul.f32 %v3754, 1.442695
    %v3776 = vpow.pop %v3775
    %v3777 = vmul.f32 %v3755, 1.442695
    %v3778 = vpow.pop %v3777
    %v3779 = vmul.f32 %v3756, 1.442695
    %v3780 = vpow.pop %v3779
    %v3781 = vmul.f32 %v3757, 1.442695
    %v3782 = vpow.pop %v3781
    %v3783 = vmul.f32 %v3758, 1.442695
    %v3784 = vpow.pop %v3783
    %v3785 = vmul.f32 %v3759, 1.442695
    %v3786 = vpow.pop %v3785
    %v3787 = vmul.f32 %v3760, 1.442695
    %v3788 = vpow.pop %v3787
    %v3789 = vmul.f32 %v3761, 1.442695
    %v3790 = vpow.pop %v3789
    %v3791 = vmul.f32 %v3762, 1.442695
    %v3792 = vpow.pop %v3791
    %v3793 = vmul.f32 %v3763, 1.442695
    %v3794 = vpow.pop %v3793
    %v3795 = vmul.f32 %v3764, 1.442695
    %v3796 = vpow.pop %v3795
    %v3797 = vadd.f32 %v3766, 1.0
    %v3798 = vadd.f32 %v3768, 1.0
    %v3799 = vadd.f32 %v3770, 1.0
    %v3800 = vadd.f32 %v3772, 1.0
    %v3801 = vadd.f32 %v3774, 1.0
    %v3802 = vadd.f32 %v3776, 1.0
    %v3803 = vadd.f32 %v3778, 1.0
    %v3804 = vadd.f32 %v3780, 1.0
    %v3805 = vadd.f32 %v3782, 1.0
    %v3806 = vadd.f32 %v3784, 1.0
    %v3807 = vadd.f32 %v3786, 1.0
    %v3808 = vadd.f32 %v3788, 1.0
    %v3809 = vadd.f32 %v3790, 1.0
    %v3810 = vadd.f32 %v3792, 1.0
    %v3811 = vadd.f32 %v3794, 1.0
    %v3812 = vadd.f32 %v3796, 1.0
    %v3813 = vrcp.pop %v3797
    %v3814 = vmul.f32 1.0, %v3813
    %v3815 = vrcp.pop %v3798
    %v3816 = vmul.f32 1.0, %v3815
    %v3817 = vrcp.pop %v3799
    %v3818 = vmul.f32 1.0, %v3817
    %v3819 = vrcp.pop %v3800
    %v3820 = vmul.f32 1.0, %v3819
    %v3821 = vrcp.pop %v3801
    %v3822 = vmul.f32 1.0, %v3821
    %v3823 = vrcp.pop %v3802
    %v3824 = vmul.f32 1.0, %v3823
    %v3825 = vrcp.pop %v3803
    %v3826 = vmul.f32 1.0, %v3825
    %v3827 = vrcp.pop %v3804
    %v3828 = vmul.f32 1.0, %v3827
    %v3829 = vrcp.pop %v3805
    %v3830 = vmul.f32 1.0, %v3829
    %v3831 = vrcp.pop %v3806
    %v3832 = vmul.f32 1.0, %v3831
    %v3833 = vrcp.pop %v3807
    %v3834 = vmul.f32 1.0, %v3833
    %v3835 = vrcp.pop %v3808
    %v3836 = vmul.f32 1.0, %v3835
    %v3837 = vrcp.pop %v3809
    %v3838 = vmul.f32 1.0, %v3837
    %v3839 = vrcp.pop %v3810
    %v3840 = vmul.f32 1.0, %v3839
    %v3841 = vrcp.pop %v3811
    %v3842 = vmul.f32 1.0, %v3841
    %v3843 = vrcp.pop %v3812
    %v3844 = vmul.f32 1.0, %v3843
    %vm3845 = vcmask 7168
    %3846 = vst.msk [vmem:[%s7] sm:$0xff] %vm3845, %v3814
    %3847 = vst.msk [vmem:[%s7 + $0x8] sm:$0xff] %vm3845, %v3816
    %3848 = vst.msk [vmem:[%s7 + $0x10] sm:$0xff] %vm3845, %v3818
    %3849 = vst.msk [vmem:[%s7 + $0x18] sm:$0xff] %vm3845, %v3820
    %3850 = vst.msk [vmem:[%s7 + $0x20] sm:$0xff] %vm3845, %v3822
    %3851 = vst.msk [vmem:[%s7 + $0x28] sm:$0xff] %vm3845, %v3824
    %3852 = vst.msk [vmem:[%s7 + $0x30] sm:$0xff] %vm3845, %v3826
    %3853 = vst.msk [vmem:[%s7 + $0x38] sm:$0xff] %vm3845, %v3828
    %3854 = vst.msk [vmem:[%s7 + $0x40] sm:$0xff] %vm3845, %v3830
    %3855 = vst.msk [vmem:[%s7 + $0x48] sm:$0xff] %vm3845, %v3832
    %3856 = vst.msk [vmem:[%s7 + $0x50] sm:$0xff] %vm3845, %v3834
    %3857 = vst.msk [vmem:[%s7 + $0x58] sm:$0xff] %vm3845, %v3836
    %3858 = vst.msk [vmem:[%s7 + $0x60] sm:$0xff] %vm3845, %v3838
    %3859 = vst.msk [vmem:[%s7 + $0x68] sm:$0xff] %vm3845, %v3840
    %3860 = vst.msk [vmem:[%s7 + $0x70] sm:$0xff] %vm3845, %v3842
    %3861 = vst.msk [vmem:[%s7 + $0x78] sm:$0xff] %vm3845, %v3844
    // Predicated region
    $region42: #{tpu_custom_call.1} parent=1 // pred_check
      _
    $region43: #{tpu_custom_call.1} parent=1 // pred_check_branch
      %3863 = sbr.rel (0) target = $region45
    $region44: #{tpu_custom_call.1} parent=1 // pred_region
      _
    $region45: #{tpu_custom_call.1} parent=1 // pred_fallthru
      _
    // Predicated region
    $region46: #{tpu_custom_call.1} parent=1 // pred_check
      _
    $region47: #{tpu_custom_call.1} parent=1 // pred_check_branch
      %3865 = sbr.rel (0) target = $region49
    $region48: #{tpu_custom_call.1} parent=1 // pred_region
      _
    $region49: #{tpu_custom_call.1} parent=1 // pred_fallthru
      _
    %3866 = vsyncpa [#allocation4], 1
    %3867 = vsyncpa [#allocation6], 1

</llo_original>
